<compile_context>
chip_gen: v7x
topology: tpu7x:2x2x1
jax: 0.10.0
libtpu: 0.0.40
codegen_flags: <defaults>
</compile_context>

<pallas_src>
import functools
import math

import jax
import jax.numpy as jnp
from jax.experimental import pallas as pl
from jax.experimental.pallas import tpu as pltpu


def _mha_kernel(x_ref, c_ref, wq_ref, bq_ref, wkv_ref, bkv_ref, wo_ref, bo_ref,
                out_ref, *, n_heads, k_channels, bt, t_t, t_s):
    """One grid step == `bt` batch elements.

    x_ref:   [C,    bt*t_t]   (bf16, channel-major, batches along lanes)
    c_ref:   [C,    bt*t_s]
    wq_ref:  [C,    C]  (scale pre-folded)    bq_ref:  [C,    1] (f32, scaled)
    wkv_ref: [2C,   C]  ([wk; wv] fused)      bkv_ref: [2C,   1] (f32)
    wo_ref:  [Cout, C]                        bo_ref:  [Cout, 1] (f32)
    out_ref: [Cout, bt*t_t]
    """
    f32 = jnp.float32
    cdt = x_ref.dtype
    C = n_heads * k_channels
    G = n_heads * bt                      # merged attention batch dim

    x = x_ref[...]                        # [C, bt*t_t]
    c = c_ref[...]                        # [C, bt*t_s]

    # ---- 1x1 Conv1d projections: lane-dense MXU matmuls, f32 accumulate ----
    # 1/sqrt(k_channels) is already folded into wq / bq.
    q = jnp.dot(wq_ref[...], x, preferred_element_type=f32) + bq_ref[...]
    kv = jnp.dot(wkv_ref[...], c, preferred_element_type=f32) + bkv_ref[...]
    k = kv[:C]
    v = kv[C:]

    def split_heads(t, T):
        # [C, bt*T] -> [H, kc, bt, T] -> [H, bt, kc, T] -> [G, kc, T]
        # (transpose keeps the lane dim in place: sublane-level relayout only)
        t4 = t.astype(cdt).reshape(n_heads, k_channels, bt, T)
        t4 = jnp.transpose(t4, (0, 2, 1, 3))
        return t4.reshape(G, k_channels, T)

    q_g = split_heads(q, t_t)             # [G, kc, t_t]
    k_g = split_heads(k, t_s)             # [G, kc, t_s]
    v_g = split_heads(v, t_s)             # [G, kc, t_s]

    # ---- scores[g, t, s] = sum_d q[g, d, t] * k[g, d, s]  (scale folded) ----
    scores = jnp.einsum("gdt,gds->gts", q_g, k_g,
                        preferred_element_type=f32)           # [G, t_t, t_s]

    # ---- softmax over keys (lane axis), all (batch, head) pairs at once ----
    m = jnp.max(scores, axis=-1, keepdims=True)
    e = jnp.exp(scores - m)
    denom = jnp.sum(e, axis=-1, keepdims=True)                # >= 1.0
    p = e * pl.reciprocal(denom, approx=True)                 # EUP, VPU-free

    # ---- out[g, d, t] = sum_s v[g, d, s] * p[g, t, s] ----
    att = jnp.einsum("gds,gts->gdt", v_g, p.astype(cdt),
                     preferred_element_type=f32)              # [G, kc, t_t]

    # merge heads back: [G, kc, t_t] -> [H, bt, kc, t_t] -> [C, bt*t_t]
    att = att.astype(cdt).reshape(n_heads, bt, k_channels, t_t)
    att = jnp.transpose(att, (0, 2, 1, 3)).reshape(C, bt * t_t)

    # ---- output projection (1x1 Conv1d) ----
    y = jnp.dot(wo_ref[...], att, preferred_element_type=f32) + bo_ref[...]
    out_ref[...] = y.astype(out_ref.dtype)


def multi_head_attention_forward(x, c, wq, bq, wk, bk, wv, bv, wo, bo, *,
                                 n_heads, compute_dtype=jnp.bfloat16):
    """x: [B, C, Tt] query source, c: [B, C, Ts] key/value source (NCT).

    wq/wk/wv: [C, C], wo: [Cout, C] (1x1 Conv1d weights with the trailing
    kernel dim squeezed), biases 1-D.  Returns [B, Cout, Tt] in compute_dtype.
    """
    B, C, Tt = x.shape
    Bc, Cc, Ts = c.shape
    assert Bc == B and Cc == C
    Cout = wo.shape[0]
    assert C % n_heads == 0
    kc = C // n_heads

    f32 = jnp.float32
    cdt = compute_dtype

    # Pick the batch block: smallest divisor of B whose lane widths are
    # multiples of 128 (unmasked stores, aligned blocks) -> keeps as many
    # parallel grid steps as possible; otherwise fall back to the full batch.
    def _pick_bt():
        for cand in range(1, B):
            if B % cand == 0 and (cand * Tt) % 128 == 0 and (cand * Ts) % 128 == 0:
                return cand
        return B
    bt = _pick_bt()
    n_blocks = B // bt
    Lq, Lk = bt * Tt, bt * Ts

    # Lane-dense, channel-major activations: batch concatenated along lanes.
    # (Wrapper-side layout plumbing; free relative to the fused kernel.)
    x2 = jnp.transpose(x, (1, 0, 2)).reshape(C, B * Tt).astype(cdt)
    c2 = jnp.transpose(c, (1, 0, 2)).reshape(C, B * Ts).astype(cdt)

    # Weight prep: fold 1/sqrt(kc) into wq/bq, fuse k & v projections.
    scale = 1.0 / math.sqrt(kc)
    wq_s = (wq.astype(f32) * scale).astype(cdt)                    # [C, C]
    bq_s = (bq.astype(f32) * scale).reshape(C, 1)                  # f32
    wkv = jnp.concatenate([wk, wv], axis=0).astype(cdt)            # [2C, C]
    bkv = jnp.concatenate([bk, bv], axis=0).astype(f32).reshape(2 * C, 1)
    wo_c = wo.astype(cdt)                                          # [Cout, C]
    bo_c = bo.astype(f32).reshape(Cout, 1)

    kernel = functools.partial(_mha_kernel, n_heads=n_heads, k_channels=kc,
                               bt=bt, t_t=Tt, t_s=Ts)
    const = lambda i: (0, 0)   # weights / biases: same block every grid step

    out2 = pl.pallas_call(
        kernel,
        out_shape=jax.ShapeDtypeStruct((Cout, B * Tt), cdt),
        grid_spec=pltpu.PrefetchScalarGridSpec(
            num_scalar_prefetch=0,
            grid=(n_blocks,),
            in_specs=[
                pl.BlockSpec((C, Lq), lambda i: (0, i)),    # x  (channel-major)
                pl.BlockSpec((C, Lk), lambda i: (0, i)),    # c
                pl.BlockSpec((C, C), const),                # wq (scaled)
                pl.BlockSpec((C, 1), const),                # bq (scaled)
                pl.BlockSpec((2 * C, C), const),            # [wk; wv]
                pl.BlockSpec((2 * C, 1), const),            # [bk; bv]
                pl.BlockSpec((Cout, C), const),             # wo
                pl.BlockSpec((Cout, 1), const),             # bo
            ],
            out_specs=pl.BlockSpec((Cout, Lq), lambda i: (0, i)),
        ),
        compiler_params=pltpu.CompilerParams(
            dimension_semantics=("parallel",)),
    )(x2, c2, wq_s, bq_s, wkv, bkv, wo_c, bo_c)

    # [Cout, B*Tt] -> [B, Cout, Tt]
    return jnp.transpose(out2.reshape(Cout, B, Tt), (1, 0, 2))


def _reference(x, c, wq, bq, wk, bk, wv, bv, wo, bo, n_heads):
    """Pure-JAX f32 reference following the PyTorch module exactly."""
    B, C, Tt = x.shape
    Ts = c.shape[2]
    kc = C // n_heads
    x = x.astype(jnp.float32)
    c = c.astype(jnp.float32)

    q = jnp.einsum("oc,bct->bot", wq, x) + bq[None, :, None]
    k = jnp.einsum("oc,bct->bot", wk, c) + bk[None, :, None]
    v = jnp.einsum("oc,bct->bot", wv, c) + bv[None, :, None]

    q = q.reshape(B, n_heads, kc, Tt).transpose(0, 1, 3, 2)   # [B,H,Tt,kc]
    k = k.reshape(B, n_heads, kc, Ts).transpose(0, 1, 3, 2)   # [B,H,Ts,kc]
    v = v.reshape(B, n_heads, kc, Ts).transpose(0, 1, 3, 2)   # [B,H,Ts,kc]

    scores = jnp.einsum("bhtd,bhsd->bhts", q, k) / math.sqrt(kc)
    p = jax.nn.softmax(scores, axis=-1)
    o = jnp.einsum("bhts,bhsd->bhtd", p, v)                   # [B,H,Tt,kc]
    o = o.transpose(0, 1, 3, 2).reshape(B, C, Tt)
    return jnp.einsum("oc,bct->bot", wo, o) + bo[None, :, None]


if __name__ == "__main__":
    # Small shapes consistent with the module: channels=64, n_heads=4
    # (k_channels=16), out_channels=64, batch=4, t_t = t_s = 64.  With B=4
    # and T=64 the wrapper picks bt=2 -> 2 parallel grid steps, 128-wide lanes.
    B, C, Cout, H = 4, 64, 64, 4
    Tt, Ts = 64, 64

    key = jax.random.PRNGKey(0)
    ks = jax.random.split(key, 10)

    x = jax.random.normal(ks[0], (B, C, Tt), dtype=jnp.float32)
    c = jax.random.normal(ks[1], (B, C, Ts), dtype=jnp.float32)

    # Conv1d(kernel_size=1) weights with the trailing kernel dim squeezed.
    wscale = 1.0 / math.sqrt(C)
    wq = wscale * jax.random.normal(ks[2], (C, C), dtype=jnp.float32)
    wk = wscale * jax.random.normal(ks[3], (C, C), dtype=jnp.float32)
    wv = wscale * jax.random.normal(ks[4], (C, C), dtype=jnp.float32)
    wo = wscale * jax.random.normal(ks[5], (Cout, C), dtype=jnp.float32)
    bq = 0.05 * jax.random.normal(ks[6], (C,), dtype=jnp.float32)
    bk = 0.05 * jax.random.normal(ks[7], (C,), dtype=jnp.float32)
    bv = 0.05 * jax.random.normal(ks[8], (C,), dtype=jnp.float32)
    bo = 0.05 * jax.random.normal(ks[9], (Cout,), dtype=jnp.float32)

    fwd = jax.jit(functools.partial(multi_head_attention_forward, n_heads=H))
    out = jax.block_until_ready(fwd(x, c, wq, bq, wk, bk, wv, bv, wo, bo))

    # Reference in f32 (PyTorch-faithful math); share the bf16 input rounding
    # with the kernel path so only MXU/softmax rounding differences remain.
    rnd = lambda a: a.astype(jnp.bfloat16).astype(jnp.float32)
    ref = jax.block_until_ready(_reference(
        rnd(x), rnd(c), rnd(wq), bq, rnd(wk), bk, rnd(wv), bv, rnd(wo), bo,
        n_heads=H))

    assert out.shape == (B, Cout, Tt)
    err = jnp.abs(out.astype(jnp.float32) - ref)
    max_err = float(jnp.max(err))
    mean_err = float(jnp.mean(err))
    assert max_err < 1e-1 and mean_err < 1.5e-2, \
        f"max abs err {max_err}, mean abs err {mean_err}"

    print("KERNEL_OK")
</pallas_src>

<mosaic_0001>
module attributes {stable_mosaic.version = 11 : i64} {
  func.func @_mha_kernel(%arg0: i32, %arg1: memref<64x128xbf16, #tpu.memory_space<vmem>>, %arg2: memref<64x128xbf16, #tpu.memory_space<vmem>>, %arg3: memref<64x64xbf16, #tpu.memory_space<vmem>>, %arg4: memref<64x1xf32, #tpu.memory_space<vmem>>, %arg5: memref<128x64xbf16, #tpu.memory_space<vmem>>, %arg6: memref<128x1xf32, #tpu.memory_space<vmem>>, %arg7: memref<64x64xbf16, #tpu.memory_space<vmem>>, %arg8: memref<64x1xf32, #tpu.memory_space<vmem>>, %arg9: memref<64x128xbf16, #tpu.memory_space<vmem>>) attributes {dimension_semantics = [#tpu.dimension_semantics<parallel>], iteration_bounds = array<i64: 2>, scalar_prefetch = 0 : i64, scratch_operands = 0 : i64, tpu.core_type = #tpu.core_type<tc>, window_params = [{transform_indices = @transform_0, window_bounds = array<i64: 64, 128>}, {transform_indices = @transform_1, window_bounds = array<i64: 64, 128>}, {pipeline_mode = #tpu.pipeline_mode<synchronous>, transform_indices = @transform_2, window_bounds = array<i64: 64, 64>}, {pipeline_mode = #tpu.pipeline_mode<synchronous>, transform_indices = @transform_3, window_bounds = array<i64: 64, 1>}, {pipeline_mode = #tpu.pipeline_mode<synchronous>, transform_indices = @transform_4, window_bounds = array<i64: 128, 64>}, {pipeline_mode = #tpu.pipeline_mode<synchronous>, transform_indices = @transform_5, window_bounds = array<i64: 128, 1>}, {pipeline_mode = #tpu.pipeline_mode<synchronous>, transform_indices = @transform_6, window_bounds = array<i64: 64, 64>}, {pipeline_mode = #tpu.pipeline_mode<synchronous>, transform_indices = @transform_7, window_bounds = array<i64: 64, 1>}, {transform_indices = @transform_8, window_bounds = array<i64: 64, 128>}]} {
    %c0 = arith.constant 0 : index
    %c0_0 = arith.constant 0 : index
    %0 = vector.load %arg1[%c0, %c0_0] : memref<64x128xbf16, #tpu.memory_space<vmem>>, vector<64x128xbf16>
    %c0_1 = arith.constant 0 : index
    %c0_2 = arith.constant 0 : index
    %1 = vector.load %arg2[%c0_1, %c0_2] : memref<64x128xbf16, #tpu.memory_space<vmem>>, vector<64x128xbf16>
    %c0_3 = arith.constant 0 : index
    %c0_4 = arith.constant 0 : index
    %2 = vector.load %arg3[%c0_3, %c0_4] : memref<64x64xbf16, #tpu.memory_space<vmem>>, vector<64x64xbf16>
    %cst = arith.constant dense<0.000000e+00> : vector<64x128xf32>
    %3 = tpu.matmul %2, %0, %cst {dimension_numbers = #tpu.dot_dimension_numbers<[1], [0], [0], [1], [0, 0, 1, 1], [], []>} : vector<64x64xbf16>, vector<64x128xbf16>, vector<64x128xf32> -> vector<64x128xf32>
    %c0_5 = arith.constant 0 : index
    %c0_6 = arith.constant 0 : index
    %4 = vector.load %arg4[%c0_5, %c0_6] : memref<64x1xf32, #tpu.memory_space<vmem>>, vector<64x1xf32>
    %5 = vector.broadcast %4 : vector<64x1xf32> to vector<64x128xf32>
    %6 = arith.addf %3, %5 : vector<64x128xf32>
    %c0_7 = arith.constant 0 : index
    %c0_8 = arith.constant 0 : index
    %7 = vector.load %arg5[%c0_7, %c0_8] : memref<128x64xbf16, #tpu.memory_space<vmem>>, vector<128x64xbf16>
    %cst_9 = arith.constant dense<0.000000e+00> : vector<128x128xf32>
    %8 = tpu.matmul %7, %1, %cst_9 {dimension_numbers = #tpu.dot_dimension_numbers<[1], [0], [0], [1], [0, 0, 1, 1], [], []>} : vector<128x64xbf16>, vector<64x128xbf16>, vector<128x128xf32> -> vector<128x128xf32>
    %c0_10 = arith.constant 0 : index
    %c0_11 = arith.constant 0 : index
    %9 = vector.load %arg6[%c0_10, %c0_11] : memref<128x1xf32, #tpu.memory_space<vmem>>, vector<128x1xf32>
    %10 = vector.broadcast %9 : vector<128x1xf32> to vector<128x128xf32>
    %11 = arith.addf %8, %10 : vector<128x128xf32>
    %12 = vector.extract_strided_slice %11 {offsets = [0, 0], sizes = [64, 128], strides = [1, 1]} : vector<128x128xf32> to vector<64x128xf32>
    %13 = vector.extract_strided_slice %11 {offsets = [64, 0], sizes = [64, 128], strides = [1, 1]} : vector<128x128xf32> to vector<64x128xf32>
    %14 = arith.truncf %6 : vector<64x128xf32> to vector<64x128xbf16>
    %15 = vector.shape_cast %14 : vector<64x128xbf16> to vector<4x16x2x64xbf16>
    %16 = tpu.transpose %15, [0, 2, 1, 3] : vector<4x16x2x64xbf16> -> vector<4x2x16x64xbf16>
    %17 = vector.shape_cast %16 : vector<4x2x16x64xbf16> to vector<8x16x64xbf16>
    %18 = arith.truncf %12 : vector<64x128xf32> to vector<64x128xbf16>
    %19 = vector.shape_cast %18 : vector<64x128xbf16> to vector<4x16x2x64xbf16>
    %20 = tpu.transpose %19, [0, 2, 1, 3] : vector<4x16x2x64xbf16> -> vector<4x2x16x64xbf16>
    %21 = vector.shape_cast %20 : vector<4x2x16x64xbf16> to vector<8x16x64xbf16>
    %22 = arith.truncf %13 : vector<64x128xf32> to vector<64x128xbf16>
    %23 = vector.shape_cast %22 : vector<64x128xbf16> to vector<4x16x2x64xbf16>
    %24 = tpu.transpose %23, [0, 2, 1, 3] : vector<4x16x2x64xbf16> -> vector<4x2x16x64xbf16>
    %25 = vector.shape_cast %24 : vector<4x2x16x64xbf16> to vector<8x16x64xbf16>
    "tpu.trace_start"() <{level = 10 : i32, message = "gdt,gds->gts"}> : () -> ()
    %cst_12 = arith.constant dense<0.000000e+00> : vector<8x64x64xf32>
    %26 = tpu.matmul %17, %21, %cst_12 {dimension_numbers = #tpu.dot_dimension_numbers<[1], [1], [2], [2], [0, 0, 0, 2, 1, 2], [0], [0]>} : vector<8x16x64xbf16>, vector<8x16x64xbf16>, vector<8x64x64xf32> -> vector<8x64x64xf32>
    "tpu.trace_stop"() : () -> ()
    %cst_13 = arith.constant dense<0xFF800000> : vector<8x64xf32>
    %27 = vector.multi_reduction <maximumf>, %26, %cst_13 [2] : vector<8x64x64xf32> to vector<8x64xf32>
    %28 = vector.shape_cast %27 : vector<8x64xf32> to vector<8x64x1xf32>
    %29 = vector.broadcast %28 : vector<8x64x1xf32> to vector<8x64x64xf32>
    %30 = arith.subf %26, %29 : vector<8x64x64xf32>
    %31 = math.exp %30 : vector<8x64x64xf32>
    %cst_14 = arith.constant dense<0.000000e+00> : vector<8x64xf32>
    %32 = vector.multi_reduction <add>, %31, %cst_14 [2] : vector<8x64x64xf32> to vector<8x64xf32>
    %33 = vector.shape_cast %32 : vector<8x64xf32> to vector<8x64x1xf32>
    %34 = tpu.reciprocal %33 {approx = true} : vector<8x64x1xf32> -> vector<8x64x1xf32>
    %35 = vector.broadcast %34 : vector<8x64x1xf32> to vector<8x64x64xf32>
    %36 = arith.mulf %31, %35 : vector<8x64x64xf32>
    %37 = arith.truncf %36 : vector<8x64x64xf32> to vector<8x64x64xbf16>
    "tpu.trace_start"() <{level = 10 : i32, message = "gds,gts->gdt"}> : () -> ()
    %cst_15 = arith.constant dense<0.000000e+00> : vector<8x16x64xf32>
    %38 = tpu.matmul %25, %37, %cst_15 {dimension_numbers = #tpu.dot_dimension_numbers<[2], [2], [1], [1], [0, 0, 0, 1, 1, 1], [0], [0]>} : vector<8x16x64xbf16>, vector<8x64x64xbf16>, vector<8x16x64xf32> -> vector<8x16x64xf32>
    "tpu.trace_stop"() : () -> ()
    %39 = arith.truncf %38 : vector<8x16x64xf32> to vector<8x16x64xbf16>
    %40 = vector.shape_cast %39 : vector<8x16x64xbf16> to vector<4x2x16x64xbf16>
    %41 = tpu.transpose %40, [0, 2, 1, 3] : vector<4x2x16x64xbf16> -> vector<4x16x2x64xbf16>
    %42 = vector.shape_cast %41 : vector<4x16x2x64xbf16> to vector<64x128xbf16>
    %c0_16 = arith.constant 0 : index
    %c0_17 = arith.constant 0 : index
    %43 = vector.load %arg7[%c0_16, %c0_17] : memref<64x64xbf16, #tpu.memory_space<vmem>>, vector<64x64xbf16>
    %cst_18 = arith.constant dense<0.000000e+00> : vector<64x128xf32>
    %44 = tpu.matmul %43, %42, %cst_18 {dimension_numbers = #tpu.dot_dimension_numbers<[1], [0], [0], [1], [0, 0, 1, 1], [], []>} : vector<64x64xbf16>, vector<64x128xbf16>, vector<64x128xf32> -> vector<64x128xf32>
    %c0_19 = arith.constant 0 : index
    %c0_20 = arith.constant 0 : index
    %45 = vector.load %arg8[%c0_19, %c0_20] : memref<64x1xf32, #tpu.memory_space<vmem>>, vector<64x1xf32>
    %46 = vector.broadcast %45 : vector<64x1xf32> to vector<64x128xf32>
    %47 = arith.addf %44, %46 : vector<64x128xf32>
    %48 = arith.truncf %47 : vector<64x128xf32> to vector<64x128xbf16>
    %c0_21 = arith.constant 0 : index
    %c0_22 = arith.constant 0 : index
    %49 = vector.load %arg9[%c0_21, %c0_22] : memref<64x128xbf16, #tpu.memory_space<vmem>>, vector<64x128xbf16>
    tpu.vector_store %arg9[%c0_21, %c0_22], %48 {strides = array<i32>} : memref<64x128xbf16, #tpu.memory_space<vmem>>, vector<64x128xbf16>,
    return
  }
  func.func @transform_0(%arg0: i32) -> (i32, i32) {
    %c0_i32 = arith.constant 0 : i32
    %c0_i32_0 = arith.constant 0 : i32
    return %c0_i32, %arg0 : i32, i32
  }
  func.func @transform_1(%arg0: i32) -> (i32, i32) {
    %c0_i32 = arith.constant 0 : i32
    %c0_i32_0 = arith.constant 0 : i32
    return %c0_i32, %arg0 : i32, i32
  }
  func.func @transform_2(%arg0: i32) -> (i32, i32) {
    %c0_i32 = arith.constant 0 : i32
    %c0_i32_0 = arith.constant 0 : i32
    %c0_i32_1 = arith.constant 0 : i32
    return %c0_i32, %c0_i32_0 : i32, i32
  }
  func.func @transform_3(%arg0: i32) -> (i32, i32) {
    %c0_i32 = arith.constant 0 : i32
    %c0_i32_0 = arith.constant 0 : i32
    %c0_i32_1 = arith.constant 0 : i32
    return %c0_i32, %c0_i32_0 : i32, i32
  }
  func.func @transform_4(%arg0: i32) -> (i32, i32) {
    %c0_i32 = arith.constant 0 : i32
    %c0_i32_0 = arith.constant 0 : i32
    %c0_i32_1 = arith.constant 0 : i32
    return %c0_i32, %c0_i32_0 : i32, i32
  }
  func.func @transform_5(%arg0: i32) -> (i32, i32) {
    %c0_i32 = arith.constant 0 : i32
    %c0_i32_0 = arith.constant 0 : i32
    %c0_i32_1 = arith.constant 0 : i32
    return %c0_i32, %c0_i32_0 : i32, i32
  }
  func.func @transform_6(%arg0: i32) -> (i32, i32) {
    %c0_i32 = arith.constant 0 : i32
    %c0_i32_0 = arith.constant 0 : i32
    %c0_i32_1 = arith.constant 0 : i32
    return %c0_i32, %c0_i32_0 : i32, i32
  }
  func.func @transform_7(%arg0: i32) -> (i32, i32) {
    %c0_i32 = arith.constant 0 : i32
    %c0_i32_0 = arith.constant 0 : i32
    %c0_i32_1 = arith.constant 0 : i32
    return %c0_i32, %c0_i32_0 : i32, i32
  }
  func.func @transform_8(%arg0: i32) -> (i32, i32) {
    %c0_i32 = arith.constant 0 : i32
    %c0_i32_0 = arith.constant 0 : i32
    return %c0_i32, %arg0 : i32, i32
  }
}

</mosaic_0001>

<llo_original>
// kernel: multi_head_attention_forward.1
$region0: #{multi_head_attention_forward.1}
  #allocation0 [shape = 'u32[]', space=smem, size = 0x4, offset = 0x4, fixed_abs, tag = 'smem constant byte address 0x4 - core index']
  #allocation1 [shape = 'u32[144,128]{1,0:T(1,128)}', space=vmem, size = 0x12000, scoped, tag = 'internal scratch']
  %s0 = inlined_call_operand.vmem [shape: bf16[64,256], index: 0, kind: input, shape index: {}]
  %s1 = inlined_call_operand.vmem [shape: bf16[64,256], index: 1, kind: input, shape index: {}]
  %s2 = inlined_call_operand.vmem [shape: bf16[64,64], index: 2, kind: input, shape index: {}]
  %s3 = inlined_call_operand.vmem [shape: f32[64,1], index: 3, kind: input, shape index: {}]
  %s4 = inlined_call_operand.vmem [shape: bf16[128,64], index: 4, kind: input, shape index: {}]
  %s5 = inlined_call_operand.vmem [shape: f32[128,1], index: 5, kind: input, shape index: {}]
  %s6 = inlined_call_operand.vmem [shape: bf16[64,64], index: 6, kind: input, shape index: {}]
  %s7 = inlined_call_operand.vmem [shape: f32[64,1], index: 7, kind: input, shape index: {}]
  %s8 = inlined_call_operand.vmem [shape: bf16[64,256], index: 8, kind: output, shape index: {}]
  %s9 = sld [smem:[#allocation0]]
  $region184: #{multi_head_attention_forward.1} parent=0
    _
  %s11 = ssub.s32 1, %s9
  %s12 = scalar_select 0, %s11, %s9
  $region1: #{multi_head_attention_forward.1} parent=0
    #allocation2 [shape = 'u8[32768]{0}', space=vmem, size = 0x8000, scoped, tag = 'input window, operand 0']
    #allocation3 [shape = 'u8[32768]{0}', space=vmem, size = 0x8000, scoped, tag = 'input window, operand 1']
    #allocation4 [shape = 'u8[32768]{0}', space=vmem, size = 0x8000, scoped, tag = 'output window, operand 0']
    loop: start=0, step=1, limit=4
    $region2: #{multi_head_attention_forward.1} parent=1 // loop_pre_header
      _
    $region3: #{multi_head_attention_forward.1} parent=1 // loop_header
      %s14 = sphi 0, %s18
      %p15 = scmp.ge.s32.totalorder %s14, 4
      %s24 = sphi 0, %s26
      %s27 = sphi 0, %s24
      %s28 = sphi 0, %s27
      %s44 = sphi 0, %s28
      %s50 = sphi 0, %s52
      %s53 = sphi 0, %s50
      %s54 = sphi 0, %s53
      %s70 = sphi 0, %s54
      %s74 = sphi 0, %s74
      %s76 = sphi 0, %s74
      %s77 = sphi 0, %s76
      %s91 = sphi 0, %s77
      %s95 = sphi 0, %s95
      %s97 = sphi 0, %s95
      %s98 = sphi 0, %s97
      %s112 = sphi 0, %s98
      %s116 = sphi 0, %s116
      %s118 = sphi 0, %s116
      %s119 = sphi 0, %s118
      %s133 = sphi 0, %s119
      %s137 = sphi 0, %s137
      %s139 = sphi 0, %s137
      %s140 = sphi 0, %s139
      %s154 = sphi 0, %s140
      %s158 = sphi 0, %s158
      %s160 = sphi 0, %s158
      %s161 = sphi 0, %s160
      %s175 = sphi 0, %s161
      %s179 = sphi 0, %s179
      %s181 = sphi 0, %s179
      %s182 = sphi 0, %s181
      %s196 = sphi 0, %s182
      %s202 = sphi 0, %s204
      %s205 = sphi 0, %s202
      %s206 = sphi 0, %s205
      %s222 = sphi 0, %s206
    $region4: #{multi_head_attention_forward.1} parent=1 // loop_header_branch
      %17 = sbr.rel (%p15) target = $region8
    $region5: #{multi_head_attention_forward.1} parent=1 // loop_body
      %s19 = ssub.s32 %s14, 1
      %s20 = ssub.s32 %s14, 2
      %s21 = sadd.s32 %s14, 1
      %s22 = ssub.s32 %s14, %s21
      %p23 = scmp.eq.s32.totalorder %s22, 0
      %s25 = sadd.s32 %s24, 1
      %s26 = scalar_select %p23, %s24, %s25
      %p29 = pneg %p23
      %p30 = scmp.eq.s32.totalorder %s14, 1
      %p31 = por %p29, %p30
      %p32 = scmp.ne.s32.totalorder %s24, %s27
      %p33 = scmp.eq.s32.totalorder %s14, 0
      %p34 = por %p32, %p33
      %p35 = scmp.ne.s32.totalorder %s24, %s27
      %p36 = scmp.eq.s32.totalorder %s19, 1
      %p37 = por %p35, %p36
      %p38 = scmp.ne.s32.totalorder %s27, %s28
      %p39 = scmp.eq.s32.totalorder %s19, 0
      %p40 = por %p38, %p39
      %p41 = scmp.ne.s32.totalorder %s27, %s28
      %p42 = scmp.eq.s32.totalorder %s20, 1
      %p43 = por %p41, %p42
      %p45 = scmp.ne.s32.totalorder %s28, %s44
      %p46 = scmp.eq.s32.totalorder %s20, 0
      %p47 = por %p45, %p46
      %s48 = ssub.s32 %s14, %s21
      %p49 = scmp.eq.s32.totalorder %s48, 0
      %s51 = sadd.s32 %s50, 1
      %s52 = scalar_select %p49, %s50, %s51
      %p55 = pneg %p49
      %p56 = scmp.eq.s32.totalorder %s14, 1
      %p57 = por %p55, %p56
      %p58 = scmp.ne.s32.totalorder %s50, %s53
      %p59 = scmp.eq.s32.totalorder %s14, 0
      %p60 = por %p58, %p59
      %p61 = scmp.ne.s32.totalorder %s50, %s53
      %p62 = scmp.eq.s32.totalorder %s19, 1
      %p63 = por %p61, %p62
      %p64 = scmp.ne.s32.totalorder %s53, %s54
      %p65 = scmp.eq.s32.totalorder %s19, 0
      %p66 = por %p64, %p65
      %p67 = scmp.ne.s32.totalorder %s53, %s54
      %p68 = scmp.eq.s32.totalorder %s20, 1
      %p69 = por %p67, %p68
      %p71 = scmp.ne.s32.totalorder %s54, %s70
      %p72 = scmp.eq.s32.totalorder %s20, 0
      %p73 = por %p71, %p72
      %s75 = sadd.s32 %s74, 1
      %p78 = scmp.eq.s32.totalorder %s14, 1
      %p79 = scmp.ne.s32.totalorder %s74, %s76
      %p80 = scmp.eq.s32.totalorder %s14, 0
      %p81 = por %p79, %p80
      %p82 = scmp.ne.s32.totalorder %s74, %s76
      %p83 = scmp.eq.s32.totalorder %s19, 1
      %p84 = por %p82, %p83
      %p85 = scmp.ne.s32.totalorder %s76, %s77
      %p86 = scmp.eq.s32.totalorder %s19, 0
      %p87 = por %p85, %p86
      %p88 = scmp.ne.s32.totalorder %s76, %s77
      %p89 = scmp.eq.s32.totalorder %s20, 1
      %p90 = por %p88, %p89
      %p92 = scmp.ne.s32.totalorder %s77, %s91
      %p93 = scmp.eq.s32.totalorder %s20, 0
      %p94 = por %p92, %p93
      %s96 = sadd.s32 %s95, 1
      %p99 = scmp.eq.s32.totalorder %s14, 1
      %p100 = scmp.ne.s32.totalorder %s95, %s97
      %p101 = scmp.eq.s32.totalorder %s14, 0
      %p102 = por %p100, %p101
      %p103 = scmp.ne.s32.totalorder %s95, %s97
      %p104 = scmp.eq.s32.totalorder %s19, 1
      %p105 = por %p103, %p104
      %p106 = scmp.ne.s32.totalorder %s97, %s98
      %p107 = scmp.eq.s32.totalorder %s19, 0
      %p108 = por %p106, %p107
      %p109 = scmp.ne.s32.totalorder %s97, %s98
      %p110 = scmp.eq.s32.totalorder %s20, 1
      %p111 = por %p109, %p110
      %p113 = scmp.ne.s32.totalorder %s98, %s112
      %p114 = scmp.eq.s32.totalorder %s20, 0
      %p115 = por %p113, %p114
      %s117 = sadd.s32 %s116, 1
      %p120 = scmp.eq.s32.totalorder %s14, 1
      %p121 = scmp.ne.s32.totalorder %s116, %s118
      %p122 = scmp.eq.s32.totalorder %s14, 0
      %p123 = por %p121, %p122
      %p124 = scmp.ne.s32.totalorder %s116, %s118
      %p125 = scmp.eq.s32.totalorder %s19, 1
      %p126 = por %p124, %p125
      %p127 = scmp.ne.s32.totalorder %s118, %s119
      %p128 = scmp.eq.s32.totalorder %s19, 0
      %p129 = por %p127, %p128
      %p130 = scmp.ne.s32.totalorder %s118, %s119
      %p131 = scmp.eq.s32.totalorder %s20, 1
      %p132 = por %p130, %p131
      %p134 = scmp.ne.s32.totalorder %s119, %s133
      %p135 = scmp.eq.s32.totalorder %s20, 0
      %p136 = por %p134, %p135
      %s138 = sadd.s32 %s137, 1
      %p141 = scmp.eq.s32.totalorder %s14, 1
      %p142 = scmp.ne.s32.totalorder %s137, %s139
      %p143 = scmp.eq.s32.totalorder %s14, 0
      %p144 = por %p142, %p143
      %p145 = scmp.ne.s32.totalorder %s137, %s139
      %p146 = scmp.eq.s32.totalorder %s19, 1
      %p147 = por %p145, %p146
      %p148 = scmp.ne.s32.totalorder %s139, %s140
      %p149 = scmp.eq.s32.totalorder %s19, 0
      %p150 = por %p148, %p149
      %p151 = scmp.ne.s32.totalorder %s139, %s140
      %p152 = scmp.eq.s32.totalorder %s20, 1
      %p153 = por %p151, %p152
      %p155 = scmp.ne.s32.totalorder %s140, %s154
      %p156 = scmp.eq.s32.totalorder %s20, 0
      %p157 = por %p155, %p156
      %s159 = sadd.s32 %s158, 1
      %p162 = scmp.eq.s32.totalorder %s14, 1
      %p163 = scmp.ne.s32.totalorder %s158, %s160
      %p164 = scmp.eq.s32.totalorder %s14, 0
      %p165 = por %p163, %p164
      %p166 = scmp.ne.s32.totalorder %s158, %s160
      %p167 = scmp.eq.s32.totalorder %s19, 1
      %p168 = por %p166, %p167
      %p169 = scmp.ne.s32.totalorder %s160, %s161
      %p170 = scmp.eq.s32.totalorder %s19, 0
      %p171 = por %p169, %p170
      %p172 = scmp.ne.s32.totalorder %s160, %s161
      %p173 = scmp.eq.s32.totalorder %s20, 1
      %p174 = por %p172, %p173
      %p176 = scmp.ne.s32.totalorder %s161, %s175
      %p177 = scmp.eq.s32.totalorder %s20, 0
      %p178 = por %p176, %p177
      %s180 = sadd.s32 %s179, 1
      %p183 = scmp.eq.s32.totalorder %s14, 1
      %p184 = scmp.ne.s32.totalorder %s179, %s181
      %p185 = scmp.eq.s32.totalorder %s14, 0
      %p186 = por %p184, %p185
      %p187 = scmp.ne.s32.totalorder %s179, %s181
      %p188 = scmp.eq.s32.totalorder %s19, 1
      %p189 = por %p187, %p188
      %p190 = scmp.ne.s32.totalorder %s181, %s182
      %p191 = scmp.eq.s32.totalorder %s19, 0
      %p192 = por %p190, %p191
      %p193 = scmp.ne.s32.totalorder %s181, %s182
      %p194 = scmp.eq.s32.totalorder %s20, 1
      %p195 = por %p193, %p194
      %p197 = scmp.ne.s32.totalorder %s182, %s196
      %p198 = scmp.eq.s32.totalorder %s20, 0
      %p199 = por %p197, %p198
      %s200 = ssub.s32 %s14, %s21
      %p201 = scmp.eq.s32.totalorder %s200, 0
      %s203 = sadd.s32 %s202, 1
      %s204 = scalar_select %p201, %s202, %s203
      %p207 = pneg %p201
      %p208 = scmp.eq.s32.totalorder %s14, 1
      %p209 = por %p207, %p208
      %p210 = scmp.ne.s32.totalorder %s202, %s205
      %p211 = scmp.eq.s32.totalorder %s14, 0
      %p212 = por %p210, %p211
      %p213 = scmp.ne.s32.totalorder %s202, %s205
      %p214 = scmp.eq.s32.totalorder %s19, 1
      %p215 = por %p213, %p214
      %p216 = scmp.ne.s32.totalorder %s205, %s206
      %p217 = scmp.eq.s32.totalorder %s19, 0
      %p218 = por %p216, %p217
      %p219 = scmp.ne.s32.totalorder %s205, %s206
      %p220 = scmp.eq.s32.totalorder %s20, 1
      %p221 = por %p219, %p220
      %p223 = scmp.ne.s32.totalorder %s206, %s222
      %p224 = scmp.eq.s32.totalorder %s20, 0
      %p225 = por %p223, %p224
      %p226 = scmp.le.s32.totalorder 1, %s14
      %p227 = scmp.lt.s32.totalorder %s14, 3
      %p228 = pnand %p226, %p227
      %p229 = pneg %p228
      // Predicated region
      $region9: #{multi_head_attention_forward.1} parent=5 // pred_check
        _
      $region10: #{multi_head_attention_forward.1} parent=5 // pred_check_branch
        %231 = sbr.rel (%p228) target = $region12
      $region11: #{multi_head_attention_forward.1} parent=5 // pred_region
        %s232 = ssub.s32 %s14, 1
        // Predicated region
        $region13: #{multi_head_attention_forward.1} parent=11 // pred_check
          %p233 = pneg %p87
        $region14: #{multi_head_attention_forward.1} parent=11 // pred_check_branch
          %235 = sbr.rel (%p233) target = $region16
        $region15: #{multi_head_attention_forward.1} parent=11 // pred_region
          _
        $region16: #{multi_head_attention_forward.1} parent=11 // pred_fallthru
          _
        // Predicated region
        $region17: #{multi_head_attention_forward.1} parent=11 // pred_check
          %p236 = pneg %p108
        $region18: #{multi_head_attention_forward.1} parent=11 // pred_check_branch
          %238 = sbr.rel (%p236) target = $region20
        $region19: #{multi_head_attention_forward.1} parent=11 // pred_region
          _
        $region20: #{multi_head_attention_forward.1} parent=11 // pred_fallthru
          _
        // Predicated region
        $region21: #{multi_head_attention_forward.1} parent=11 // pred_check
          %p239 = pneg %p129
        $region22: #{multi_head_attention_forward.1} parent=11 // pred_check_branch
          %241 = sbr.rel (%p239) target = $region24
        $region23: #{multi_head_attention_forward.1} parent=11 // pred_region
          _
        $region24: #{multi_head_attention_forward.1} parent=11 // pred_fallthru
          _
        // Predicated region
        $region25: #{multi_head_attention_forward.1} parent=11 // pred_check
          %p242 = pneg %p150
        $region26: #{multi_head_attention_forward.1} parent=11 // pred_check_branch
          %244 = sbr.rel (%p242) target = $region28
        $region27: #{multi_head_attention_forward.1} parent=11 // pred_region
          _
        $region28: #{multi_head_attention_forward.1} parent=11 // pred_fallthru
          _
        // Predicated region
        $region29: #{multi_head_attention_forward.1} parent=11 // pred_check
          %p245 = pneg %p171
        $region30: #{multi_head_attention_forward.1} parent=11 // pred_check_branch
          %247 = sbr.rel (%p245) target = $region32
        $region31: #{multi_head_attention_forward.1} parent=11 // pred_region
          _
        $region32: #{multi_head_attention_forward.1} parent=11 // pred_fallthru
          _
        // Predicated region
        $region33: #{multi_head_attention_forward.1} parent=11 // pred_check
          %p248 = pneg %p192
        $region34: #{multi_head_attention_forward.1} parent=11 // pred_check_branch
          %250 = sbr.rel (%p248) target = $region36
        $region35: #{multi_head_attention_forward.1} parent=11 // pred_region
          _
        $region36: #{multi_head_attention_forward.1} parent=11 // pred_fallthru
          _
      $region12: #{multi_head_attention_forward.1} parent=5 // pred_fallthru
        _
      %p251 = scmp.lt.s32.totalorder %s14, 2
      // Predicated region
      $region37: #{multi_head_attention_forward.1} parent=5 // pred_check
        %p252 = pneg %p251
      $region38: #{multi_head_attention_forward.1} parent=5 // pred_check_branch
        %254 = sbr.rel (%p252) target = $region40
      $region39: #{multi_head_attention_forward.1} parent=5 // pred_region
        // Predicated region
        $region41: #{multi_head_attention_forward.1} parent=39 // pred_check
          %p255 = pneg %p34
        $region42: #{multi_head_attention_forward.1} parent=39 // pred_check_branch
          %257 = sbr.rel (%p255) target = $region44
        $region43: #{multi_head_attention_forward.1} parent=39 // pred_region
          %s258 = sand.u32 %s24, 1
          %s259 = sand.u32 %s24, 1
          %s260 = smul.addr %s259, 32
          %s261 = scalar_lea.vmem [#allocation2], %s260
          %s262 = smul.addr %s14, 4
          %s263 = scalar_lea.vmem %s0, %s262
          // Predicated region
          $region45: #{multi_head_attention_forward.1} parent=43 // pred_check
            _
          $region46: #{multi_head_attention_forward.1} parent=43 // pred_check_branch
            %265 = sbr.rel (0) target = $region48
          $region47: #{multi_head_attention_forward.1} parent=43 // pred_region
            // Predicated region
            $region49: #{multi_head_attention_forward.1} parent=47 // pred_check
              _
            $region50: #{multi_head_attention_forward.1} parent=47 // pred_check_branch
              %267 = sbr.rel target = $region52
            $region51: #{multi_head_attention_forward.1} parent=47 // pred_region
              // Predicated region
              $region64: #{multi_head_attention_forward.1} parent=51 // pred_check
                _
              $region65: #{multi_head_attention_forward.1} parent=51 // pred_check_branch
                %296 = sbr.rel (0) target = $region67
              $region66: #{multi_head_attention_forward.1} parent=51 // pred_region
                loop: start=0, step=1, limit=1
                $region68: #{multi_head_attention_forward.1} parent=66 // loop_pre_header
                  _
                $region69: #{multi_head_attention_forward.1} parent=66 // loop_header
                  %s298 = sphi 0, %s302
                  %p299 = scmp.ge.s32.totalorder %s298, 1
                  %s303 = sphi %s263, %s263
                  %s304 = sphi %s261, %s261
                $region70: #{multi_head_attention_forward.1} parent=66 // loop_header_branch
                  %301 = sbr.rel (%p299) target = $region74
                $region71: #{multi_head_attention_forward.1} parent=66 // loop_body
                  _
                $region72: #{multi_head_attention_forward.1} parent=66 // loop_footer
                  %s302 = sadd.s32 1, %s298
                $region73: #{multi_head_attention_forward.1} parent=66 // loop_footer_branch
                  %297 = sbr.rel target = $region69
                $region74: #{multi_head_attention_forward.1} parent=66 // loop_exit
                  _
                loop: start=0, step=1, limit=1
                $region75: #{multi_head_attention_forward.1} parent=66 // loop_pre_header
                  _
                $region76: #{multi_head_attention_forward.1} parent=66 // loop_header
                  %s307 = sphi 0, %s311
                  %p308 = scmp.ge.s32.totalorder %s307, 1
                  %s312 = sphi %s263, %s263
                  %s313 = sphi %s261, %s261
                $region77: #{multi_head_attention_forward.1} parent=66 // loop_header_branch
                  %310 = sbr.rel (%p308) target = $region81
                $region78: #{multi_head_attention_forward.1} parent=66 // loop_body
                  %v314 = vld [vmem:[%s312] sm:$0xf]
                  %315 = vst [vmem:[%s313] sm:$0xf] %v314
                  %v316 = vld [vmem:[%s312 + $0x8] sm:$0xf]
                  %317 = vst [vmem:[%s313 + $0x4] sm:$0xf] %v316
                  %v318 = vld [vmem:[%s312 + $0x10] sm:$0xf]
                  %319 = vst [vmem:[%s313 + $0x8] sm:$0xf] %v318
                  %v320 = vld [vmem:[%s312 + $0x18] sm:$0xf]
                  %321 = vst [vmem:[%s313 + $0xc] sm:$0xf] %v320
                  %v322 = vld [vmem:[%s312 + $0x20] sm:$0xf]
                  %323 = vst [vmem:[%s313 + $0x10] sm:$0xf] %v322
                  %v324 = vld [vmem:[%s312 + $0x28] sm:$0xf]
                  %325 = vst [vmem:[%s313 + $0x14] sm:$0xf] %v324
                  %v326 = vld [vmem:[%s312 + $0x30] sm:$0xf]
                  %327 = vst [vmem:[%s313 + $0x18] sm:$0xf] %v326
                  %v328 = vld [vmem:[%s312 + $0x38] sm:$0xf]
                  %329 = vst [vmem:[%s313 + $0x1c] sm:$0xf] %v328
                $region79: #{multi_head_attention_forward.1} parent=66 // loop_footer
                  %s311 = sadd.s32 1, %s307
                $region80: #{multi_head_attention_forward.1} parent=66 // loop_footer_branch
                  %306 = sbr.rel target = $region76
                $region81: #{multi_head_attention_forward.1} parent=66 // loop_exit
                  _
              $region67: #{multi_head_attention_forward.1} parent=51 // pred_fallthru
                _
            $region52: #{multi_head_attention_forward.1} parent=47 // pred_fallthru
              _
            // Predicated region
            $region53: #{multi_head_attention_forward.1} parent=47 // pred_check
              _
            $region54: #{multi_head_attention_forward.1} parent=47 // pred_check_branch
              %269 = sbr.rel (0) target = $region56
            $region55: #{multi_head_attention_forward.1} parent=47 // pred_region
              loop: start=0, step=1, limit=1
              $region57: #{multi_head_attention_forward.1} parent=55 // loop_pre_header
                _
              $region58: #{multi_head_attention_forward.1} parent=55 // loop_header
                %s272 = sphi 0, %s276
                %p273 = scmp.ge.s32.totalorder %s272, 1
                %s277 = sphi %s263, %s263
                %s278 = sphi %s261, %s261
              $region59: #{multi_head_attention_forward.1} parent=55 // loop_header_branch
                %275 = sbr.rel (%p273) target = $region63
              $region60: #{multi_head_attention_forward.1} parent=55 // loop_body
                %v279 = vld [vmem:[%s277] sm:$0xf]
                %280 = vst [vmem:[%s278] sm:$0xf] %v279
                %v281 = vld [vmem:[%s277 + $0x8] sm:$0xf]
                %282 = vst [vmem:[%s278 + $0x4] sm:$0xf] %v281
                %v283 = vld [vmem:[%s277 + $0x10] sm:$0xf]
                %284 = vst [vmem:[%s278 + $0x8] sm:$0xf] %v283
                %v285 = vld [vmem:[%s277 + $0x18] sm:$0xf]
                %286 = vst [vmem:[%s278 + $0xc] sm:$0xf] %v285
                %v287 = vld [vmem:[%s277 + $0x20] sm:$0xf]
                %288 = vst [vmem:[%s278 + $0x10] sm:$0xf] %v287
                %v289 = vld [vmem:[%s277 + $0x28] sm:$0xf]
                %290 = vst [vmem:[%s278 + $0x14] sm:$0xf] %v289
                %v291 = vld [vmem:[%s277 + $0x30] sm:$0xf]
                %292 = vst [vmem:[%s278 + $0x18] sm:$0xf] %v291
                %v293 = vld [vmem:[%s277 + $0x38] sm:$0xf]
                %294 = vst [vmem:[%s278 + $0x1c] sm:$0xf] %v293
              $region61: #{multi_head_attention_forward.1} parent=55 // loop_footer
                %s276 = sadd.s32 1, %s272
              $region62: #{multi_head_attention_forward.1} parent=55 // loop_footer_branch
                %271 = sbr.rel target = $region58
              $region63: #{multi_head_attention_forward.1} parent=55 // loop_exit
                _
            $region56: #{multi_head_attention_forward.1} parent=47 // pred_fallthru
              _
          $region48: #{multi_head_attention_forward.1} parent=43 // pred_fallthru
            _
          %330 = vnop
        $region44: #{multi_head_attention_forward.1} parent=39 // pred_fallthru
          _
        // Predicated region
        $region82: #{multi_head_attention_forward.1} parent=39 // pred_check
          %p331 = pneg %p60
        $region83: #{multi_head_attention_forward.1} parent=39 // pred_check_branch
          %333 = sbr.rel (%p331) target = $region85
        $region84: #{multi_head_attention_forward.1} parent=39 // pred_region
          %s334 = sand.u32 %s50, 1
          %s335 = sand.u32 %s50, 1
          %s336 = smul.addr %s335, 32
          %s337 = scalar_lea.vmem [#allocation3], %s336
          %s338 = smul.addr %s14, 4
          %s339 = scalar_lea.vmem %s1, %s338
          // Predicated region
          $region86: #{multi_head_attention_forward.1} parent=84 // pred_check
            _
          $region87: #{multi_head_attention_forward.1} parent=84 // pred_check_branch
            %341 = sbr.rel (0) target = $region89
          $region88: #{multi_head_attention_forward.1} parent=84 // pred_region
            // Predicated region
            $region90: #{multi_head_attention_forward.1} parent=88 // pred_check
              _
            $region91: #{multi_head_attention_forward.1} parent=88 // pred_check_branch
              %343 = sbr.rel target = $region93
            $region92: #{multi_head_attention_forward.1} parent=88 // pred_region
              // Predicated region
              $region105: #{multi_head_attention_forward.1} parent=92 // pred_check
                _
              $region106: #{multi_head_attention_forward.1} parent=92 // pred_check_branch
                %372 = sbr.rel (0) target = $region108
              $region107: #{multi_head_attention_forward.1} parent=92 // pred_region
                loop: start=0, step=1, limit=1
                $region109: #{multi_head_attention_forward.1} parent=107 // loop_pre_header
                  _
                $region110: #{multi_head_attention_forward.1} parent=107 // loop_header
                  %s374 = sphi 0, %s378
                  %p375 = scmp.ge.s32.totalorder %s374, 1
                  %s379 = sphi %s339, %s339
                  %s380 = sphi %s337, %s337
                $region111: #{multi_head_attention_forward.1} parent=107 // loop_header_branch
                  %377 = sbr.rel (%p375) target = $region115
                $region112: #{multi_head_attention_forward.1} parent=107 // loop_body
                  _
                $region113: #{multi_head_attention_forward.1} parent=107 // loop_footer
                  %s378 = sadd.s32 1, %s374
                $region114: #{multi_head_attention_forward.1} parent=107 // loop_footer_branch
                  %373 = sbr.rel target = $region110
                $region115: #{multi_head_attention_forward.1} parent=107 // loop_exit
                  _
                loop: start=0, step=1, limit=1
                $region116: #{multi_head_attention_forward.1} parent=107 // loop_pre_header
                  _
                $region117: #{multi_head_attention_forward.1} parent=107 // loop_header
                  %s383 = sphi 0, %s387
                  %p384 = scmp.ge.s32.totalorder %s383, 1
                  %s388 = sphi %s339, %s339
                  %s389 = sphi %s337, %s337
                $region118: #{multi_head_attention_forward.1} parent=107 // loop_header_branch
                  %386 = sbr.rel (%p384) target = $region122
                $region119: #{multi_head_attention_forward.1} parent=107 // loop_body
                  %v390 = vld [vmem:[%s388] sm:$0xf]
                  %391 = vst [vmem:[%s389] sm:$0xf] %v390
                  %v392 = vld [vmem:[%s388 + $0x8] sm:$0xf]
                  %393 = vst [vmem:[%s389 + $0x4] sm:$0xf] %v392
                  %v394 = vld [vmem:[%s388 + $0x10] sm:$0xf]
                  %395 = vst [vmem:[%s389 + $0x8] sm:$0xf] %v394
                  %v396 = vld [vmem:[%s388 + $0x18] sm:$0xf]
                  %397 = vst [vmem:[%s389 + $0xc] sm:$0xf] %v396
                  %v398 = vld [vmem:[%s388 + $0x20] sm:$0xf]
                  %399 = vst [vmem:[%s389 + $0x10] sm:$0xf] %v398
                  %v400 = vld [vmem:[%s388 + $0x28] sm:$0xf]
                  %401 = vst [vmem:[%s389 + $0x14] sm:$0xf] %v400
                  %v402 = vld [vmem:[%s388 + $0x30] sm:$0xf]
                  %403 = vst [vmem:[%s389 + $0x18] sm:$0xf] %v402
                  %v404 = vld [vmem:[%s388 + $0x38] sm:$0xf]
                  %405 = vst [vmem:[%s389 + $0x1c] sm:$0xf] %v404
                $region120: #{multi_head_attention_forward.1} parent=107 // loop_footer
                  %s387 = sadd.s32 1, %s383
                $region121: #{multi_head_attention_forward.1} parent=107 // loop_footer_branch
                  %382 = sbr.rel target = $region117
                $region122: #{multi_head_attention_forward.1} parent=107 // loop_exit
                  _
              $region108: #{multi_head_attention_forward.1} parent=92 // pred_fallthru
                _
            $region93: #{multi_head_attention_forward.1} parent=88 // pred_fallthru
              _
            // Predicated region
            $region94: #{multi_head_attention_forward.1} parent=88 // pred_check
              _
            $region95: #{multi_head_attention_forward.1} parent=88 // pred_check_branch
              %345 = sbr.rel (0) target = $region97
            $region96: #{multi_head_attention_forward.1} parent=88 // pred_region
              loop: start=0, step=1, limit=1
              $region98: #{multi_head_attention_forward.1} parent=96 // loop_pre_header
                _
              $region99: #{multi_head_attention_forward.1} parent=96 // loop_header
                %s348 = sphi 0, %s352
                %p349 = scmp.ge.s32.totalorder %s348, 1
                %s353 = sphi %s339, %s339
                %s354 = sphi %s337, %s337
              $region100: #{multi_head_attention_forward.1} parent=96 // loop_header_branch
                %351 = sbr.rel (%p349) target = $region104
              $region101: #{multi_head_attention_forward.1} parent=96 // loop_body
                %v355 = vld [vmem:[%s353] sm:$0xf]
                %356 = vst [vmem:[%s354] sm:$0xf] %v355
                %v357 = vld [vmem:[%s353 + $0x8] sm:$0xf]
                %358 = vst [vmem:[%s354 + $0x4] sm:$0xf] %v357
                %v359 = vld [vmem:[%s353 + $0x10] sm:$0xf]
                %360 = vst [vmem:[%s354 + $0x8] sm:$0xf] %v359
                %v361 = vld [vmem:[%s353 + $0x18] sm:$0xf]
                %362 = vst [vmem:[%s354 + $0xc] sm:$0xf] %v361
                %v363 = vld [vmem:[%s353 + $0x20] sm:$0xf]
                %364 = vst [vmem:[%s354 + $0x10] sm:$0xf] %v363
                %v365 = vld [vmem:[%s353 + $0x28] sm:$0xf]
                %366 = vst [vmem:[%s354 + $0x14] sm:$0xf] %v365
                %v367 = vld [vmem:[%s353 + $0x30] sm:$0xf]
                %368 = vst [vmem:[%s354 + $0x18] sm:$0xf] %v367
                %v369 = vld [vmem:[%s353 + $0x38] sm:$0xf]
                %370 = vst [vmem:[%s354 + $0x1c] sm:$0xf] %v369
              $region102: #{multi_head_attention_forward.1} parent=96 // loop_footer
                %s352 = sadd.s32 1, %s348
              $region103: #{multi_head_attention_forward.1} parent=96 // loop_footer_branch
                %347 = sbr.rel target = $region99
              $region104: #{multi_head_attention_forward.1} parent=96 // loop_exit
                _
            $region97: #{multi_head_attention_forward.1} parent=88 // pred_fallthru
              _
          $region89: #{multi_head_attention_forward.1} parent=84 // pred_fallthru
            _
          %406 = vnop
        $region85: #{multi_head_attention_forward.1} parent=39 // pred_fallthru
          _
      $region40: #{multi_head_attention_forward.1} parent=5 // pred_fallthru
        _
      %p407 = scmp.le.s32.totalorder 1, %s14
      %p408 = scmp.lt.s32.totalorder %s14, 3
      %p409 = pnand %p407, %p408
      %p410 = pneg %p409
      // Predicated region
      $region123: #{multi_head_attention_forward.1} parent=5 // pred_check
        _
      $region124: #{multi_head_attention_forward.1} parent=5 // pred_check_branch
        %412 = sbr.rel (%p409) target = $region126
      $region125: #{multi_head_attention_forward.1} parent=5 // pred_region
        %s413 = ssub.s32 %s14, 1
        %s414 = sand.u32 %s27, 1
        %s415 = sand.u32 %s27, 1
        %s416 = smul.addr %s415, 32
        %s417 = scalar_lea.vmem [#allocation2], %s416
        // Predicated region
        $region127: #{multi_head_attention_forward.1} parent=125 // pred_check
          %p418 = pneg %p40
        $region128: #{multi_head_attention_forward.1} parent=125 // pred_check_branch
          %420 = sbr.rel (%p418) target = $region130
        $region129: #{multi_head_attention_forward.1} parent=125 // pred_region
          _
        $region130: #{multi_head_attention_forward.1} parent=125 // pred_fallthru
          _
        %s421 = sand.u32 %s53, 1
        %s422 = sand.u32 %s53, 1
        %s423 = smul.addr %s422, 32
        %s424 = scalar_lea.vmem [#allocation3], %s423
        // Predicated region
        $region131: #{multi_head_attention_forward.1} parent=125 // pred_check
          %p425 = pneg %p66
        $region132: #{multi_head_attention_forward.1} parent=125 // pred_check_branch
          %427 = sbr.rel (%p425) target = $region134
        $region133: #{multi_head_attention_forward.1} parent=125 // pred_region
          _
        $region134: #{multi_head_attention_forward.1} parent=125 // pred_fallthru
          _
        %s428 = sand.u32 %s27, 1
        %s429 = sand.u32 %s27, 1
        %s430 = smul.addr %s429, 32
        %s431 = scalar_lea.vmem [#allocation2], %s430
        %p432 = pneg %p40
        %p433 = pneg %p37
        %s434 = sand.u32 %s53, 1
        %s435 = sand.u32 %s53, 1
        %s436 = smul.addr %s435, 32
        %s437 = scalar_lea.vmem [#allocation3], %s436
        %p438 = pneg %p66
        %p439 = pneg %p63
        %p440 = pneg %p87
        %p441 = pneg %p84
        %p442 = pneg %p108
        %p443 = pneg %p105
        %p444 = pneg %p129
        %p445 = pneg %p126
        %p446 = pneg %p150
        %p447 = pneg %p147
        %p448 = pneg %p171
        %p449 = pneg %p168
        %p450 = pneg %p192
        %p451 = pneg %p189
        %p452 = pneg %p218
        %p453 = pneg %p215
        %s454 = sand.u32 %s205, 1
        %s455 = sand.u32 %s205, 1
        %s456 = smul.addr %s455, 32
        %s457 = scalar_lea.vmem [#allocation4], %s456
        %v459 = vld [vmem:[%s417] sm:$0xf]
        %v460 = vld [vmem:[%s417 + $0x4] sm:$0xf]
        %v461 = vld [vmem:[%s417 + $0x8] sm:$0xf]
        %v462 = vld [vmem:[%s417 + $0xc] sm:$0xf]
        %v463 = vld [vmem:[%s417 + $0x10] sm:$0xf]
        %v464 = vld [vmem:[%s417 + $0x14] sm:$0xf]
        %v465 = vld [vmem:[%s417 + $0x18] sm:$0xf]
        %v466 = vld [vmem:[%s417 + $0x1c] sm:$0xf]
        %v467 = vld [vmem:[%s424] sm:$0xf]
        %v468 = vld [vmem:[%s424 + $0x4] sm:$0xf]
        %v469 = vld [vmem:[%s424 + $0x8] sm:$0xf]
        %v470 = vld [vmem:[%s424 + $0xc] sm:$0xf]
        %v471 = vld [vmem:[%s424 + $0x10] sm:$0xf]
        %v472 = vld [vmem:[%s424 + $0x14] sm:$0xf]
        %v473 = vld [vmem:[%s424 + $0x18] sm:$0xf]
        %v474 = vld [vmem:[%s424 + $0x1c] sm:$0xf]
        %v475 = vld [vmem:[%s2] sm:$0xf]
        %v476 = vld [vmem:[%s2 + $0x4] sm:$0xf]
        %v477 = vld [vmem:[%s2 + $0x8] sm:$0xf]
        %v478 = vld [vmem:[%s2 + $0xc] sm:$0xf]
        %v479 = vld [vmem:[%s2 + $0x10] sm:$0xf]
        %v480 = vld [vmem:[%s2 + $0x14] sm:$0xf]
        %v481 = vld [vmem:[%s2 + $0x18] sm:$0xf]
        %v482 = vld [vmem:[%s2 + $0x1c] sm:$0xf]
        %v483 = vld [vmem:[%s3] sm:$0xff]
        %v484 = vld [vmem:[%s3 + $0x8] sm:$0xff]
        %v485 = vld [vmem:[%s3 + $0x10] sm:$0xff]
        %v486 = vld [vmem:[%s3 + $0x18] sm:$0xff]
        %v487 = vld [vmem:[%s3 + $0x20] sm:$0xff]
        %v488 = vld [vmem:[%s3 + $0x28] sm:$0xff]
        %v489 = vld [vmem:[%s3 + $0x30] sm:$0xff]
        %v490 = vld [vmem:[%s3 + $0x38] sm:$0xff]
        %492 = vset.pattern.permute.xlu0 0
        %493 = vperm.xlu0 %492, %v483
        %v494 = vpop.permute.xlu0 %493
        %497 = vset.pattern.permute.xlu0 0
        %498 = vperm.xlu0 %497, %v484
        %v499 = vpop.permute.xlu0 %498
        %502 = vset.pattern.permute.xlu0 0
        %503 = vperm.xlu0 %502, %v485
        %v504 = vpop.permute.xlu0 %503
        %507 = vset.pattern.permute.xlu0 0
        %508 = vperm.xlu0 %507, %v486
        %v509 = vpop.permute.xlu0 %508
        %512 = vset.pattern.permute.xlu0 0
        %513 = vperm.xlu0 %512, %v487
        %v514 = vpop.permute.xlu0 %513
        %517 = vset.pattern.permute.xlu0 0
        %518 = vperm.xlu0 %517, %v488
        %v519 = vpop.permute.xlu0 %518
        %522 = vset.pattern.permute.xlu0 0
        %523 = vperm.xlu0 %522, %v489
        %v524 = vpop.permute.xlu0 %523
        %527 = vset.pattern.permute.xlu0 0
        %528 = vperm.xlu0 %527, %v490
        %v529 = vpop.permute.xlu0 %528
        %v539 = vunpack.c.l.b16 %v475
        %v540 = vunpack.c.l.b16 %v476
        %v541 = vunpack.c.l.b16 %v477
        %v542 = vunpack.c.l.b16 %v478
        %v543 = vunpack.c.l.b16 %v479
        %v544 = vunpack.c.l.b16 %v480
        %v545 = vunpack.c.l.b16 %v481
        %v546 = vunpack.c.l.b16 %v482
        %v547 = vpack.c.b16 %v540, %v539
        %v548 = vpack.c.b16 %v542, %v541
        %v549 = vpack.c.b16 %v544, %v543
        %v550 = vpack.c.b16 %v546, %v545
        %v559 = vunpack.c.l.b16 %v459
        %v560 = vunpack.c.l.b16 %v460
        %v561 = vunpack.c.l.b16 %v461
        %v562 = vunpack.c.l.b16 %v462
        %v563 = vunpack.c.l.b16 %v463
        %v564 = vunpack.c.l.b16 %v464
        %v565 = vunpack.c.l.b16 %v465
        %v566 = vunpack.c.l.b16 %v466
        %v567 = vpack.c.b16 %v560, %v559
        %v568 = vpack.c.b16 %v562, %v561
        %v569 = vpack.c.b16 %v564, %v563
        %v570 = vpack.c.b16 %v566, %v565
        %vm575 = vcmask 523264
        %v577 = vsel %vm575, %v547, 0
        %v580 = vsel %vm575, %v548, 0
        %v583 = vsel %vm575, %v549, 0
        %v586 = vsel %vm575, %v550, 0
        %588 = vmatprep.subr.bf16.mxu0 0
        %589 = vmatpush1.bf16.msra.mxu0 %v567
        %590 = vmatprep.subr.bf16.mxu0 0
        %591 = vmatpush1.bf16.msra.mxu0 %v568
        %592 = vmatprep.subr.bf16.mxu0 0
        %593 = vmatpush1.bf16.msra.mxu0 %v569
        %594 = vmatprep.subr.bf16.mxu0 0
        %595 = vmatpush1.bf16.msra.mxu0 %v570
        %596 = vmatprep.subr.bf16.mxu0 0
        %597 = vmatpush1.bf16.msra.mxu0 0
        %598 = vmatprep.subr.bf16.mxu0 0
        %599 = vmatpush1.bf16.msra.mxu0 0
        %600 = vmatprep.subr.bf16.mxu0 0
        %601 = vmatpush1.bf16.msra.mxu0 0
        %602 = vmatprep.subr.bf16.mxu0 0
        %603 = vmatpush1.bf16.msra.mxu0 0
        %604 = vmatprep.subr.bf16.mxu0 0
        %605 = vmatpush1.bf16.msra.mxu0 0
        %606 = vmatprep.subr.bf16.mxu0 0
        %607 = vmatpush1.bf16.msra.mxu0 0
        %608 = vmatprep.subr.bf16.mxu0 0
        %609 = vmatpush1.bf16.msra.mxu0 0
        %610 = vmatprep.subr.bf16.mxu0 0
        %611 = vmatpush1.bf16.msra.mxu0 0
        %612 = vmatprep.subr.bf16.mxu0 0
        %613 = vmatpush1.bf16.msra.mxu0 0
        %614 = vmatprep.subr.bf16.mxu0 0
        %615 = vmatpush1.bf16.msra.mxu0 0
        %616 = vmatprep.subr.bf16.mxu0 0
        %617 = vmatpush1.bf16.msra.mxu0 0
        %618 = vmatprep.subr.bf16.mxu0 0
        %619 = vmatpush1.bf16.msra.mxu0 0
        %620 = vmatprep.mubr.bf16.mxu0 0
        %621 = vmatmul.mubr.bf16.gmra.mrb[0].mxu0 %v577
        %v622 = vpop.f32.mrb[0].mxu0
        %v623 = vadd.f32 %v494, %v622
        %v624 = vpop.f32.mrb[0].mxu0
        %v625 = vpop.f32.mrb[0].mxu0
        %v626 = vadd.f32 %v499, %v625
        %v627 = vpop.f32.mrb[0].mxu0
        %628 = vmatprep.mubr.bf16.mxu0 0
        %629 = vmatmul.mubr.bf16.gmra.mrb[0].mxu0 %v580
        %v630 = vpop.f32.mrb[0].mxu0
        %v631 = vadd.f32 %v504, %v630
        %v632 = vpop.f32.mrb[0].mxu0
        %v633 = vpop.f32.mrb[0].mxu0
        %v634 = vadd.f32 %v509, %v633
        %v635 = vpop.f32.mrb[0].mxu0
        %636 = vmatprep.mubr.bf16.mxu0 0
        %637 = vmatmul.mubr.bf16.gmra.mrb[0].mxu0 %v583
        %v638 = vpop.f32.mrb[0].mxu0
        %v639 = vadd.f32 %v514, %v638
        %v640 = vpop.f32.mrb[0].mxu0
        %v641 = vpop.f32.mrb[0].mxu0
        %v642 = vadd.f32 %v519, %v641
        %v643 = vpop.f32.mrb[0].mxu0
        %644 = vmatprep.mubr.bf16.mxu0 0
        %645 = vmatmul.mubr.bf16.gmra.mrb[0].mxu0 %v586
        %v646 = vpop.f32.mrb[0].mxu0
        %v647 = vadd.f32 %v524, %v646
        %v648 = vpop.f32.mrb[0].mxu0
        %v649 = vpop.f32.mrb[0].mxu0
        %v650 = vadd.f32 %v529, %v649
        %v651 = vpop.f32.mrb[0].mxu0
        %652 = vdwg.mxu0
        %v653 = vld [vmem:[%s4] sm:$0xf]
        %v654 = vld [vmem:[%s4 + $0x4] sm:$0xf]
        %v655 = vld [vmem:[%s4 + $0x8] sm:$0xf]
        %v656 = vld [vmem:[%s4 + $0xc] sm:$0xf]
        %v657 = vld [vmem:[%s4 + $0x10] sm:$0xf]
        %v658 = vld [vmem:[%s4 + $0x14] sm:$0xf]
        %v659 = vld [vmem:[%s4 + $0x18] sm:$0xf]
        %v660 = vld [vmem:[%s4 + $0x1c] sm:$0xf]
        %v661 = vld [vmem:[%s4 + $0x20] sm:$0xf]
        %v662 = vld [vmem:[%s4 + $0x24] sm:$0xf]
        %v663 = vld [vmem:[%s4 + $0x28] sm:$0xf]
        %v664 = vld [vmem:[%s4 + $0x2c] sm:$0xf]
        %v665 = vld [vmem:[%s4 + $0x30] sm:$0xf]
        %v666 = vld [vmem:[%s4 + $0x34] sm:$0xf]
        %v667 = vld [vmem:[%s4 + $0x38] sm:$0xf]
        %v668 = vld [vmem:[%s4 + $0x3c] sm:$0xf]
        %v669 = vld [vmem:[%s5] sm:$0xff]
        %v670 = vld [vmem:[%s5 + $0x8] sm:$0xff]
        %v671 = vld [vmem:[%s5 + $0x10] sm:$0xff]
        %v672 = vld [vmem:[%s5 + $0x18] sm:$0xff]
        %v673 = vld [vmem:[%s5 + $0x20] sm:$0xff]
        %v674 = vld [vmem:[%s5 + $0x28] sm:$0xff]
        %v675 = vld [vmem:[%s5 + $0x30] sm:$0xff]
        %v676 = vld [vmem:[%s5 + $0x38] sm:$0xff]
        %v677 = vld [vmem:[%s5 + $0x40] sm:$0xff]
        %v678 = vld [vmem:[%s5 + $0x48] sm:$0xff]
        %v679 = vld [vmem:[%s5 + $0x50] sm:$0xff]
        %v680 = vld [vmem:[%s5 + $0x58] sm:$0xff]
        %v681 = vld [vmem:[%s5 + $0x60] sm:$0xff]
        %v682 = vld [vmem:[%s5 + $0x68] sm:$0xff]
        %v683 = vld [vmem:[%s5 + $0x70] sm:$0xff]
        %v684 = vld [vmem:[%s5 + $0x78] sm:$0xff]
        %686 = vset.pattern.permute.xlu0 0
        %687 = vperm.xlu0 %686, %v669
        %v688 = vpop.permute.xlu0 %687
        %691 = vset.pattern.permute.xlu0 0
        %692 = vperm.xlu0 %691, %v670
        %v693 = vpop.permute.xlu0 %692
        %696 = vset.pattern.permute.xlu0 0
        %697 = vperm.xlu0 %696, %v671
        %v698 = vpop.permute.xlu0 %697
        %701 = vset.pattern.permute.xlu0 0
        %702 = vperm.xlu0 %701, %v672
        %v703 = vpop.permute.xlu0 %702
        %706 = vset.pattern.permute.xlu0 0
        %707 = vperm.xlu0 %706, %v673
        %v708 = vpop.permute.xlu0 %707
        %711 = vset.pattern.permute.xlu0 0
        %712 = vperm.xlu0 %711, %v674
        %v713 = vpop.permute.xlu0 %712
        %716 = vset.pattern.permute.xlu0 0
        %717 = vperm.xlu0 %716, %v675
        %v718 = vpop.permute.xlu0 %717
        %721 = vset.pattern.permute.xlu0 0
        %722 = vperm.xlu0 %721, %v676
        %v723 = vpop.permute.xlu0 %722
        %726 = vset.pattern.permute.xlu0 0
        %727 = vperm.xlu0 %726, %v677
        %v728 = vpop.permute.xlu0 %727
        %731 = vset.pattern.permute.xlu0 0
        %732 = vperm.xlu0 %731, %v678
        %v733 = vpop.permute.xlu0 %732
        %736 = vset.pattern.permute.xlu0 0
        %737 = vperm.xlu0 %736, %v679
        %v738 = vpop.permute.xlu0 %737
        %741 = vset.pattern.permute.xlu0 0
        %742 = vperm.xlu0 %741, %v680
        %v743 = vpop.permute.xlu0 %742
        %746 = vset.pattern.permute.xlu0 0
        %747 = vperm.xlu0 %746, %v681
        %v748 = vpop.permute.xlu0 %747
        %751 = vset.pattern.permute.xlu0 0
        %752 = vperm.xlu0 %751, %v682
        %v753 = vpop.permute.xlu0 %752
        %756 = vset.pattern.permute.xlu0 0
        %757 = vperm.xlu0 %756, %v683
        %v758 = vpop.permute.xlu0 %757
        %761 = vset.pattern.permute.xlu0 0
        %762 = vperm.xlu0 %761, %v684
        %v763 = vpop.permute.xlu0 %762
        %v781 = vunpack.c.l.b16 %v653
        %v782 = vunpack.c.l.b16 %v654
        %v783 = vunpack.c.l.b16 %v655
        %v784 = vunpack.c.l.b16 %v656
        %v785 = vunpack.c.l.b16 %v657
        %v786 = vunpack.c.l.b16 %v658
        %v787 = vunpack.c.l.b16 %v659
        %v788 = vunpack.c.l.b16 %v660
        %v789 = vunpack.c.l.b16 %v661
        %v790 = vunpack.c.l.b16 %v662
        %v791 = vunpack.c.l.b16 %v663
        %v792 = vunpack.c.l.b16 %v664
        %v793 = vunpack.c.l.b16 %v665
        %v794 = vunpack.c.l.b16 %v666
        %v795 = vunpack.c.l.b16 %v667
        %v796 = vunpack.c.l.b16 %v668
        %v797 = vpack.c.b16 %v782, %v781
        %v798 = vpack.c.b16 %v784, %v783
        %v799 = vpack.c.b16 %v786, %v785
        %v800 = vpack.c.b16 %v788, %v787
        %v801 = vpack.c.b16 %v790, %v789
        %v802 = vpack.c.b16 %v792, %v791
        %v803 = vpack.c.b16 %v794, %v793
        %v804 = vpack.c.b16 %v796, %v795
        %v813 = vunpack.c.l.b16 %v467
        %v814 = vunpack.c.l.b16 %v468
        %v815 = vunpack.c.l.b16 %v469
        %v816 = vunpack.c.l.b16 %v470
        %v817 = vunpack.c.l.b16 %v471
        %v818 = vunpack.c.l.b16 %v472
        %v819 = vunpack.c.l.b16 %v473
        %v820 = vunpack.c.l.b16 %v474
        %v821 = vpack.c.b16 %v814, %v813
        %v822 = vpack.c.b16 %v816, %v815
        %v823 = vpack.c.b16 %v818, %v817
        %v824 = vpack.c.b16 %v820, %v819
        %v830 = vsel %vm575, %v797, 0
        %v833 = vsel %vm575, %v798, 0
        %v836 = vsel %vm575, %v799, 0
        %v839 = vsel %vm575, %v800, 0
        %v842 = vsel %vm575, %v801, 0
        %v845 = vsel %vm575, %v802, 0
        %v848 = vsel %vm575, %v803, 0
        %v851 = vsel %vm575, %v804, 0
        %853 = vmatprep.subr.bf16.mxu0 0
        %854 = vmatpush1.bf16.msra.mxu0 %v821
        %855 = vmatprep.subr.bf16.mxu0 0
        %856 = vmatpush1.bf16.msra.mxu0 %v822
        %857 = vmatprep.subr.bf16.mxu0 0
        %858 = vmatpush1.bf16.msra.mxu0 %v823
        %859 = vmatprep.subr.bf16.mxu0 0
        %860 = vmatpush1.bf16.msra.mxu0 %v824
        %861 = vmatprep.subr.bf16.mxu0 0
        %862 = vmatpush1.bf16.msra.mxu0 0
        %863 = vmatprep.subr.bf16.mxu0 0
        %864 = vmatpush1.bf16.msra.mxu0 0
        %865 = vmatprep.subr.bf16.mxu0 0
        %866 = vmatpush1.bf16.msra.mxu0 0
        %867 = vmatprep.subr.bf16.mxu0 0
        %868 = vmatpush1.bf16.msra.mxu0 0
        %869 = vmatprep.subr.bf16.mxu0 0
        %870 = vmatpush1.bf16.msra.mxu0 0
        %871 = vmatprep.subr.bf16.mxu0 0
        %872 = vmatpush1.bf16.msra.mxu0 0
        %873 = vmatprep.subr.bf16.mxu0 0
        %874 = vmatpush1.bf16.msra.mxu0 0
        %875 = vmatprep.subr.bf16.mxu0 0
        %876 = vmatpush1.bf16.msra.mxu0 0
        %877 = vmatprep.subr.bf16.mxu0 0
        %878 = vmatpush1.bf16.msra.mxu0 0
        %879 = vmatprep.subr.bf16.mxu0 0
        %880 = vmatpush1.bf16.msra.mxu0 0
        %881 = vmatprep.subr.bf16.mxu0 0
        %882 = vmatpush1.bf16.msra.mxu0 0
        %883 = vmatprep.subr.bf16.mxu0 0
        %884 = vmatpush1.bf16.msra.mxu0 0
        %885 = vmatprep.mubr.bf16.mxu0 0
        %886 = vmatmul.mubr.bf16.gmra.mrb[0].mxu0 %v830
        %v887 = vpop.f32.mrb[0].mxu0
        %v888 = vadd.f32 %v688, %v887
        %v889 = vpop.f32.mrb[0].mxu0
        %v890 = vpop.f32.mrb[0].mxu0
        %v891 = vadd.f32 %v693, %v890
        %v892 = vpop.f32.mrb[0].mxu0
        %893 = vmatprep.mubr.bf16.mxu0 0
        %894 = vmatmul.mubr.bf16.gmra.mrb[0].mxu0 %v833
        %v895 = vpop.f32.mrb[0].mxu0
        %v896 = vadd.f32 %v698, %v895
        %v897 = vpop.f32.mrb[0].mxu0
        %v898 = vpop.f32.mrb[0].mxu0
        %v899 = vadd.f32 %v703, %v898
        %v900 = vpop.f32.mrb[0].mxu0
        %901 = vmatprep.mubr.bf16.mxu0 0
        %902 = vmatmul.mubr.bf16.gmra.mrb[0].mxu0 %v836
        %v903 = vpop.f32.mrb[0].mxu0
        %v904 = vadd.f32 %v708, %v903
        %v905 = vpop.f32.mrb[0].mxu0
        %v906 = vpop.f32.mrb[0].mxu0
        %v907 = vadd.f32 %v713, %v906
        %v908 = vpop.f32.mrb[0].mxu0
        %909 = vmatprep.mubr.bf16.mxu0 0
        %910 = vmatmul.mubr.bf16.gmra.mrb[0].mxu0 %v839
        %v911 = vpop.f32.mrb[0].mxu0
        %v912 = vadd.f32 %v718, %v911
        %v913 = vpop.f32.mrb[0].mxu0
        %v914 = vpop.f32.mrb[0].mxu0
        %v915 = vadd.f32 %v723, %v914
        %v916 = vpop.f32.mrb[0].mxu0
        %917 = vmatprep.mubr.bf16.mxu0 0
        %918 = vmatmul.mubr.bf16.gmra.mrb[0].mxu0 %v842
        %v919 = vpop.f32.mrb[0].mxu0
        %v920 = vadd.f32 %v728, %v919
        %v921 = vpop.f32.mrb[0].mxu0
        %v922 = vpop.f32.mrb[0].mxu0
        %v923 = vadd.f32 %v733, %v922
        %v924 = vpop.f32.mrb[0].mxu0
        %925 = vmatprep.mubr.bf16.mxu0 0
        %926 = vmatmul.mubr.bf16.gmra.mrb[0].mxu0 %v845
        %v927 = vpop.f32.mrb[0].mxu0
        %v928 = vadd.f32 %v738, %v927
        %v929 = vpop.f32.mrb[0].mxu0
        %v930 = vpop.f32.mrb[0].mxu0
        %v931 = vadd.f32 %v743, %v930
        %v932 = vpop.f32.mrb[0].mxu0
        %933 = vmatprep.mubr.bf16.mxu0 0
        %934 = vmatmul.mubr.bf16.gmra.mrb[0].mxu0 %v848
        %v935 = vpop.f32.mrb[0].mxu0
        %v936 = vadd.f32 %v748, %v935
        %v937 = vpop.f32.mrb[0].mxu0
        %v938 = vpop.f32.mrb[0].mxu0
        %v939 = vadd.f32 %v753, %v938
        %v940 = vpop.f32.mrb[0].mxu0
        %941 = vmatprep.mubr.bf16.mxu0 0
        %942 = vmatmul.mubr.bf16.gmra.mrb[0].mxu0 %v851
        %v943 = vpop.f32.mrb[0].mxu0
        %v944 = vadd.f32 %v758, %v943
        %v945 = vpop.f32.mrb[0].mxu0
        %v946 = vpop.f32.mrb[0].mxu0
        %v947 = vadd.f32 %v763, %v946
        %v948 = vpop.f32.mrb[0].mxu0
        %949 = vdwg.mxu0
        %v950 = vpack.c.bf16 %v626, %v623
        %v951 = vpack.c.bf16 %v634, %v631
        %v952 = vpack.c.bf16 %v642, %v639
        %v953 = vpack.c.bf16 %v650, %v647
        %958 = vrot.lane.b32.xlu0 %v950, 64
        %v959 = vpop.permute.xlu0 %958
        %960 = vrot.lane.b32.xlu0 %v951, 64
        %v961 = vpop.permute.xlu0 %960
        %962 = vrot.lane.b32.xlu0 %v952, 64
        %v963 = vpop.permute.xlu0 %962
        %964 = vrot.lane.b32.xlu0 %v953, 64
        %v965 = vpop.permute.xlu0 %964
        %v968 = vpack.i.b16 %v959, %v950
        %v970 = vshrl.u32 %v950, 16
        %v971 = vshrl.u32 %v959, 16
        %v972 = vpack.i.b16 %v971, %v970
        %v975 = vpack.i.b16 0, 0
        %v977 = vshrl.u32 0, 16
        %v978 = vpack.i.b16 %v977, %v977
        %v982 = vpack.i.b16 %v961, %v951
        %v984 = vshrl.u32 %v951, 16
        %v985 = vshrl.u32 %v961, 16
        %v986 = vpack.i.b16 %v985, %v984
        %v990 = vpack.i.b16 %v963, %v952
        %v992 = vshrl.u32 %v952, 16
        %v993 = vshrl.u32 %v963, 16
        %v994 = vpack.i.b16 %v993, %v992
        %v998 = vpack.i.b16 %v965, %v953
        %v1000 = vshrl.u32 %v953, 16
        %v1001 = vshrl.u32 %v965, 16
        %v1002 = vpack.i.b16 %v1001, %v1000
        %v1004 = vcombine.high %v968, %v975
        %v1006 = vunpack.c.l.s4 1983009808
        %v1007 = vunpack.c.0.s8 %v1006
        %v1008 = vlaneseq
        %v1009 = vshrl.u32 %v1008, 7
        %v1010 = vsub.s32 %v1007, %v1009
        %v1011 = vrot.slane %v968, %v1010
        %v1013 = vunpack.c.l.s4 1983009808
        %v1014 = vunpack.c.0.s8 %v1013
        %v1015 = vlaneseq
        %v1016 = vshrl.u32 %v1015, 7
        %v1017 = vsub.s32 %v1014, %v1016
        %v1018 = vrot.slane %v1004, %v1017
        %v1019 = vcombine.high %v1011, 0
        %v1021 = vunpack.c.l.s4 1934713408
        %v1022 = vunpack.c.0.s8 %v1021
        %v1023 = vlaneseq
        %v1024 = vshrl.u32 %v1023, 7
        %v1025 = vsub.s32 %v1022, %v1024
        %v1026 = vrot.slane %v1011, %v1025
        %v1028 = vunpack.c.l.s4 1934713408
        %v1029 = vunpack.c.0.s8 %v1028
        %v1030 = vlaneseq
        %v1031 = vshrl.u32 %v1030, 7
        %v1032 = vsub.s32 %v1029, %v1031
        %v1033 = vrot.slane %v1019, %v1032
        %v1034 = vcombine.high %v1018, 0
        %v1036 = vunpack.c.l.s4 1934713408
        %v1037 = vunpack.c.0.s8 %v1036
        %v1038 = vlaneseq
        %v1039 = vshrl.u32 %v1038, 7
        %v1040 = vsub.s32 %v1037, %v1039
        %v1041 = vrot.slane %v1018, %v1040
        %v1043 = vunpack.c.l.s4 1934713408
        %v1044 = vunpack.c.0.s8 %v1043
        %v1045 = vlaneseq
        %v1046 = vshrl.u32 %v1045, 7
        %v1047 = vsub.s32 %v1044, %v1046
        %v1048 = vrot.slane %v1034, %v1047
        %v1049 = vcombine.high %v1026, 0
        %v1050 = vcombine.high %v1033, 0
        %v1051 = vcombine.high %v1041, 0
        %v1052 = vcombine.high %v1048, 0
        %v1053 = vcombine.high %v972, %v978
        %v1055 = vunpack.c.l.s4 1983009808
        %v1056 = vunpack.c.0.s8 %v1055
        %v1057 = vlaneseq
        %v1058 = vshrl.u32 %v1057, 7
        %v1059 = vsub.s32 %v1056, %v1058
        %v1060 = vrot.slane %v972, %v1059
        %v1062 = vunpack.c.l.s4 1983009808
        %v1063 = vunpack.c.0.s8 %v1062
        %v1064 = vlaneseq
        %v1065 = vshrl.u32 %v1064, 7
        %v1066 = vsub.s32 %v1063, %v1065
        %v1067 = vrot.slane %v1053, %v1066
        %v1068 = vcombine.high %v1060, 0
        %v1070 = vunpack.c.l.s4 1934713408
        %v1071 = vunpack.c.0.s8 %v1070
        %v1072 = vlaneseq
        %v1073 = vshrl.u32 %v1072, 7
        %v1074 = vsub.s32 %v1071, %v1073
        %v1075 = vrot.slane %v1060, %v1074
        %v1077 = vunpack.c.l.s4 1934713408
        %v1078 = vunpack.c.0.s8 %v1077
        %v1079 = vlaneseq
        %v1080 = vshrl.u32 %v1079, 7
        %v1081 = vsub.s32 %v1078, %v1080
        %v1082 = vrot.slane %v1068, %v1081
        %v1083 = vcombine.high %v1067, 0
        %v1085 = vunpack.c.l.s4 1934713408
        %v1086 = vunpack.c.0.s8 %v1085
        %v1087 = vlaneseq
        %v1088 = vshrl.u32 %v1087, 7
        %v1089 = vsub.s32 %v1086, %v1088
        %v1090 = vrot.slane %v1067, %v1089
        %v1092 = vunpack.c.l.s4 1934713408
        %v1093 = vunpack.c.0.s8 %v1092
        %v1094 = vlaneseq
        %v1095 = vshrl.u32 %v1094, 7
        %v1096 = vsub.s32 %v1093, %v1095
        %v1097 = vrot.slane %v1083, %v1096
        %v1098 = vcombine.high %v1075, 0
        %v1099 = vcombine.high %v1082, 0
        %v1100 = vcombine.high %v1090, 0
        %v1101 = vcombine.high %v1097, 0
        %v1102 = vcombine.high %v982, %v975
        %v1104 = vunpack.c.l.s4 1983009808
        %v1105 = vunpack.c.0.s8 %v1104
        %v1106 = vlaneseq
        %v1107 = vshrl.u32 %v1106, 7
        %v1108 = vsub.s32 %v1105, %v1107
        %v1109 = vrot.slane %v982, %v1108
        %v1111 = vunpack.c.l.s4 1983009808
        %v1112 = vunpack.c.0.s8 %v1111
        %v1113 = vlaneseq
        %v1114 = vshrl.u32 %v1113, 7
        %v1115 = vsub.s32 %v1112, %v1114
        %v1116 = vrot.slane %v1102, %v1115
        %v1117 = vcombine.high %v1109, 0
        %v1119 = vunpack.c.l.s4 1934713408
        %v1120 = vunpack.c.0.s8 %v1119
        %v1121 = vlaneseq
        %v1122 = vshrl.u32 %v1121, 7
        %v1123 = vsub.s32 %v1120, %v1122
        %v1124 = vrot.slane %v1109, %v1123
        %v1126 = vunpack.c.l.s4 1934713408
        %v1127 = vunpack.c.0.s8 %v1126
        %v1128 = vlaneseq
        %v1129 = vshrl.u32 %v1128, 7
        %v1130 = vsub.s32 %v1127, %v1129
        %v1131 = vrot.slane %v1117, %v1130
        %v1132 = vcombine.high %v1116, 0
        %v1134 = vunpack.c.l.s4 1934713408
        %v1135 = vunpack.c.0.s8 %v1134
        %v1136 = vlaneseq
        %v1137 = vshrl.u32 %v1136, 7
        %v1138 = vsub.s32 %v1135, %v1137
        %v1139 = vrot.slane %v1116, %v1138
        %v1141 = vunpack.c.l.s4 1934713408
        %v1142 = vunpack.c.0.s8 %v1141
        %v1143 = vlaneseq
        %v1144 = vshrl.u32 %v1143, 7
        %v1145 = vsub.s32 %v1142, %v1144
        %v1146 = vrot.slane %v1132, %v1145
        %v1147 = vcombine.high %v1124, 0
        %v1148 = vcombine.high %v1131, 0
        %v1149 = vcombine.high %v1139, 0
        %v1150 = vcombine.high %v1146, 0
        %v1151 = vcombine.high %v986, %v978
        %v1153 = vunpack.c.l.s4 1983009808
        %v1154 = vunpack.c.0.s8 %v1153
        %v1155 = vlaneseq
        %v1156 = vshrl.u32 %v1155, 7
        %v1157 = vsub.s32 %v1154, %v1156
        %v1158 = vrot.slane %v986, %v1157
        %v1160 = vunpack.c.l.s4 1983009808
        %v1161 = vunpack.c.0.s8 %v1160
        %v1162 = vlaneseq
        %v1163 = vshrl.u32 %v1162, 7
        %v1164 = vsub.s32 %v1161, %v1163
        %v1165 = vrot.slane %v1151, %v1164
        %v1166 = vcombine.high %v1158, 0
        %v1168 = vunpack.c.l.s4 1934713408
        %v1169 = vunpack.c.0.s8 %v1168
        %v1170 = vlaneseq
        %v1171 = vshrl.u32 %v1170, 7
        %v1172 = vsub.s32 %v1169, %v1171
        %v1173 = vrot.slane %v1158, %v1172
        %v1175 = vunpack.c.l.s4 1934713408
        %v1176 = vunpack.c.0.s8 %v1175
        %v1177 = vlaneseq
        %v1178 = vshrl.u32 %v1177, 7
        %v1179 = vsub.s32 %v1176, %v1178
        %v1180 = vrot.slane %v1166, %v1179
        %v1181 = vcombine.high %v1165, 0
        %v1183 = vunpack.c.l.s4 1934713408
        %v1184 = vunpack.c.0.s8 %v1183
        %v1185 = vlaneseq
        %v1186 = vshrl.u32 %v1185, 7
        %v1187 = vsub.s32 %v1184, %v1186
        %v1188 = vrot.slane %v1165, %v1187
        %v1190 = vunpack.c.l.s4 1934713408
        %v1191 = vunpack.c.0.s8 %v1190
        %v1192 = vlaneseq
        %v1193 = vshrl.u32 %v1192, 7
        %v1194 = vsub.s32 %v1191, %v1193
        %v1195 = vrot.slane %v1181, %v1194
        %v1196 = vcombine.high %v1173, 0
        %v1197 = vcombine.high %v1180, 0
        %v1198 = vcombine.high %v1188, 0
        %v1199 = vcombine.high %v1195, 0
        %v1200 = vcombine.high %v990, %v975
        %v1202 = vunpack.c.l.s4 1983009808
        %v1203 = vunpack.c.0.s8 %v1202
        %v1204 = vlaneseq
        %v1205 = vshrl.u32 %v1204, 7
        %v1206 = vsub.s32 %v1203, %v1205
        %v1207 = vrot.slane %v990, %v1206
        %v1209 = vunpack.c.l.s4 1983009808
        %v1210 = vunpack.c.0.s8 %v1209
        %v1211 = vlaneseq
        %v1212 = vshrl.u32 %v1211, 7
        %v1213 = vsub.s32 %v1210, %v1212
        %v1214 = vrot.slane %v1200, %v1213
        %v1215 = vcombine.high %v1207, 0
        %v1217 = vunpack.c.l.s4 1934713408
        %v1218 = vunpack.c.0.s8 %v1217
        %v1219 = vlaneseq
        %v1220 = vshrl.u32 %v1219, 7
        %v1221 = vsub.s32 %v1218, %v1220
        %v1222 = vrot.slane %v1207, %v1221
        %v1224 = vunpack.c.l.s4 1934713408
        %v1225 = vunpack.c.0.s8 %v1224
        %v1226 = vlaneseq
        %v1227 = vshrl.u32 %v1226, 7
        %v1228 = vsub.s32 %v1225, %v1227
        %v1229 = vrot.slane %v1215, %v1228
        %v1230 = vcombine.high %v1214, 0
        %v1232 = vunpack.c.l.s4 1934713408
        %v1233 = vunpack.c.0.s8 %v1232
        %v1234 = vlaneseq
        %v1235 = vshrl.u32 %v1234, 7
        %v1236 = vsub.s32 %v1233, %v1235
        %v1237 = vrot.slane %v1214, %v1236
        %v1239 = vunpack.c.l.s4 1934713408
        %v1240 = vunpack.c.0.s8 %v1239
        %v1241 = vlaneseq
        %v1242 = vshrl.u32 %v1241, 7
        %v1243 = vsub.s32 %v1240, %v1242
        %v1244 = vrot.slane %v1230, %v1243
        %v1245 = vcombine.high %v1222, 0
        %v1246 = vcombine.high %v1229, 0
        %v1247 = vcombine.high %v1237, 0
        %v1248 = vcombine.high %v1244, 0
        %v1249 = vcombine.high %v994, %v978
        %v1251 = vunpack.c.l.s4 1983009808
        %v1252 = vunpack.c.0.s8 %v1251
        %v1253 = vlaneseq
        %v1254 = vshrl.u32 %v1253, 7
        %v1255 = vsub.s32 %v1252, %v1254
        %v1256 = vrot.slane %v994, %v1255
        %v1258 = vunpack.c.l.s4 1983009808
        %v1259 = vunpack.c.0.s8 %v1258
        %v1260 = vlaneseq
        %v1261 = vshrl.u32 %v1260, 7
        %v1262 = vsub.s32 %v1259, %v1261
        %v1263 = vrot.slane %v1249, %v1262
        %v1264 = vcombine.high %v1256, 0
        %v1266 = vunpack.c.l.s4 1934713408
        %v1267 = vunpack.c.0.s8 %v1266
        %v1268 = vlaneseq
        %v1269 = vshrl.u32 %v1268, 7
        %v1270 = vsub.s32 %v1267, %v1269
        %v1271 = vrot.slane %v1256, %v1270
        %v1273 = vunpack.c.l.s4 1934713408
        %v1274 = vunpack.c.0.s8 %v1273
        %v1275 = vlaneseq
        %v1276 = vshrl.u32 %v1275, 7
        %v1277 = vsub.s32 %v1274, %v1276
        %v1278 = vrot.slane %v1264, %v1277
        %v1279 = vcombine.high %v1263, 0
        %v1281 = vunpack.c.l.s4 1934713408
        %v1282 = vunpack.c.0.s8 %v1281
        %v1283 = vlaneseq
        %v1284 = vshrl.u32 %v1283, 7
        %v1285 = vsub.s32 %v1282, %v1284
        %v1286 = vrot.slane %v1263, %v1285
        %v1288 = vunpack.c.l.s4 1934713408
        %v1289 = vunpack.c.0.s8 %v1288
        %v1290 = vlaneseq
        %v1291 = vshrl.u32 %v1290, 7
        %v1292 = vsub.s32 %v1289, %v1291
        %v1293 = vrot.slane %v1279, %v1292
        %v1294 = vcombine.high %v1271, 0
        %v1295 = vcombine.high %v1278, 0
        %v1296 = vcombine.high %v1286, 0
        %v1297 = vcombine.high %v1293, 0
        %v1298 = vcombine.high %v998, %v975
        %v1300 = vunpack.c.l.s4 1983009808
        %v1301 = vunpack.c.0.s8 %v1300
        %v1302 = vlaneseq
        %v1303 = vshrl.u32 %v1302, 7
        %v1304 = vsub.s32 %v1301, %v1303
        %v1305 = vrot.slane %v998, %v1304
        %v1307 = vunpack.c.l.s4 1983009808
        %v1308 = vunpack.c.0.s8 %v1307
        %v1309 = vlaneseq
        %v1310 = vshrl.u32 %v1309, 7
        %v1311 = vsub.s32 %v1308, %v1310
        %v1312 = vrot.slane %v1298, %v1311
        %v1313 = vcombine.high %v1305, 0
        %v1315 = vunpack.c.l.s4 1934713408
        %v1316 = vunpack.c.0.s8 %v1315
        %v1317 = vlaneseq
        %v1318 = vshrl.u32 %v1317, 7
        %v1319 = vsub.s32 %v1316, %v1318
        %v1320 = vrot.slane %v1305, %v1319
        %v1322 = vunpack.c.l.s4 1934713408
        %v1323 = vunpack.c.0.s8 %v1322
        %v1324 = vlaneseq
        %v1325 = vshrl.u32 %v1324, 7
        %v1326 = vsub.s32 %v1323, %v1325
        %v1327 = vrot.slane %v1313, %v1326
        %v1328 = vcombine.high %v1312, 0
        %v1330 = vunpack.c.l.s4 1934713408
        %v1331 = vunpack.c.0.s8 %v1330
        %v1332 = vlaneseq
        %v1333 = vshrl.u32 %v1332, 7
        %v1334 = vsub.s32 %v1331, %v1333
        %v1335 = vrot.slane %v1312, %v1334
        %v1337 = vunpack.c.l.s4 1934713408
        %v1338 = vunpack.c.0.s8 %v1337
        %v1339 = vlaneseq
        %v1340 = vshrl.u32 %v1339, 7
        %v1341 = vsub.s32 %v1338, %v1340
        %v1342 = vrot.slane %v1328, %v1341
        %v1343 = vcombine.high %v1320, 0
        %v1344 = vcombine.high %v1327, 0
        %v1345 = vcombine.high %v1335, 0
        %v1346 = vcombine.high %v1342, 0
        %v1347 = vcombine.high %v1002, %v978
        %v1349 = vunpack.c.l.s4 1983009808
        %v1350 = vunpack.c.0.s8 %v1349
        %v1351 = vlaneseq
        %v1352 = vshrl.u32 %v1351, 7
        %v1353 = vsub.s32 %v1350, %v1352
        %v1354 = vrot.slane %v1002, %v1353
        %v1356 = vunpack.c.l.s4 1983009808
        %v1357 = vunpack.c.0.s8 %v1356
        %v1358 = vlaneseq
        %v1359 = vshrl.u32 %v1358, 7
        %v1360 = vsub.s32 %v1357, %v1359
        %v1361 = vrot.slane %v1347, %v1360
        %v1362 = vcombine.high %v1354, 0
        %v1364 = vunpack.c.l.s4 1934713408
        %v1365 = vunpack.c.0.s8 %v1364
        %v1366 = vlaneseq
        %v1367 = vshrl.u32 %v1366, 7
        %v1368 = vsub.s32 %v1365, %v1367
        %v1369 = vrot.slane %v1354, %v1368
        %v1371 = vunpack.c.l.s4 1934713408
        %v1372 = vunpack.c.0.s8 %v1371
        %v1373 = vlaneseq
        %v1374 = vshrl.u32 %v1373, 7
        %v1375 = vsub.s32 %v1372, %v1374
        %v1376 = vrot.slane %v1362, %v1375
        %v1377 = vcombine.high %v1361, 0
        %v1379 = vunpack.c.l.s4 1934713408
        %v1380 = vunpack.c.0.s8 %v1379
        %v1381 = vlaneseq
        %v1382 = vshrl.u32 %v1381, 7
        %v1383 = vsub.s32 %v1380, %v1382
        %v1384 = vrot.slane %v1361, %v1383
        %v1386 = vunpack.c.l.s4 1934713408
        %v1387 = vunpack.c.0.s8 %v1386
        %v1388 = vlaneseq
        %v1389 = vshrl.u32 %v1388, 7
        %v1390 = vsub.s32 %v1387, %v1389
        %v1391 = vrot.slane %v1377, %v1390
        %v1392 = vcombine.high %v1369, 0
        %v1393 = vcombine.high %v1376, 0
        %v1394 = vcombine.high %v1384, 0
        %v1395 = vcombine.high %v1391, 0
        %v1396 = vcombine.low %v1026, %v1033
        %v1398 = vunpack.c.l.s4 1983009808
        %v1399 = vunpack.c.0.s8 %v1398
        %v1400 = vlaneseq
        %v1401 = vshrl.u32 %v1400, 7
        %v1402 = vsub.s32 %v1399, %v1401
        %v1403 = vrot.slane %v1396, %v1402
        %v1404 = vcombine.low %v1049, %v1050
        %v1406 = vunpack.c.l.s4 1983009808
        %v1407 = vunpack.c.0.s8 %v1406
        %v1408 = vlaneseq
        %v1409 = vshrl.u32 %v1408, 7
        %v1410 = vsub.s32 %v1407, %v1409
        %v1411 = vrot.slane %v1404, %v1410
        %v1412 = vcombine.low %v1041, %v1048
        %v1414 = vunpack.c.l.s4 1983009808
        %v1415 = vunpack.c.0.s8 %v1414
        %v1416 = vlaneseq
        %v1417 = vshrl.u32 %v1416, 7
        %v1418 = vsub.s32 %v1415, %v1417
        %v1419 = vrot.slane %v1412, %v1418
        %v1420 = vcombine.low %v1051, %v1052
        %v1422 = vunpack.c.l.s4 1983009808
        %v1423 = vunpack.c.0.s8 %v1422
        %v1424 = vlaneseq
        %v1425 = vshrl.u32 %v1424, 7
        %v1426 = vsub.s32 %v1423, %v1425
        %v1427 = vrot.slane %v1420, %v1426
        %v1428 = vcombine.low %v1403, %v1411
        %v1430 = vunpack.c.l.s4 1934713408
        %v1431 = vunpack.c.0.s8 %v1430
        %v1432 = vlaneseq
        %v1433 = vshrl.u32 %v1432, 7
        %v1434 = vsub.s32 %v1431, %v1433
        %v1435 = vrot.slane %v1428, %v1434
        %v1436 = vcombine.low %v1419, %v1427
        %v1438 = vunpack.c.l.s4 1934713408
        %v1439 = vunpack.c.0.s8 %v1438
        %v1440 = vlaneseq
        %v1441 = vshrl.u32 %v1440, 7
        %v1442 = vsub.s32 %v1439, %v1441
        %v1443 = vrot.slane %v1436, %v1442
        %v1444 = vcombine.low %v1435, %v1443
        %v1445 = vcombine.low %v1075, %v1082
        %v1447 = vunpack.c.l.s4 1983009808
        %v1448 = vunpack.c.0.s8 %v1447
        %v1449 = vlaneseq
        %v1450 = vshrl.u32 %v1449, 7
        %v1451 = vsub.s32 %v1448, %v1450
        %v1452 = vrot.slane %v1445, %v1451
        %v1453 = vcombine.low %v1098, %v1099
        %v1455 = vunpack.c.l.s4 1983009808
        %v1456 = vunpack.c.0.s8 %v1455
        %v1457 = vlaneseq
        %v1458 = vshrl.u32 %v1457, 7
        %v1459 = vsub.s32 %v1456, %v1458
        %v1460 = vrot.slane %v1453, %v1459
        %v1461 = vcombine.low %v1090, %v1097
        %v1463 = vunpack.c.l.s4 1983009808
        %v1464 = vunpack.c.0.s8 %v1463
        %v1465 = vlaneseq
        %v1466 = vshrl.u32 %v1465, 7
        %v1467 = vsub.s32 %v1464, %v1466
        %v1468 = vrot.slane %v1461, %v1467
        %v1469 = vcombine.low %v1100, %v1101
        %v1471 = vunpack.c.l.s4 1983009808
        %v1472 = vunpack.c.0.s8 %v1471
        %v1473 = vlaneseq
        %v1474 = vshrl.u32 %v1473, 7
        %v1475 = vsub.s32 %v1472, %v1474
        %v1476 = vrot.slane %v1469, %v1475
        %v1477 = vcombine.low %v1452, %v1460
        %v1479 = vunpack.c.l.s4 1934713408
        %v1480 = vunpack.c.0.s8 %v1479
        %v1481 = vlaneseq
        %v1482 = vshrl.u32 %v1481, 7
        %v1483 = vsub.s32 %v1480, %v1482
        %v1484 = vrot.slane %v1477, %v1483
        %v1485 = vcombine.low %v1468, %v1476
        %v1487 = vunpack.c.l.s4 1934713408
        %v1488 = vunpack.c.0.s8 %v1487
        %v1489 = vlaneseq
        %v1490 = vshrl.u32 %v1489, 7
        %v1491 = vsub.s32 %v1488, %v1490
        %v1492 = vrot.slane %v1485, %v1491
        %v1493 = vcombine.low %v1484, %v1492
        %v1494 = vcombine.low %v1124, %v1131
        %v1496 = vunpack.c.l.s4 1983009808
        %v1497 = vunpack.c.0.s8 %v1496
        %v1498 = vlaneseq
        %v1499 = vshrl.u32 %v1498, 7
        %v1500 = vsub.s32 %v1497, %v1499
        %v1501 = vrot.slane %v1494, %v1500
        %v1502 = vcombine.low %v1147, %v1148
        %v1504 = vunpack.c.l.s4 1983009808
        %v1505 = vunpack.c.0.s8 %v1504
        %v1506 = vlaneseq
        %v1507 = vshrl.u32 %v1506, 7
        %v1508 = vsub.s32 %v1505, %v1507
        %v1509 = vrot.slane %v1502, %v1508
        %v1510 = vcombine.low %v1139, %v1146
        %v1512 = vunpack.c.l.s4 1983009808
        %v1513 = vunpack.c.0.s8 %v1512
        %v1514 = vlaneseq
        %v1515 = vshrl.u32 %v1514, 7
        %v1516 = vsub.s32 %v1513, %v1515
        %v1517 = vrot.slane %v1510, %v1516
        %v1518 = vcombine.low %v1149, %v1150
        %v1520 = vunpack.c.l.s4 1983009808
        %v1521 = vunpack.c.0.s8 %v1520
        %v1522 = vlaneseq
        %v1523 = vshrl.u32 %v1522, 7
        %v1524 = vsub.s32 %v1521, %v1523
        %v1525 = vrot.slane %v1518, %v1524
        %v1526 = vcombine.low %v1501, %v1509
        %v1528 = vunpack.c.l.s4 1934713408
        %v1529 = vunpack.c.0.s8 %v1528
        %v1530 = vlaneseq
        %v1531 = vshrl.u32 %v1530, 7
        %v1532 = vsub.s32 %v1529, %v1531
        %v1533 = vrot.slane %v1526, %v1532
        %v1534 = vcombine.low %v1517, %v1525
        %v1536 = vunpack.c.l.s4 1934713408
        %v1537 = vunpack.c.0.s8 %v1536
        %v1538 = vlaneseq
        %v1539 = vshrl.u32 %v1538, 7
        %v1540 = vsub.s32 %v1537, %v1539
        %v1541 = vrot.slane %v1534, %v1540
        %v1542 = vcombine.low %v1533, %v1541
        %v1543 = vcombine.low %v1173, %v1180
        %v1545 = vunpack.c.l.s4 1983009808
        %v1546 = vunpack.c.0.s8 %v1545
        %v1547 = vlaneseq
        %v1548 = vshrl.u32 %v1547, 7
        %v1549 = vsub.s32 %v1546, %v1548
        %v1550 = vrot.slane %v1543, %v1549
        %v1551 = vcombine.low %v1196, %v1197
        %v1553 = vunpack.c.l.s4 1983009808
        %v1554 = vunpack.c.0.s8 %v1553
        %v1555 = vlaneseq
        %v1556 = vshrl.u32 %v1555, 7
        %v1557 = vsub.s32 %v1554, %v1556
        %v1558 = vrot.slane %v1551, %v1557
        %v1559 = vcombine.low %v1188, %v1195
        %v1561 = vunpack.c.l.s4 1983009808
        %v1562 = vunpack.c.0.s8 %v1561
        %v1563 = vlaneseq
        %v1564 = vshrl.u32 %v1563, 7
        %v1565 = vsub.s32 %v1562, %v1564
        %v1566 = vrot.slane %v1559, %v1565
        %v1567 = vcombine.low %v1198, %v1199
        %v1569 = vunpack.c.l.s4 1983009808
        %v1570 = vunpack.c.0.s8 %v1569
        %v1571 = vlaneseq
        %v1572 = vshrl.u32 %v1571, 7
        %v1573 = vsub.s32 %v1570, %v1572
        %v1574 = vrot.slane %v1567, %v1573
        %v1575 = vcombine.low %v1550, %v1558
        %v1577 = vunpack.c.l.s4 1934713408
        %v1578 = vunpack.c.0.s8 %v1577
        %v1579 = vlaneseq
        %v1580 = vshrl.u32 %v1579, 7
        %v1581 = vsub.s32 %v1578, %v1580
        %v1582 = vrot.slane %v1575, %v1581
        %v1583 = vcombine.low %v1566, %v1574
        %v1585 = vunpack.c.l.s4 1934713408
        %v1586 = vunpack.c.0.s8 %v1585
        %v1587 = vlaneseq
        %v1588 = vshrl.u32 %v1587, 7
        %v1589 = vsub.s32 %v1586, %v1588
        %v1590 = vrot.slane %v1583, %v1589
        %v1591 = vcombine.low %v1582, %v1590
        %v1592 = vcombine.low %v1222, %v1229
        %v1594 = vunpack.c.l.s4 1983009808
        %v1595 = vunpack.c.0.s8 %v1594
        %v1596 = vlaneseq
        %v1597 = vshrl.u32 %v1596, 7
        %v1598 = vsub.s32 %v1595, %v1597
        %v1599 = vrot.slane %v1592, %v1598
        %v1600 = vcombine.low %v1245, %v1246
        %v1602 = vunpack.c.l.s4 1983009808
        %v1603 = vunpack.c.0.s8 %v1602
        %v1604 = vlaneseq
        %v1605 = vshrl.u32 %v1604, 7
        %v1606 = vsub.s32 %v1603, %v1605
        %v1607 = vrot.slane %v1600, %v1606
        %v1608 = vcombine.low %v1237, %v1244
        %v1610 = vunpack.c.l.s4 1983009808
        %v1611 = vunpack.c.0.s8 %v1610
        %v1612 = vlaneseq
        %v1613 = vshrl.u32 %v1612, 7
        %v1614 = vsub.s32 %v1611, %v1613
        %v1615 = vrot.slane %v1608, %v1614
        %v1616 = vcombine.low %v1247, %v1248
        %v1618 = vunpack.c.l.s4 1983009808
        %v1619 = vunpack.c.0.s8 %v1618
        %v1620 = vlaneseq
        %v1621 = vshrl.u32 %v1620, 7
        %v1622 = vsub.s32 %v1619, %v1621
        %v1623 = vrot.slane %v1616, %v1622
        %v1624 = vcombine.low %v1599, %v1607
        %v1626 = vunpack.c.l.s4 1934713408
        %v1627 = vunpack.c.0.s8 %v1626
        %v1628 = vlaneseq
        %v1629 = vshrl.u32 %v1628, 7
        %v1630 = vsub.s32 %v1627, %v1629
        %v1631 = vrot.slane %v1624, %v1630
        %v1632 = vcombine.low %v1615, %v1623
        %v1634 = vunpack.c.l.s4 1934713408
        %v1635 = vunpack.c.0.s8 %v1634
        %v1636 = vlaneseq
        %v1637 = vshrl.u32 %v1636, 7
        %v1638 = vsub.s32 %v1635, %v1637
        %v1639 = vrot.slane %v1632, %v1638
        %v1640 = vcombine.low %v1631, %v1639
        %v1641 = vcombine.low %v1271, %v1278
        %v1643 = vunpack.c.l.s4 1983009808
        %v1644 = vunpack.c.0.s8 %v1643
        %v1645 = vlaneseq
        %v1646 = vshrl.u32 %v1645, 7
        %v1647 = vsub.s32 %v1644, %v1646
        %v1648 = vrot.slane %v1641, %v1647
        %v1649 = vcombine.low %v1294, %v1295
        %v1651 = vunpack.c.l.s4 1983009808
        %v1652 = vunpack.c.0.s8 %v1651
        %v1653 = vlaneseq
        %v1654 = vshrl.u32 %v1653, 7
        %v1655 = vsub.s32 %v1652, %v1654
        %v1656 = vrot.slane %v1649, %v1655
        %v1657 = vcombine.low %v1286, %v1293
        %v1659 = vunpack.c.l.s4 1983009808
        %v1660 = vunpack.c.0.s8 %v1659
        %v1661 = vlaneseq
        %v1662 = vshrl.u32 %v1661, 7
        %v1663 = vsub.s32 %v1660, %v1662
        %v1664 = vrot.slane %v1657, %v1663
        %v1665 = vcombine.low %v1296, %v1297
        %v1667 = vunpack.c.l.s4 1983009808
        %v1668 = vunpack.c.0.s8 %v1667
        %v1669 = vlaneseq
        %v1670 = vshrl.u32 %v1669, 7
        %v1671 = vsub.s32 %v1668, %v1670
        %v1672 = vrot.slane %v1665, %v1671
        %v1673 = vcombine.low %v1648, %v1656
        %v1675 = vunpack.c.l.s4 1934713408
        %v1676 = vunpack.c.0.s8 %v1675
        %v1677 = vlaneseq
        %v1678 = vshrl.u32 %v1677, 7
        %v1679 = vsub.s32 %v1676, %v1678
        %v1680 = vrot.slane %v1673, %v1679
        %v1681 = vcombine.low %v1664, %v1672
        %v1683 = vunpack.c.l.s4 1934713408
        %v1684 = vunpack.c.0.s8 %v1683
        %v1685 = vlaneseq
        %v1686 = vshrl.u32 %v1685, 7
        %v1687 = vsub.s32 %v1684, %v1686
        %v1688 = vrot.slane %v1681, %v1687
        %v1689 = vcombine.low %v1680, %v1688
        %v1690 = vcombine.low %v1320, %v1327
        %v1692 = vunpack.c.l.s4 1983009808
        %v1693 = vunpack.c.0.s8 %v1692
        %v1694 = vlaneseq
        %v1695 = vshrl.u32 %v1694, 7
        %v1696 = vsub.s32 %v1693, %v1695
        %v1697 = vrot.slane %v1690, %v1696
        %v1698 = vcombine.low %v1343, %v1344
        %v1700 = vunpack.c.l.s4 1983009808
        %v1701 = vunpack.c.0.s8 %v1700
        %v1702 = vlaneseq
        %v1703 = vshrl.u32 %v1702, 7
        %v1704 = vsub.s32 %v1701, %v1703
        %v1705 = vrot.slane %v1698, %v1704
        %v1706 = vcombine.low %v1335, %v1342
        %v1708 = vunpack.c.l.s4 1983009808
        %v1709 = vunpack.c.0.s8 %v1708
        %v1710 = vlaneseq
        %v1711 = vshrl.u32 %v1710, 7
        %v1712 = vsub.s32 %v1709, %v1711
        %v1713 = vrot.slane %v1706, %v1712
        %v1714 = vcombine.low %v1345, %v1346
        %v1716 = vunpack.c.l.s4 1983009808
        %v1717 = vunpack.c.0.s8 %v1716
        %v1718 = vlaneseq
        %v1719 = vshrl.u32 %v1718, 7
        %v1720 = vsub.s32 %v1717, %v1719
        %v1721 = vrot.slane %v1714, %v1720
        %v1722 = vcombine.low %v1697, %v1705
        %v1724 = vunpack.c.l.s4 1934713408
        %v1725 = vunpack.c.0.s8 %v1724
        %v1726 = vlaneseq
        %v1727 = vshrl.u32 %v1726, 7
        %v1728 = vsub.s32 %v1725, %v1727
        %v1729 = vrot.slane %v1722, %v1728
        %v1730 = vcombine.low %v1713, %v1721
        %v1732 = vunpack.c.l.s4 1934713408
        %v1733 = vunpack.c.0.s8 %v1732
        %v1734 = vlaneseq
        %v1735 = vshrl.u32 %v1734, 7
        %v1736 = vsub.s32 %v1733, %v1735
        %v1737 = vrot.slane %v1730, %v1736
        %v1738 = vcombine.low %v1729, %v1737
        %v1739 = vcombine.low %v1369, %v1376
        %v1741 = vunpack.c.l.s4 1983009808
        %v1742 = vunpack.c.0.s8 %v1741
        %v1743 = vlaneseq
        %v1744 = vshrl.u32 %v1743, 7
        %v1745 = vsub.s32 %v1742, %v1744
        %v1746 = vrot.slane %v1739, %v1745
        %v1747 = vcombine.low %v1392, %v1393
        %v1749 = vunpack.c.l.s4 1983009808
        %v1750 = vunpack.c.0.s8 %v1749
        %v1751 = vlaneseq
        %v1752 = vshrl.u32 %v1751, 7
        %v1753 = vsub.s32 %v1750, %v1752
        %v1754 = vrot.slane %v1747, %v1753
        %v1755 = vcombine.low %v1384, %v1391
        %v1757 = vunpack.c.l.s4 1983009808
        %v1758 = vunpack.c.0.s8 %v1757
        %v1759 = vlaneseq
        %v1760 = vshrl.u32 %v1759, 7
        %v1761 = vsub.s32 %v1758, %v1760
        %v1762 = vrot.slane %v1755, %v1761
        %v1763 = vcombine.low %v1394, %v1395
        %v1765 = vunpack.c.l.s4 1983009808
        %v1766 = vunpack.c.0.s8 %v1765
        %v1767 = vlaneseq
        %v1768 = vshrl.u32 %v1767, 7
        %v1769 = vsub.s32 %v1766, %v1768
        %v1770 = vrot.slane %v1763, %v1769
        %v1771 = vcombine.low %v1746, %v1754
        %v1773 = vunpack.c.l.s4 1934713408
        %v1774 = vunpack.c.0.s8 %v1773
        %v1775 = vlaneseq
        %v1776 = vshrl.u32 %v1775, 7
        %v1777 = vsub.s32 %v1774, %v1776
        %v1778 = vrot.slane %v1771, %v1777
        %v1779 = vcombine.low %v1762, %v1770
        %v1781 = vunpack.c.l.s4 1934713408
        %v1782 = vunpack.c.0.s8 %v1781
        %v1783 = vlaneseq
        %v1784 = vshrl.u32 %v1783, 7
        %v1785 = vsub.s32 %v1782, %v1784
        %v1786 = vrot.slane %v1779, %v1785
        %v1787 = vcombine.low %v1778, %v1786
        %v1790 = vpack.i.b16 %v1493, %v1444
        %v1792 = vshrl.u32 %v1444, 16
        %v1793 = vshrl.u32 %v1493, 16
        %v1794 = vpack.i.b16 %v1793, %v1792
        %v1798 = vpack.i.b16 %v1591, %v1542
        %v1800 = vshrl.u32 %v1542, 16
        %v1801 = vshrl.u32 %v1591, 16
        %v1802 = vpack.i.b16 %v1801, %v1800
        %v1806 = vpack.i.b16 %v1689, %v1640
        %v1808 = vshrl.u32 %v1640, 16
        %v1809 = vshrl.u32 %v1689, 16
        %v1810 = vpack.i.b16 %v1809, %v1808
        %v1814 = vpack.i.b16 %v1787, %v1738
        %v1816 = vshrl.u32 %v1738, 16
        %v1817 = vshrl.u32 %v1787, 16
        %v1818 = vpack.i.b16 %v1817, %v1816
        %v1820 = vpack.c.bf16 %v891, %v888
        %v1821 = vpack.c.bf16 %v899, %v896
        %v1822 = vpack.c.bf16 %v907, %v904
        %v1823 = vpack.c.bf16 %v915, %v912
        %1828 = vrot.lane.b32.xlu0 %v1820, 64
        %v1829 = vpop.permute.xlu0 %1828
        %1830 = vrot.lane.b32.xlu0 %v1821, 64
        %v1831 = vpop.permute.xlu0 %1830
        %1832 = vrot.lane.b32.xlu0 %v1822, 64
        %v1833 = vpop.permute.xlu0 %1832
        %1834 = vrot.lane.b32.xlu0 %v1823, 64
        %v1835 = vpop.permute.xlu0 %1834
        %v1838 = vpack.i.b16 %v1829, %v1820
        %v1840 = vshrl.u32 %v1820, 16
        %v1841 = vshrl.u32 %v1829, 16
        %v1842 = vpack.i.b16 %v1841, %v1840
        %v1846 = vpack.i.b16 %v1831, %v1821
        %v1848 = vshrl.u32 %v1821, 16
        %v1849 = vshrl.u32 %v1831, 16
        %v1850 = vpack.i.b16 %v1849, %v1848
        %v1854 = vpack.i.b16 %v1833, %v1822
        %v1856 = vshrl.u32 %v1822, 16
        %v1857 = vshrl.u32 %v1833, 16
        %v1858 = vpack.i.b16 %v1857, %v1856
        %v1862 = vpack.i.b16 %v1835, %v1823
        %v1864 = vshrl.u32 %v1823, 16
        %v1865 = vshrl.u32 %v1835, 16
        %v1866 = vpack.i.b16 %v1865, %v1864
        %v1868 = vcombine.high %v1838, %v975
        %v1870 = vunpack.c.l.s4 1983009808
        %v1871 = vunpack.c.0.s8 %v1870
        %v1872 = vlaneseq
        %v1873 = vshrl.u32 %v1872, 7
        %v1874 = vsub.s32 %v1871, %v1873
        %v1875 = vrot.slane %v1838, %v1874
        %v1877 = vunpack.c.l.s4 1983009808
        %v1878 = vunpack.c.0.s8 %v1877
        %v1879 = vlaneseq
        %v1880 = vshrl.u32 %v1879, 7
        %v1881 = vsub.s32 %v1878, %v1880
        %v1882 = vrot.slane %v1868, %v1881
        %v1883 = vcombine.high %v1875, 0
        %v1885 = vunpack.c.l.s4 1934713408
        %v1886 = vunpack.c.0.s8 %v1885
        %v1887 = vlaneseq
        %v1888 = vshrl.u32 %v1887, 7
        %v1889 = vsub.s32 %v1886, %v1888
        %v1890 = vrot.slane %v1875, %v1889
        %v1892 = vunpack.c.l.s4 1934713408
        %v1893 = vunpack.c.0.s8 %v1892
        %v1894 = vlaneseq
        %v1895 = vshrl.u32 %v1894, 7
        %v1896 = vsub.s32 %v1893, %v1895
        %v1897 = vrot.slane %v1883, %v1896
        %v1898 = vcombine.high %v1882, 0
        %v1900 = vunpack.c.l.s4 1934713408
        %v1901 = vunpack.c.0.s8 %v1900
        %v1902 = vlaneseq
        %v1903 = vshrl.u32 %v1902, 7
        %v1904 = vsub.s32 %v1901, %v1903
        %v1905 = vrot.slane %v1882, %v1904
        %v1907 = vunpack.c.l.s4 1934713408
        %v1908 = vunpack.c.0.s8 %v1907
        %v1909 = vlaneseq
        %v1910 = vshrl.u32 %v1909, 7
        %v1911 = vsub.s32 %v1908, %v1910
        %v1912 = vrot.slane %v1898, %v1911
        %v1913 = vcombine.high %v1890, 0
        %v1914 = vcombine.high %v1897, 0
        %v1915 = vcombine.high %v1905, 0
        %v1916 = vcombine.high %v1912, 0
        %v1917 = vcombine.high %v1842, %v978
        %v1919 = vunpack.c.l.s4 1983009808
        %v1920 = vunpack.c.0.s8 %v1919
        %v1921 = vlaneseq
        %v1922 = vshrl.u32 %v1921, 7
        %v1923 = vsub.s32 %v1920, %v1922
        %v1924 = vrot.slane %v1842, %v1923
        %v1926 = vunpack.c.l.s4 1983009808
        %v1927 = vunpack.c.0.s8 %v1926
        %v1928 = vlaneseq
        %v1929 = vshrl.u32 %v1928, 7
        %v1930 = vsub.s32 %v1927, %v1929
        %v1931 = vrot.slane %v1917, %v1930
        %v1932 = vcombine.high %v1924, 0
        %v1934 = vunpack.c.l.s4 1934713408
        %v1935 = vunpack.c.0.s8 %v1934
        %v1936 = vlaneseq
        %v1937 = vshrl.u32 %v1936, 7
        %v1938 = vsub.s32 %v1935, %v1937
        %v1939 = vrot.slane %v1924, %v1938
        %v1941 = vunpack.c.l.s4 1934713408
        %v1942 = vunpack.c.0.s8 %v1941
        %v1943 = vlaneseq
        %v1944 = vshrl.u32 %v1943, 7
        %v1945 = vsub.s32 %v1942, %v1944
        %v1946 = vrot.slane %v1932, %v1945
        %v1947 = vcombine.high %v1931, 0
        %v1949 = vunpack.c.l.s4 1934713408
        %v1950 = vunpack.c.0.s8 %v1949
        %v1951 = vlaneseq
        %v1952 = vshrl.u32 %v1951, 7
        %v1953 = vsub.s32 %v1950, %v1952
        %v1954 = vrot.slane %v1931, %v1953
        %v1956 = vunpack.c.l.s4 1934713408
        %v1957 = vunpack.c.0.s8 %v1956
        %v1958 = vlaneseq
        %v1959 = vshrl.u32 %v1958, 7
        %v1960 = vsub.s32 %v1957, %v1959
        %v1961 = vrot.slane %v1947, %v1960
        %v1962 = vcombine.high %v1939, 0
        %v1963 = vcombine.high %v1946, 0
        %v1964 = vcombine.high %v1954, 0
        %v1965 = vcombine.high %v1961, 0
        %v1966 = vcombine.high %v1846, %v975
        %v1968 = vunpack.c.l.s4 1983009808
        %v1969 = vunpack.c.0.s8 %v1968
        %v1970 = vlaneseq
        %v1971 = vshrl.u32 %v1970, 7
        %v1972 = vsub.s32 %v1969, %v1971
        %v1973 = vrot.slane %v1846, %v1972
        %v1975 = vunpack.c.l.s4 1983009808
        %v1976 = vunpack.c.0.s8 %v1975
        %v1977 = vlaneseq
        %v1978 = vshrl.u32 %v1977, 7
        %v1979 = vsub.s32 %v1976, %v1978
        %v1980 = vrot.slane %v1966, %v1979
        %v1981 = vcombine.high %v1973, 0
        %v1983 = vunpack.c.l.s4 1934713408
        %v1984 = vunpack.c.0.s8 %v1983
        %v1985 = vlaneseq
        %v1986 = vshrl.u32 %v1985, 7
        %v1987 = vsub.s32 %v1984, %v1986
        %v1988 = vrot.slane %v1973, %v1987
        %v1990 = vunpack.c.l.s4 1934713408
        %v1991 = vunpack.c.0.s8 %v1990
        %v1992 = vlaneseq
        %v1993 = vshrl.u32 %v1992, 7
        %v1994 = vsub.s32 %v1991, %v1993
        %v1995 = vrot.slane %v1981, %v1994
        %v1996 = vcombine.high %v1980, 0
        %v1998 = vunpack.c.l.s4 1934713408
        %v1999 = vunpack.c.0.s8 %v1998
        %v2000 = vlaneseq
        %v2001 = vshrl.u32 %v2000, 7
        %v2002 = vsub.s32 %v1999, %v2001
        %v2003 = vrot.slane %v1980, %v2002
        %v2005 = vunpack.c.l.s4 1934713408
        %v2006 = vunpack.c.0.s8 %v2005
        %v2007 = vlaneseq
        %v2008 = vshrl.u32 %v2007, 7
        %v2009 = vsub.s32 %v2006, %v2008
        %v2010 = vrot.slane %v1996, %v2009
        %v2011 = vcombine.high %v1988, 0
        %v2012 = vcombine.high %v1995, 0
        %v2013 = vcombine.high %v2003, 0
        %v2014 = vcombine.high %v2010, 0
        %v2015 = vcombine.high %v1850, %v978
        %v2017 = vunpack.c.l.s4 1983009808
        %v2018 = vunpack.c.0.s8 %v2017
        %v2019 = vlaneseq
        %v2020 = vshrl.u32 %v2019, 7
        %v2021 = vsub.s32 %v2018, %v2020
        %v2022 = vrot.slane %v1850, %v2021
        %v2024 = vunpack.c.l.s4 1983009808
        %v2025 = vunpack.c.0.s8 %v2024
        %v2026 = vlaneseq
        %v2027 = vshrl.u32 %v2026, 7
        %v2028 = vsub.s32 %v2025, %v2027
        %v2029 = vrot.slane %v2015, %v2028
        %v2030 = vcombine.high %v2022, 0
        %v2032 = vunpack.c.l.s4 1934713408
        %v2033 = vunpack.c.0.s8 %v2032
        %v2034 = vlaneseq
        %v2035 = vshrl.u32 %v2034, 7
        %v2036 = vsub.s32 %v2033, %v2035
        %v2037 = vrot.slane %v2022, %v2036
        %v2039 = vunpack.c.l.s4 1934713408
        %v2040 = vunpack.c.0.s8 %v2039
        %v2041 = vlaneseq
        %v2042 = vshrl.u32 %v2041, 7
        %v2043 = vsub.s32 %v2040, %v2042
        %v2044 = vrot.slane %v2030, %v2043
        %v2045 = vcombine.high %v2029, 0
        %v2047 = vunpack.c.l.s4 1934713408
        %v2048 = vunpack.c.0.s8 %v2047
        %v2049 = vlaneseq
        %v2050 = vshrl.u32 %v2049, 7
        %v2051 = vsub.s32 %v2048, %v2050
        %v2052 = vrot.slane %v2029, %v2051
        %v2054 = vunpack.c.l.s4 1934713408
        %v2055 = vunpack.c.0.s8 %v2054
        %v2056 = vlaneseq
        %v2057 = vshrl.u32 %v2056, 7
        %v2058 = vsub.s32 %v2055, %v2057
        %v2059 = vrot.slane %v2045, %v2058
        %v2060 = vcombine.high %v2037, 0
        %v2061 = vcombine.high %v2044, 0
        %v2062 = vcombine.high %v2052, 0
        %v2063 = vcombine.high %v2059, 0
        %v2064 = vcombine.high %v1854, %v975
        %v2066 = vunpack.c.l.s4 1983009808
        %v2067 = vunpack.c.0.s8 %v2066
        %v2068 = vlaneseq
        %v2069 = vshrl.u32 %v2068, 7
        %v2070 = vsub.s32 %v2067, %v2069
        %v2071 = vrot.slane %v1854, %v2070
        %v2073 = vunpack.c.l.s4 1983009808
        %v2074 = vunpack.c.0.s8 %v2073
        %v2075 = vlaneseq
        %v2076 = vshrl.u32 %v2075, 7
        %v2077 = vsub.s32 %v2074, %v2076
        %v2078 = vrot.slane %v2064, %v2077
        %v2079 = vcombine.high %v2071, 0
        %v2081 = vunpack.c.l.s4 1934713408
        %v2082 = vunpack.c.0.s8 %v2081
        %v2083 = vlaneseq
        %v2084 = vshrl.u32 %v2083, 7
        %v2085 = vsub.s32 %v2082, %v2084
        %v2086 = vrot.slane %v2071, %v2085
        %v2088 = vunpack.c.l.s4 1934713408
        %v2089 = vunpack.c.0.s8 %v2088
        %v2090 = vlaneseq
        %v2091 = vshrl.u32 %v2090, 7
        %v2092 = vsub.s32 %v2089, %v2091
        %v2093 = vrot.slane %v2079, %v2092
        %v2094 = vcombine.high %v2078, 0
        %v2096 = vunpack.c.l.s4 1934713408
        %v2097 = vunpack.c.0.s8 %v2096
        %v2098 = vlaneseq
        %v2099 = vshrl.u32 %v2098, 7
        %v2100 = vsub.s32 %v2097, %v2099
        %v2101 = vrot.slane %v2078, %v2100
        %v2103 = vunpack.c.l.s4 1934713408
        %v2104 = vunpack.c.0.s8 %v2103
        %v2105 = vlaneseq
        %v2106 = vshrl.u32 %v2105, 7
        %v2107 = vsub.s32 %v2104, %v2106
        %v2108 = vrot.slane %v2094, %v2107
        %v2109 = vcombine.high %v2086, 0
        %v2110 = vcombine.high %v2093, 0
        %v2111 = vcombine.high %v2101, 0
        %v2112 = vcombine.high %v2108, 0
        %v2113 = vcombine.high %v1858, %v978
        %v2115 = vunpack.c.l.s4 1983009808
        %v2116 = vunpack.c.0.s8 %v2115
        %v2117 = vlaneseq
        %v2118 = vshrl.u32 %v2117, 7
        %v2119 = vsub.s32 %v2116, %v2118
        %v2120 = vrot.slane %v1858, %v2119
        %v2122 = vunpack.c.l.s4 1983009808
        %v2123 = vunpack.c.0.s8 %v2122
        %v2124 = vlaneseq
        %v2125 = vshrl.u32 %v2124, 7
        %v2126 = vsub.s32 %v2123, %v2125
        %v2127 = vrot.slane %v2113, %v2126
        %v2128 = vcombine.high %v2120, 0
        %v2130 = vunpack.c.l.s4 1934713408
        %v2131 = vunpack.c.0.s8 %v2130
        %v2132 = vlaneseq
        %v2133 = vshrl.u32 %v2132, 7
        %v2134 = vsub.s32 %v2131, %v2133
        %v2135 = vrot.slane %v2120, %v2134
        %v2137 = vunpack.c.l.s4 1934713408
        %v2138 = vunpack.c.0.s8 %v2137
        %v2139 = vlaneseq
        %v2140 = vshrl.u32 %v2139, 7
        %v2141 = vsub.s32 %v2138, %v2140
        %v2142 = vrot.slane %v2128, %v2141
        %v2143 = vcombine.high %v2127, 0
        %v2145 = vunpack.c.l.s4 1934713408
        %v2146 = vunpack.c.0.s8 %v2145
        %v2147 = vlaneseq
        %v2148 = vshrl.u32 %v2147, 7
        %v2149 = vsub.s32 %v2146, %v2148
        %v2150 = vrot.slane %v2127, %v2149
        %v2152 = vunpack.c.l.s4 1934713408
        %v2153 = vunpack.c.0.s8 %v2152
        %v2154 = vlaneseq
        %v2155 = vshrl.u32 %v2154, 7
        %v2156 = vsub.s32 %v2153, %v2155
        %v2157 = vrot.slane %v2143, %v2156
        %v2158 = vcombine.high %v2135, 0
        %v2159 = vcombine.high %v2142, 0
        %v2160 = vcombine.high %v2150, 0
        %v2161 = vcombine.high %v2157, 0
        %v2162 = vcombine.high %v1862, %v975
        %v2164 = vunpack.c.l.s4 1983009808
        %v2165 = vunpack.c.0.s8 %v2164
        %v2166 = vlaneseq
        %v2167 = vshrl.u32 %v2166, 7
        %v2168 = vsub.s32 %v2165, %v2167
        %v2169 = vrot.slane %v1862, %v2168
        %v2171 = vunpack.c.l.s4 1983009808
        %v2172 = vunpack.c.0.s8 %v2171
        %v2173 = vlaneseq
        %v2174 = vshrl.u32 %v2173, 7
        %v2175 = vsub.s32 %v2172, %v2174
        %v2176 = vrot.slane %v2162, %v2175
        %v2177 = vcombine.high %v2169, 0
        %v2179 = vunpack.c.l.s4 1934713408
        %v2180 = vunpack.c.0.s8 %v2179
        %v2181 = vlaneseq
        %v2182 = vshrl.u32 %v2181, 7
        %v2183 = vsub.s32 %v2180, %v2182
        %v2184 = vrot.slane %v2169, %v2183
        %v2186 = vunpack.c.l.s4 1934713408
        %v2187 = vunpack.c.0.s8 %v2186
        %v2188 = vlaneseq
        %v2189 = vshrl.u32 %v2188, 7
        %v2190 = vsub.s32 %v2187, %v2189
        %v2191 = vrot.slane %v2177, %v2190
        %v2192 = vcombine.high %v2176, 0
        %v2194 = vunpack.c.l.s4 1934713408
        %v2195 = vunpack.c.0.s8 %v2194
        %v2196 = vlaneseq
        %v2197 = vshrl.u32 %v2196, 7
        %v2198 = vsub.s32 %v2195, %v2197
        %v2199 = vrot.slane %v2176, %v2198
        %v2201 = vunpack.c.l.s4 1934713408
        %v2202 = vunpack.c.0.s8 %v2201
        %v2203 = vlaneseq
        %v2204 = vshrl.u32 %v2203, 7
        %v2205 = vsub.s32 %v2202, %v2204
        %v2206 = vrot.slane %v2192, %v2205
        %v2207 = vcombine.high %v2184, 0
        %v2208 = vcombine.high %v2191, 0
        %v2209 = vcombine.high %v2199, 0
        %v2210 = vcombine.high %v2206, 0
        %v2211 = vcombine.high %v1866, %v978
        %v2213 = vunpack.c.l.s4 1983009808
        %v2214 = vunpack.c.0.s8 %v2213
        %v2215 = vlaneseq
        %v2216 = vshrl.u32 %v2215, 7
        %v2217 = vsub.s32 %v2214, %v2216
        %v2218 = vrot.slane %v1866, %v2217
        %v2220 = vunpack.c.l.s4 1983009808
        %v2221 = vunpack.c.0.s8 %v2220
        %v2222 = vlaneseq
        %v2223 = vshrl.u32 %v2222, 7
        %v2224 = vsub.s32 %v2221, %v2223
        %v2225 = vrot.slane %v2211, %v2224
        %v2226 = vcombine.high %v2218, 0
        %v2228 = vunpack.c.l.s4 1934713408
        %v2229 = vunpack.c.0.s8 %v2228
        %v2230 = vlaneseq
        %v2231 = vshrl.u32 %v2230, 7
        %v2232 = vsub.s32 %v2229, %v2231
        %v2233 = vrot.slane %v2218, %v2232
        %v2235 = vunpack.c.l.s4 1934713408
        %v2236 = vunpack.c.0.s8 %v2235
        %v2237 = vlaneseq
        %v2238 = vshrl.u32 %v2237, 7
        %v2239 = vsub.s32 %v2236, %v2238
        %v2240 = vrot.slane %v2226, %v2239
        %v2241 = vcombine.high %v2225, 0
        %v2243 = vunpack.c.l.s4 1934713408
        %v2244 = vunpack.c.0.s8 %v2243
        %v2245 = vlaneseq
        %v2246 = vshrl.u32 %v2245, 7
        %v2247 = vsub.s32 %v2244, %v2246
        %v2248 = vrot.slane %v2225, %v2247
        %v2250 = vunpack.c.l.s4 1934713408
        %v2251 = vunpack.c.0.s8 %v2250
        %v2252 = vlaneseq
        %v2253 = vshrl.u32 %v2252, 7
        %v2254 = vsub.s32 %v2251, %v2253
        %v2255 = vrot.slane %v2241, %v2254
        %v2256 = vcombine.high %v2233, 0
        %v2257 = vcombine.high %v2240, 0
        %v2258 = vcombine.high %v2248, 0
        %v2259 = vcombine.high %v2255, 0
        %v2260 = vcombine.low %v1890, %v1897
        %v2262 = vunpack.c.l.s4 1983009808
        %v2263 = vunpack.c.0.s8 %v2262
        %v2264 = vlaneseq
        %v2265 = vshrl.u32 %v2264, 7
        %v2266 = vsub.s32 %v2263, %v2265
        %v2267 = vrot.slane %v2260, %v2266
        %v2268 = vcombine.low %v1913, %v1914
        %v2270 = vunpack.c.l.s4 1983009808
        %v2271 = vunpack.c.0.s8 %v2270
        %v2272 = vlaneseq
        %v2273 = vshrl.u32 %v2272, 7
        %v2274 = vsub.s32 %v2271, %v2273
        %v2275 = vrot.slane %v2268, %v2274
        %v2276 = vcombine.low %v1905, %v1912
        %v2278 = vunpack.c.l.s4 1983009808
        %v2279 = vunpack.c.0.s8 %v2278
        %v2280 = vlaneseq
        %v2281 = vshrl.u32 %v2280, 7
        %v2282 = vsub.s32 %v2279, %v2281
        %v2283 = vrot.slane %v2276, %v2282
        %v2284 = vcombine.low %v1915, %v1916
        %v2286 = vunpack.c.l.s4 1983009808
        %v2287 = vunpack.c.0.s8 %v2286
        %v2288 = vlaneseq
        %v2289 = vshrl.u32 %v2288, 7
        %v2290 = vsub.s32 %v2287, %v2289
        %v2291 = vrot.slane %v2284, %v2290
        %v2292 = vcombine.low %v2267, %v2275
        %v2294 = vunpack.c.l.s4 1934713408
        %v2295 = vunpack.c.0.s8 %v2294
        %v2296 = vlaneseq
        %v2297 = vshrl.u32 %v2296, 7
        %v2298 = vsub.s32 %v2295, %v2297
        %v2299 = vrot.slane %v2292, %v2298
        %v2300 = vcombine.low %v2283, %v2291
        %v2302 = vunpack.c.l.s4 1934713408
        %v2303 = vunpack.c.0.s8 %v2302
        %v2304 = vlaneseq
        %v2305 = vshrl.u32 %v2304, 7
        %v2306 = vsub.s32 %v2303, %v2305
        %v2307 = vrot.slane %v2300, %v2306
        %v2308 = vcombine.low %v2299, %v2307
        %v2309 = vcombine.low %v1939, %v1946
        %v2311 = vunpack.c.l.s4 1983009808
        %v2312 = vunpack.c.0.s8 %v2311
        %v2313 = vlaneseq
        %v2314 = vshrl.u32 %v2313, 7
        %v2315 = vsub.s32 %v2312, %v2314
        %v2316 = vrot.slane %v2309, %v2315
        %v2317 = vcombine.low %v1962, %v1963
        %v2319 = vunpack.c.l.s4 1983009808
        %v2320 = vunpack.c.0.s8 %v2319
        %v2321 = vlaneseq
        %v2322 = vshrl.u32 %v2321, 7
        %v2323 = vsub.s32 %v2320, %v2322
        %v2324 = vrot.slane %v2317, %v2323
        %v2325 = vcombine.low %v1954, %v1961
        %v2327 = vunpack.c.l.s4 1983009808
        %v2328 = vunpack.c.0.s8 %v2327
        %v2329 = vlaneseq
        %v2330 = vshrl.u32 %v2329, 7
        %v2331 = vsub.s32 %v2328, %v2330
        %v2332 = vrot.slane %v2325, %v2331
        %v2333 = vcombine.low %v1964, %v1965
        %v2335 = vunpack.c.l.s4 1983009808
        %v2336 = vunpack.c.0.s8 %v2335
        %v2337 = vlaneseq
        %v2338 = vshrl.u32 %v2337, 7
        %v2339 = vsub.s32 %v2336, %v2338
        %v2340 = vrot.slane %v2333, %v2339
        %v2341 = vcombine.low %v2316, %v2324
        %v2343 = vunpack.c.l.s4 1934713408
        %v2344 = vunpack.c.0.s8 %v2343
        %v2345 = vlaneseq
        %v2346 = vshrl.u32 %v2345, 7
        %v2347 = vsub.s32 %v2344, %v2346
        %v2348 = vrot.slane %v2341, %v2347
        %v2349 = vcombine.low %v2332, %v2340
        %v2351 = vunpack.c.l.s4 1934713408
        %v2352 = vunpack.c.0.s8 %v2351
        %v2353 = vlaneseq
        %v2354 = vshrl.u32 %v2353, 7
        %v2355 = vsub.s32 %v2352, %v2354
        %v2356 = vrot.slane %v2349, %v2355
        %v2357 = vcombine.low %v2348, %v2356
        %v2358 = vcombine.low %v1988, %v1995
        %v2360 = vunpack.c.l.s4 1983009808
        %v2361 = vunpack.c.0.s8 %v2360
        %v2362 = vlaneseq
        %v2363 = vshrl.u32 %v2362, 7
        %v2364 = vsub.s32 %v2361, %v2363
        %v2365 = vrot.slane %v2358, %v2364
        %v2366 = vcombine.low %v2011, %v2012
        %v2368 = vunpack.c.l.s4 1983009808
        %v2369 = vunpack.c.0.s8 %v2368
        %v2370 = vlaneseq
        %v2371 = vshrl.u32 %v2370, 7
        %v2372 = vsub.s32 %v2369, %v2371
        %v2373 = vrot.slane %v2366, %v2372
        %v2374 = vcombine.low %v2003, %v2010
        %v2376 = vunpack.c.l.s4 1983009808
        %v2377 = vunpack.c.0.s8 %v2376
        %v2378 = vlaneseq
        %v2379 = vshrl.u32 %v2378, 7
        %v2380 = vsub.s32 %v2377, %v2379
        %v2381 = vrot.slane %v2374, %v2380
        %v2382 = vcombine.low %v2013, %v2014
        %v2384 = vunpack.c.l.s4 1983009808
        %v2385 = vunpack.c.0.s8 %v2384
        %v2386 = vlaneseq
        %v2387 = vshrl.u32 %v2386, 7
        %v2388 = vsub.s32 %v2385, %v2387
        %v2389 = vrot.slane %v2382, %v2388
        %v2390 = vcombine.low %v2365, %v2373
        %v2392 = vunpack.c.l.s4 1934713408
        %v2393 = vunpack.c.0.s8 %v2392
        %v2394 = vlaneseq
        %v2395 = vshrl.u32 %v2394, 7
        %v2396 = vsub.s32 %v2393, %v2395
        %v2397 = vrot.slane %v2390, %v2396
        %v2398 = vcombine.low %v2381, %v2389
        %v2400 = vunpack.c.l.s4 1934713408
        %v2401 = vunpack.c.0.s8 %v2400
        %v2402 = vlaneseq
        %v2403 = vshrl.u32 %v2402, 7
        %v2404 = vsub.s32 %v2401, %v2403
        %v2405 = vrot.slane %v2398, %v2404
        %v2406 = vcombine.low %v2397, %v2405
        %v2407 = vcombine.low %v2037, %v2044
        %v2409 = vunpack.c.l.s4 1983009808
        %v2410 = vunpack.c.0.s8 %v2409
        %v2411 = vlaneseq
        %v2412 = vshrl.u32 %v2411, 7
        %v2413 = vsub.s32 %v2410, %v2412
        %v2414 = vrot.slane %v2407, %v2413
        %v2415 = vcombine.low %v2060, %v2061
        %v2417 = vunpack.c.l.s4 1983009808
        %v2418 = vunpack.c.0.s8 %v2417
        %v2419 = vlaneseq
        %v2420 = vshrl.u32 %v2419, 7
        %v2421 = vsub.s32 %v2418, %v2420
        %v2422 = vrot.slane %v2415, %v2421
        %v2423 = vcombine.low %v2052, %v2059
        %v2425 = vunpack.c.l.s4 1983009808
        %v2426 = vunpack.c.0.s8 %v2425
        %v2427 = vlaneseq
        %v2428 = vshrl.u32 %v2427, 7
        %v2429 = vsub.s32 %v2426, %v2428
        %v2430 = vrot.slane %v2423, %v2429
        %v2431 = vcombine.low %v2062, %v2063
        %v2433 = vunpack.c.l.s4 1983009808
        %v2434 = vunpack.c.0.s8 %v2433
        %v2435 = vlaneseq
        %v2436 = vshrl.u32 %v2435, 7
        %v2437 = vsub.s32 %v2434, %v2436
        %v2438 = vrot.slane %v2431, %v2437
        %v2439 = vcombine.low %v2414, %v2422
        %v2441 = vunpack.c.l.s4 1934713408
        %v2442 = vunpack.c.0.s8 %v2441
        %v2443 = vlaneseq
        %v2444 = vshrl.u32 %v2443, 7
        %v2445 = vsub.s32 %v2442, %v2444
        %v2446 = vrot.slane %v2439, %v2445
        %v2447 = vcombine.low %v2430, %v2438
        %v2449 = vunpack.c.l.s4 1934713408
        %v2450 = vunpack.c.0.s8 %v2449
        %v2451 = vlaneseq
        %v2452 = vshrl.u32 %v2451, 7
        %v2453 = vsub.s32 %v2450, %v2452
        %v2454 = vrot.slane %v2447, %v2453
        %v2455 = vcombine.low %v2446, %v2454
        %v2456 = vcombine.low %v2086, %v2093
        %v2458 = vunpack.c.l.s4 1983009808
        %v2459 = vunpack.c.0.s8 %v2458
        %v2460 = vlaneseq
        %v2461 = vshrl.u32 %v2460, 7
        %v2462 = vsub.s32 %v2459, %v2461
        %v2463 = vrot.slane %v2456, %v2462
        %v2464 = vcombine.low %v2109, %v2110
        %v2466 = vunpack.c.l.s4 1983009808
        %v2467 = vunpack.c.0.s8 %v2466
        %v2468 = vlaneseq
        %v2469 = vshrl.u32 %v2468, 7
        %v2470 = vsub.s32 %v2467, %v2469
        %v2471 = vrot.slane %v2464, %v2470
        %v2472 = vcombine.low %v2101, %v2108
        %v2474 = vunpack.c.l.s4 1983009808
        %v2475 = vunpack.c.0.s8 %v2474
        %v2476 = vlaneseq
        %v2477 = vshrl.u32 %v2476, 7
        %v2478 = vsub.s32 %v2475, %v2477
        %v2479 = vrot.slane %v2472, %v2478
        %v2480 = vcombine.low %v2111, %v2112
        %v2482 = vunpack.c.l.s4 1983009808
        %v2483 = vunpack.c.0.s8 %v2482
        %v2484 = vlaneseq
        %v2485 = vshrl.u32 %v2484, 7
        %v2486 = vsub.s32 %v2483, %v2485
        %v2487 = vrot.slane %v2480, %v2486
        %v2488 = vcombine.low %v2463, %v2471
        %v2490 = vunpack.c.l.s4 1934713408
        %v2491 = vunpack.c.0.s8 %v2490
        %v2492 = vlaneseq
        %v2493 = vshrl.u32 %v2492, 7
        %v2494 = vsub.s32 %v2491, %v2493
        %v2495 = vrot.slane %v2488, %v2494
        %v2496 = vcombine.low %v2479, %v2487
        %v2498 = vunpack.c.l.s4 1934713408
        %v2499 = vunpack.c.0.s8 %v2498
        %v2500 = vlaneseq
        %v2501 = vshrl.u32 %v2500, 7
        %v2502 = vsub.s32 %v2499, %v2501
        %v2503 = vrot.slane %v2496, %v2502
        %v2504 = vcombine.low %v2495, %v2503
        %v2505 = vcombine.low %v2135, %v2142
        %v2507 = vunpack.c.l.s4 1983009808
        %v2508 = vunpack.c.0.s8 %v2507
        %v2509 = vlaneseq
        %v2510 = vshrl.u32 %v2509, 7
        %v2511 = vsub.s32 %v2508, %v2510
        %v2512 = vrot.slane %v2505, %v2511
        %v2513 = vcombine.low %v2158, %v2159
        %v2515 = vunpack.c.l.s4 1983009808
        %v2516 = vunpack.c.0.s8 %v2515
        %v2517 = vlaneseq
        %v2518 = vshrl.u32 %v2517, 7
        %v2519 = vsub.s32 %v2516, %v2518
        %v2520 = vrot.slane %v2513, %v2519
        %v2521 = vcombine.low %v2150, %v2157
        %v2523 = vunpack.c.l.s4 1983009808
        %v2524 = vunpack.c.0.s8 %v2523
        %v2525 = vlaneseq
        %v2526 = vshrl.u32 %v2525, 7
        %v2527 = vsub.s32 %v2524, %v2526
        %v2528 = vrot.slane %v2521, %v2527
        %v2529 = vcombine.low %v2160, %v2161
        %v2531 = vunpack.c.l.s4 1983009808
        %v2532 = vunpack.c.0.s8 %v2531
        %v2533 = vlaneseq
        %v2534 = vshrl.u32 %v2533, 7
        %v2535 = vsub.s32 %v2532, %v2534
        %v2536 = vrot.slane %v2529, %v2535
        %v2537 = vcombine.low %v2512, %v2520
        %v2539 = vunpack.c.l.s4 1934713408
        %v2540 = vunpack.c.0.s8 %v2539
        %v2541 = vlaneseq
        %v2542 = vshrl.u32 %v2541, 7
        %v2543 = vsub.s32 %v2540, %v2542
        %v2544 = vrot.slane %v2537, %v2543
        %v2545 = vcombine.low %v2528, %v2536
        %v2547 = vunpack.c.l.s4 1934713408
        %v2548 = vunpack.c.0.s8 %v2547
        %v2549 = vlaneseq
        %v2550 = vshrl.u32 %v2549, 7
        %v2551 = vsub.s32 %v2548, %v2550
        %v2552 = vrot.slane %v2545, %v2551
        %v2553 = vcombine.low %v2544, %v2552
        %v2554 = vcombine.low %v2184, %v2191
        %v2556 = vunpack.c.l.s4 1983009808
        %v2557 = vunpack.c.0.s8 %v2556
        %v2558 = vlaneseq
        %v2559 = vshrl.u32 %v2558, 7
        %v2560 = vsub.s32 %v2557, %v2559
        %v2561 = vrot.slane %v2554, %v2560
        %v2562 = vcombine.low %v2207, %v2208
        %v2564 = vunpack.c.l.s4 1983009808
        %v2565 = vunpack.c.0.s8 %v2564
        %v2566 = vlaneseq
        %v2567 = vshrl.u32 %v2566, 7
        %v2568 = vsub.s32 %v2565, %v2567
        %v2569 = vrot.slane %v2562, %v2568
        %v2570 = vcombine.low %v2199, %v2206
        %v2572 = vunpack.c.l.s4 1983009808
        %v2573 = vunpack.c.0.s8 %v2572
        %v2574 = vlaneseq
        %v2575 = vshrl.u32 %v2574, 7
        %v2576 = vsub.s32 %v2573, %v2575
        %v2577 = vrot.slane %v2570, %v2576
        %v2578 = vcombine.low %v2209, %v2210
        %v2580 = vunpack.c.l.s4 1983009808
        %v2581 = vunpack.c.0.s8 %v2580
        %v2582 = vlaneseq
        %v2583 = vshrl.u32 %v2582, 7
        %v2584 = vsub.s32 %v2581, %v2583
        %v2585 = vrot.slane %v2578, %v2584
        %v2586 = vcombine.low %v2561, %v2569
        %v2588 = vunpack.c.l.s4 1934713408
        %v2589 = vunpack.c.0.s8 %v2588
        %v2590 = vlaneseq
        %v2591 = vshrl.u32 %v2590, 7
        %v2592 = vsub.s32 %v2589, %v2591
        %v2593 = vrot.slane %v2586, %v2592
        %v2594 = vcombine.low %v2577, %v2585
        %v2596 = vunpack.c.l.s4 1934713408
        %v2597 = vunpack.c.0.s8 %v2596
        %v2598 = vlaneseq
        %v2599 = vshrl.u32 %v2598, 7
        %v2600 = vsub.s32 %v2597, %v2599
        %v2601 = vrot.slane %v2594, %v2600
        %v2602 = vcombine.low %v2593, %v2601
        %v2603 = vcombine.low %v2233, %v2240
        %v2605 = vunpack.c.l.s4 1983009808
        %v2606 = vunpack.c.0.s8 %v2605
        %v2607 = vlaneseq
        %v2608 = vshrl.u32 %v2607, 7
        %v2609 = vsub.s32 %v2606, %v2608
        %v2610 = vrot.slane %v2603, %v2609
        %v2611 = vcombine.low %v2256, %v2257
        %v2613 = vunpack.c.l.s4 1983009808
        %v2614 = vunpack.c.0.s8 %v2613
        %v2615 = vlaneseq
        %v2616 = vshrl.u32 %v2615, 7
        %v2617 = vsub.s32 %v2614, %v2616
        %v2618 = vrot.slane %v2611, %v2617
        %v2619 = vcombine.low %v2248, %v2255
        %v2621 = vunpack.c.l.s4 1983009808
        %v2622 = vunpack.c.0.s8 %v2621
        %v2623 = vlaneseq
        %v2624 = vshrl.u32 %v2623, 7
        %v2625 = vsub.s32 %v2622, %v2624
        %v2626 = vrot.slane %v2619, %v2625
        %v2627 = vcombine.low %v2258, %v2259
        %v2629 = vunpack.c.l.s4 1983009808
        %v2630 = vunpack.c.0.s8 %v2629
        %v2631 = vlaneseq
        %v2632 = vshrl.u32 %v2631, 7
        %v2633 = vsub.s32 %v2630, %v2632
        %v2634 = vrot.slane %v2627, %v2633
        %v2635 = vcombine.low %v2610, %v2618
        %v2637 = vunpack.c.l.s4 1934713408
        %v2638 = vunpack.c.0.s8 %v2637
        %v2639 = vlaneseq
        %v2640 = vshrl.u32 %v2639, 7
        %v2641 = vsub.s32 %v2638, %v2640
        %v2642 = vrot.slane %v2635, %v2641
        %v2643 = vcombine.low %v2626, %v2634
        %v2645 = vunpack.c.l.s4 1934713408
        %v2646 = vunpack.c.0.s8 %v2645
        %v2647 = vlaneseq
        %v2648 = vshrl.u32 %v2647, 7
        %v2649 = vsub.s32 %v2646, %v2648
        %v2650 = vrot.slane %v2643, %v2649
        %v2651 = vcombine.low %v2642, %v2650
        %v2654 = vpack.i.b16 %v2357, %v2308
        %v2656 = vshrl.u32 %v2308, 16
        %v2657 = vshrl.u32 %v2357, 16
        %v2658 = vpack.i.b16 %v2657, %v2656
        %v2662 = vpack.i.b16 %v2455, %v2406
        %v2664 = vshrl.u32 %v2406, 16
        %v2665 = vshrl.u32 %v2455, 16
        %v2666 = vpack.i.b16 %v2665, %v2664
        %v2670 = vpack.i.b16 %v2553, %v2504
        %v2672 = vshrl.u32 %v2504, 16
        %v2673 = vshrl.u32 %v2553, 16
        %v2674 = vpack.i.b16 %v2673, %v2672
        %v2678 = vpack.i.b16 %v2651, %v2602
        %v2680 = vshrl.u32 %v2602, 16
        %v2681 = vshrl.u32 %v2651, 16
        %v2682 = vpack.i.b16 %v2681, %v2680
        %v2684 = vpack.c.bf16 %v923, %v920
        %v2685 = vpack.c.bf16 %v931, %v928
        %v2686 = vpack.c.bf16 %v939, %v936
        %v2687 = vpack.c.bf16 %v947, %v944
        %2692 = vrot.lane.b32.xlu0 %v2684, 64
        %v2693 = vpop.permute.xlu0 %2692
        %2694 = vrot.lane.b32.xlu0 %v2685, 64
        %v2695 = vpop.permute.xlu0 %2694
        %2696 = vrot.lane.b32.xlu0 %v2686, 64
        %v2697 = vpop.permute.xlu0 %2696
        %2698 = vrot.lane.b32.xlu0 %v2687, 64
        %v2699 = vpop.permute.xlu0 %2698
        %v2702 = vpack.i.b16 %v2693, %v2684
        %v2704 = vshrl.u32 %v2684, 16
        %v2705 = vshrl.u32 %v2693, 16
        %v2706 = vpack.i.b16 %v2705, %v2704
        %v2710 = vpack.i.b16 %v2695, %v2685
        %v2712 = vshrl.u32 %v2685, 16
        %v2713 = vshrl.u32 %v2695, 16
        %v2714 = vpack.i.b16 %v2713, %v2712
        %v2718 = vpack.i.b16 %v2697, %v2686
        %v2720 = vshrl.u32 %v2686, 16
        %v2721 = vshrl.u32 %v2697, 16
        %v2722 = vpack.i.b16 %v2721, %v2720
        %v2726 = vpack.i.b16 %v2699, %v2687
        %v2728 = vshrl.u32 %v2687, 16
        %v2729 = vshrl.u32 %v2699, 16
        %v2730 = vpack.i.b16 %v2729, %v2728
        %v2732 = vcombine.high %v2702, %v975
        %v2734 = vunpack.c.l.s4 1983009808
        %v2735 = vunpack.c.0.s8 %v2734
        %v2736 = vlaneseq
        %v2737 = vshrl.u32 %v2736, 7
        %v2738 = vsub.s32 %v2735, %v2737
        %v2739 = vrot.slane %v2702, %v2738
        %v2741 = vunpack.c.l.s4 1983009808
        %v2742 = vunpack.c.0.s8 %v2741
        %v2743 = vlaneseq
        %v2744 = vshrl.u32 %v2743, 7
        %v2745 = vsub.s32 %v2742, %v2744
        %v2746 = vrot.slane %v2732, %v2745
        %v2747 = vcombine.high %v2739, 0
        %v2749 = vunpack.c.l.s4 1934713408
        %v2750 = vunpack.c.0.s8 %v2749
        %v2751 = vlaneseq
        %v2752 = vshrl.u32 %v2751, 7
        %v2753 = vsub.s32 %v2750, %v2752
        %v2754 = vrot.slane %v2739, %v2753
        %v2756 = vunpack.c.l.s4 1934713408
        %v2757 = vunpack.c.0.s8 %v2756
        %v2758 = vlaneseq
        %v2759 = vshrl.u32 %v2758, 7
        %v2760 = vsub.s32 %v2757, %v2759
        %v2761 = vrot.slane %v2747, %v2760
        %v2762 = vcombine.high %v2746, 0
        %v2764 = vunpack.c.l.s4 1934713408
        %v2765 = vunpack.c.0.s8 %v2764
        %v2766 = vlaneseq
        %v2767 = vshrl.u32 %v2766, 7
        %v2768 = vsub.s32 %v2765, %v2767
        %v2769 = vrot.slane %v2746, %v2768
        %v2771 = vunpack.c.l.s4 1934713408
        %v2772 = vunpack.c.0.s8 %v2771
        %v2773 = vlaneseq
        %v2774 = vshrl.u32 %v2773, 7
        %v2775 = vsub.s32 %v2772, %v2774
        %v2776 = vrot.slane %v2762, %v2775
        %v2777 = vcombine.high %v2754, 0
        %v2778 = vcombine.high %v2761, 0
        %v2779 = vcombine.high %v2769, 0
        %v2780 = vcombine.high %v2776, 0
        %v2781 = vcombine.high %v2706, %v978
        %v2783 = vunpack.c.l.s4 1983009808
        %v2784 = vunpack.c.0.s8 %v2783
        %v2785 = vlaneseq
        %v2786 = vshrl.u32 %v2785, 7
        %v2787 = vsub.s32 %v2784, %v2786
        %v2788 = vrot.slane %v2706, %v2787
        %v2790 = vunpack.c.l.s4 1983009808
        %v2791 = vunpack.c.0.s8 %v2790
        %v2792 = vlaneseq
        %v2793 = vshrl.u32 %v2792, 7
        %v2794 = vsub.s32 %v2791, %v2793
        %v2795 = vrot.slane %v2781, %v2794
        %v2796 = vcombine.high %v2788, 0
        %v2798 = vunpack.c.l.s4 1934713408
        %v2799 = vunpack.c.0.s8 %v2798
        %v2800 = vlaneseq
        %v2801 = vshrl.u32 %v2800, 7
        %v2802 = vsub.s32 %v2799, %v2801
        %v2803 = vrot.slane %v2788, %v2802
        %v2805 = vunpack.c.l.s4 1934713408
        %v2806 = vunpack.c.0.s8 %v2805
        %v2807 = vlaneseq
        %v2808 = vshrl.u32 %v2807, 7
        %v2809 = vsub.s32 %v2806, %v2808
        %v2810 = vrot.slane %v2796, %v2809
        %v2811 = vcombine.high %v2795, 0
        %v2813 = vunpack.c.l.s4 1934713408
        %v2814 = vunpack.c.0.s8 %v2813
        %v2815 = vlaneseq
        %v2816 = vshrl.u32 %v2815, 7
        %v2817 = vsub.s32 %v2814, %v2816
        %v2818 = vrot.slane %v2795, %v2817
        %v2820 = vunpack.c.l.s4 1934713408
        %v2821 = vunpack.c.0.s8 %v2820
        %v2822 = vlaneseq
        %v2823 = vshrl.u32 %v2822, 7
        %v2824 = vsub.s32 %v2821, %v2823
        %v2825 = vrot.slane %v2811, %v2824
        %v2826 = vcombine.high %v2803, 0
        %v2827 = vcombine.high %v2810, 0
        %v2828 = vcombine.high %v2818, 0
        %v2829 = vcombine.high %v2825, 0
        %v2830 = vcombine.high %v2710, %v975
        %v2832 = vunpack.c.l.s4 1983009808
        %v2833 = vunpack.c.0.s8 %v2832
        %v2834 = vlaneseq
        %v2835 = vshrl.u32 %v2834, 7
        %v2836 = vsub.s32 %v2833, %v2835
        %v2837 = vrot.slane %v2710, %v2836
        %v2839 = vunpack.c.l.s4 1983009808
        %v2840 = vunpack.c.0.s8 %v2839
        %v2841 = vlaneseq
        %v2842 = vshrl.u32 %v2841, 7
        %v2843 = vsub.s32 %v2840, %v2842
        %v2844 = vrot.slane %v2830, %v2843
        %v2845 = vcombine.high %v2837, 0
        %v2847 = vunpack.c.l.s4 1934713408
        %v2848 = vunpack.c.0.s8 %v2847
        %v2849 = vlaneseq
        %v2850 = vshrl.u32 %v2849, 7
        %v2851 = vsub.s32 %v2848, %v2850
        %v2852 = vrot.slane %v2837, %v2851
        %v2854 = vunpack.c.l.s4 1934713408
        %v2855 = vunpack.c.0.s8 %v2854
        %v2856 = vlaneseq
        %v2857 = vshrl.u32 %v2856, 7
        %v2858 = vsub.s32 %v2855, %v2857
        %v2859 = vrot.slane %v2845, %v2858
        %v2860 = vcombine.high %v2844, 0
        %v2862 = vunpack.c.l.s4 1934713408
        %v2863 = vunpack.c.0.s8 %v2862
        %v2864 = vlaneseq
        %v2865 = vshrl.u32 %v2864, 7
        %v2866 = vsub.s32 %v2863, %v2865
        %v2867 = vrot.slane %v2844, %v2866
        %v2869 = vunpack.c.l.s4 1934713408
        %v2870 = vunpack.c.0.s8 %v2869
        %v2871 = vlaneseq
        %v2872 = vshrl.u32 %v2871, 7
        %v2873 = vsub.s32 %v2870, %v2872
        %v2874 = vrot.slane %v2860, %v2873
        %v2875 = vcombine.high %v2852, 0
        %v2876 = vcombine.high %v2859, 0
        %v2877 = vcombine.high %v2867, 0
        %v2878 = vcombine.high %v2874, 0
        %v2879 = vcombine.high %v2714, %v978
        %v2881 = vunpack.c.l.s4 1983009808
        %v2882 = vunpack.c.0.s8 %v2881
        %v2883 = vlaneseq
        %v2884 = vshrl.u32 %v2883, 7
        %v2885 = vsub.s32 %v2882, %v2884
        %v2886 = vrot.slane %v2714, %v2885
        %v2888 = vunpack.c.l.s4 1983009808
        %v2889 = vunpack.c.0.s8 %v2888
        %v2890 = vlaneseq
        %v2891 = vshrl.u32 %v2890, 7
        %v2892 = vsub.s32 %v2889, %v2891
        %v2893 = vrot.slane %v2879, %v2892
        %v2894 = vcombine.high %v2886, 0
        %v2896 = vunpack.c.l.s4 1934713408
        %v2897 = vunpack.c.0.s8 %v2896
        %v2898 = vlaneseq
        %v2899 = vshrl.u32 %v2898, 7
        %v2900 = vsub.s32 %v2897, %v2899
        %v2901 = vrot.slane %v2886, %v2900
        %v2903 = vunpack.c.l.s4 1934713408
        %v2904 = vunpack.c.0.s8 %v2903
        %v2905 = vlaneseq
        %v2906 = vshrl.u32 %v2905, 7
        %v2907 = vsub.s32 %v2904, %v2906
        %v2908 = vrot.slane %v2894, %v2907
        %v2909 = vcombine.high %v2893, 0
        %v2911 = vunpack.c.l.s4 1934713408
        %v2912 = vunpack.c.0.s8 %v2911
        %v2913 = vlaneseq
        %v2914 = vshrl.u32 %v2913, 7
        %v2915 = vsub.s32 %v2912, %v2914
        %v2916 = vrot.slane %v2893, %v2915
        %v2918 = vunpack.c.l.s4 1934713408
        %v2919 = vunpack.c.0.s8 %v2918
        %v2920 = vlaneseq
        %v2921 = vshrl.u32 %v2920, 7
        %v2922 = vsub.s32 %v2919, %v2921
        %v2923 = vrot.slane %v2909, %v2922
        %v2924 = vcombine.high %v2901, 0
        %v2925 = vcombine.high %v2908, 0
        %v2926 = vcombine.high %v2916, 0
        %v2927 = vcombine.high %v2923, 0
        %v2928 = vcombine.high %v2718, %v975
        %v2930 = vunpack.c.l.s4 1983009808
        %v2931 = vunpack.c.0.s8 %v2930
        %v2932 = vlaneseq
        %v2933 = vshrl.u32 %v2932, 7
        %v2934 = vsub.s32 %v2931, %v2933
        %v2935 = vrot.slane %v2718, %v2934
        %v2937 = vunpack.c.l.s4 1983009808
        %v2938 = vunpack.c.0.s8 %v2937
        %v2939 = vlaneseq
        %v2940 = vshrl.u32 %v2939, 7
        %v2941 = vsub.s32 %v2938, %v2940
        %v2942 = vrot.slane %v2928, %v2941
        %v2943 = vcombine.high %v2935, 0
        %v2945 = vunpack.c.l.s4 1934713408
        %v2946 = vunpack.c.0.s8 %v2945
        %v2947 = vlaneseq
        %v2948 = vshrl.u32 %v2947, 7
        %v2949 = vsub.s32 %v2946, %v2948
        %v2950 = vrot.slane %v2935, %v2949
        %v2952 = vunpack.c.l.s4 1934713408
        %v2953 = vunpack.c.0.s8 %v2952
        %v2954 = vlaneseq
        %v2955 = vshrl.u32 %v2954, 7
        %v2956 = vsub.s32 %v2953, %v2955
        %v2957 = vrot.slane %v2943, %v2956
        %v2958 = vcombine.high %v2942, 0
        %v2960 = vunpack.c.l.s4 1934713408
        %v2961 = vunpack.c.0.s8 %v2960
        %v2962 = vlaneseq
        %v2963 = vshrl.u32 %v2962, 7
        %v2964 = vsub.s32 %v2961, %v2963
        %v2965 = vrot.slane %v2942, %v2964
        %v2967 = vunpack.c.l.s4 1934713408
        %v2968 = vunpack.c.0.s8 %v2967
        %v2969 = vlaneseq
        %v2970 = vshrl.u32 %v2969, 7
        %v2971 = vsub.s32 %v2968, %v2970
        %v2972 = vrot.slane %v2958, %v2971
        %v2973 = vcombine.high %v2950, 0
        %v2974 = vcombine.high %v2957, 0
        %v2975 = vcombine.high %v2965, 0
        %v2976 = vcombine.high %v2972, 0
        %v2977 = vcombine.high %v2722, %v978
        %v2979 = vunpack.c.l.s4 1983009808
        %v2980 = vunpack.c.0.s8 %v2979
        %v2981 = vlaneseq
        %v2982 = vshrl.u32 %v2981, 7
        %v2983 = vsub.s32 %v2980, %v2982
        %v2984 = vrot.slane %v2722, %v2983
        %v2986 = vunpack.c.l.s4 1983009808
        %v2987 = vunpack.c.0.s8 %v2986
        %v2988 = vlaneseq
        %v2989 = vshrl.u32 %v2988, 7
        %v2990 = vsub.s32 %v2987, %v2989
        %v2991 = vrot.slane %v2977, %v2990
        %v2992 = vcombine.high %v2984, 0
        %v2994 = vunpack.c.l.s4 1934713408
        %v2995 = vunpack.c.0.s8 %v2994
        %v2996 = vlaneseq
        %v2997 = vshrl.u32 %v2996, 7
        %v2998 = vsub.s32 %v2995, %v2997
        %v2999 = vrot.slane %v2984, %v2998
        %v3001 = vunpack.c.l.s4 1934713408
        %v3002 = vunpack.c.0.s8 %v3001
        %v3003 = vlaneseq
        %v3004 = vshrl.u32 %v3003, 7
        %v3005 = vsub.s32 %v3002, %v3004
        %v3006 = vrot.slane %v2992, %v3005
        %v3007 = vcombine.high %v2991, 0
        %v3009 = vunpack.c.l.s4 1934713408
        %v3010 = vunpack.c.0.s8 %v3009
        %v3011 = vlaneseq
        %v3012 = vshrl.u32 %v3011, 7
        %v3013 = vsub.s32 %v3010, %v3012
        %v3014 = vrot.slane %v2991, %v3013
        %v3016 = vunpack.c.l.s4 1934713408
        %v3017 = vunpack.c.0.s8 %v3016
        %v3018 = vlaneseq
        %v3019 = vshrl.u32 %v3018, 7
        %v3020 = vsub.s32 %v3017, %v3019
        %v3021 = vrot.slane %v3007, %v3020
        %v3022 = vcombine.high %v2999, 0
        %v3023 = vcombine.high %v3006, 0
        %v3024 = vcombine.high %v3014, 0
        %v3025 = vcombine.high %v3021, 0
        %v3026 = vcombine.high %v2726, %v975
        %v3028 = vunpack.c.l.s4 1983009808
        %v3029 = vunpack.c.0.s8 %v3028
        %v3030 = vlaneseq
        %v3031 = vshrl.u32 %v3030, 7
        %v3032 = vsub.s32 %v3029, %v3031
        %v3033 = vrot.slane %v2726, %v3032
        %v3035 = vunpack.c.l.s4 1983009808
        %v3036 = vunpack.c.0.s8 %v3035
        %v3037 = vlaneseq
        %v3038 = vshrl.u32 %v3037, 7
        %v3039 = vsub.s32 %v3036, %v3038
        %v3040 = vrot.slane %v3026, %v3039
        %v3041 = vcombine.high %v3033, 0
        %v3043 = vunpack.c.l.s4 1934713408
        %v3044 = vunpack.c.0.s8 %v3043
        %v3045 = vlaneseq
        %v3046 = vshrl.u32 %v3045, 7
        %v3047 = vsub.s32 %v3044, %v3046
        %v3048 = vrot.slane %v3033, %v3047
        %v3050 = vunpack.c.l.s4 1934713408
        %v3051 = vunpack.c.0.s8 %v3050
        %v3052 = vlaneseq
        %v3053 = vshrl.u32 %v3052, 7
        %v3054 = vsub.s32 %v3051, %v3053
        %v3055 = vrot.slane %v3041, %v3054
        %v3056 = vcombine.high %v3040, 0
        %v3058 = vunpack.c.l.s4 1934713408
        %v3059 = vunpack.c.0.s8 %v3058
        %v3060 = vlaneseq
        %v3061 = vshrl.u32 %v3060, 7
        %v3062 = vsub.s32 %v3059, %v3061
        %v3063 = vrot.slane %v3040, %v3062
        %v3065 = vunpack.c.l.s4 1934713408
        %v3066 = vunpack.c.0.s8 %v3065
        %v3067 = vlaneseq
        %v3068 = vshrl.u32 %v3067, 7
        %v3069 = vsub.s32 %v3066, %v3068
        %v3070 = vrot.slane %v3056, %v3069
        %v3071 = vcombine.high %v3048, 0
        %v3072 = vcombine.high %v3055, 0
        %v3073 = vcombine.high %v3063, 0
        %v3074 = vcombine.high %v3070, 0
        %v3075 = vcombine.high %v2730, %v978
        %v3077 = vunpack.c.l.s4 1983009808
        %v3078 = vunpack.c.0.s8 %v3077
        %v3079 = vlaneseq
        %v3080 = vshrl.u32 %v3079, 7
        %v3081 = vsub.s32 %v3078, %v3080
        %v3082 = vrot.slane %v2730, %v3081
        %v3084 = vunpack.c.l.s4 1983009808
        %v3085 = vunpack.c.0.s8 %v3084
        %v3086 = vlaneseq
        %v3087 = vshrl.u32 %v3086, 7
        %v3088 = vsub.s32 %v3085, %v3087
        %v3089 = vrot.slane %v3075, %v3088
        %v3090 = vcombine.high %v3082, 0
        %v3092 = vunpack.c.l.s4 1934713408
        %v3093 = vunpack.c.0.s8 %v3092
        %v3094 = vlaneseq
        %v3095 = vshrl.u32 %v3094, 7
        %v3096 = vsub.s32 %v3093, %v3095
        %v3097 = vrot.slane %v3082, %v3096
        %v3099 = vunpack.c.l.s4 1934713408
        %v3100 = vunpack.c.0.s8 %v3099
        %v3101 = vlaneseq
        %v3102 = vshrl.u32 %v3101, 7
        %v3103 = vsub.s32 %v3100, %v3102
        %v3104 = vrot.slane %v3090, %v3103
        %v3105 = vcombine.high %v3089, 0
        %v3107 = vunpack.c.l.s4 1934713408
        %v3108 = vunpack.c.0.s8 %v3107
        %v3109 = vlaneseq
        %v3110 = vshrl.u32 %v3109, 7
        %v3111 = vsub.s32 %v3108, %v3110
        %v3112 = vrot.slane %v3089, %v3111
        %v3114 = vunpack.c.l.s4 1934713408
        %v3115 = vunpack.c.0.s8 %v3114
        %v3116 = vlaneseq
        %v3117 = vshrl.u32 %v3116, 7
        %v3118 = vsub.s32 %v3115, %v3117
        %v3119 = vrot.slane %v3105, %v3118
        %v3120 = vcombine.high %v3097, 0
        %v3121 = vcombine.high %v3104, 0
        %v3122 = vcombine.high %v3112, 0
        %v3123 = vcombine.high %v3119, 0
        %v3124 = vcombine.low %v2754, %v2761
        %v3126 = vunpack.c.l.s4 1983009808
        %v3127 = vunpack.c.0.s8 %v3126
        %v3128 = vlaneseq
        %v3129 = vshrl.u32 %v3128, 7
        %v3130 = vsub.s32 %v3127, %v3129
        %v3131 = vrot.slane %v3124, %v3130
        %v3132 = vcombine.low %v2777, %v2778
        %v3134 = vunpack.c.l.s4 1983009808
        %v3135 = vunpack.c.0.s8 %v3134
        %v3136 = vlaneseq
        %v3137 = vshrl.u32 %v3136, 7
        %v3138 = vsub.s32 %v3135, %v3137
        %v3139 = vrot.slane %v3132, %v3138
        %v3140 = vcombine.low %v2769, %v2776
        %v3142 = vunpack.c.l.s4 1983009808
        %v3143 = vunpack.c.0.s8 %v3142
        %v3144 = vlaneseq
        %v3145 = vshrl.u32 %v3144, 7
        %v3146 = vsub.s32 %v3143, %v3145
        %v3147 = vrot.slane %v3140, %v3146
        %v3148 = vcombine.low %v2779, %v2780
        %v3150 = vunpack.c.l.s4 1983009808
        %v3151 = vunpack.c.0.s8 %v3150
        %v3152 = vlaneseq
        %v3153 = vshrl.u32 %v3152, 7
        %v3154 = vsub.s32 %v3151, %v3153
        %v3155 = vrot.slane %v3148, %v3154
        %v3156 = vcombine.low %v3131, %v3139
        %v3158 = vunpack.c.l.s4 1934713408
        %v3159 = vunpack.c.0.s8 %v3158
        %v3160 = vlaneseq
        %v3161 = vshrl.u32 %v3160, 7
        %v3162 = vsub.s32 %v3159, %v3161
        %v3163 = vrot.slane %v3156, %v3162
        %v3164 = vcombine.low %v3147, %v3155
        %v3166 = vunpack.c.l.s4 1934713408
        %v3167 = vunpack.c.0.s8 %v3166
        %v3168 = vlaneseq
        %v3169 = vshrl.u32 %v3168, 7
        %v3170 = vsub.s32 %v3167, %v3169
        %v3171 = vrot.slane %v3164, %v3170
        %v3172 = vcombine.low %v3163, %v3171
        %v3173 = vcombine.low %v2803, %v2810
        %v3175 = vunpack.c.l.s4 1983009808
        %v3176 = vunpack.c.0.s8 %v3175
        %v3177 = vlaneseq
        %v3178 = vshrl.u32 %v3177, 7
        %v3179 = vsub.s32 %v3176, %v3178
        %v3180 = vrot.slane %v3173, %v3179
        %v3181 = vcombine.low %v2826, %v2827
        %v3183 = vunpack.c.l.s4 1983009808
        %v3184 = vunpack.c.0.s8 %v3183
        %v3185 = vlaneseq
        %v3186 = vshrl.u32 %v3185, 7
        %v3187 = vsub.s32 %v3184, %v3186
        %v3188 = vrot.slane %v3181, %v3187
        %v3189 = vcombine.low %v2818, %v2825
        %v3191 = vunpack.c.l.s4 1983009808
        %v3192 = vunpack.c.0.s8 %v3191
        %v3193 = vlaneseq
        %v3194 = vshrl.u32 %v3193, 7
        %v3195 = vsub.s32 %v3192, %v3194
        %v3196 = vrot.slane %v3189, %v3195
        %v3197 = vcombine.low %v2828, %v2829
        %v3199 = vunpack.c.l.s4 1983009808
        %v3200 = vunpack.c.0.s8 %v3199
        %v3201 = vlaneseq
        %v3202 = vshrl.u32 %v3201, 7
        %v3203 = vsub.s32 %v3200, %v3202
        %v3204 = vrot.slane %v3197, %v3203
        %v3205 = vcombine.low %v3180, %v3188
        %v3207 = vunpack.c.l.s4 1934713408
        %v3208 = vunpack.c.0.s8 %v3207
        %v3209 = vlaneseq
        %v3210 = vshrl.u32 %v3209, 7
        %v3211 = vsub.s32 %v3208, %v3210
        %v3212 = vrot.slane %v3205, %v3211
        %v3213 = vcombine.low %v3196, %v3204
        %v3215 = vunpack.c.l.s4 1934713408
        %v3216 = vunpack.c.0.s8 %v3215
        %v3217 = vlaneseq
        %v3218 = vshrl.u32 %v3217, 7
        %v3219 = vsub.s32 %v3216, %v3218
        %v3220 = vrot.slane %v3213, %v3219
        %v3221 = vcombine.low %v3212, %v3220
        %v3222 = vcombine.low %v2852, %v2859
        %v3224 = vunpack.c.l.s4 1983009808
        %v3225 = vunpack.c.0.s8 %v3224
        %v3226 = vlaneseq
        %v3227 = vshrl.u32 %v3226, 7
        %v3228 = vsub.s32 %v3225, %v3227
        %v3229 = vrot.slane %v3222, %v3228
        %v3230 = vcombine.low %v2875, %v2876
        %v3232 = vunpack.c.l.s4 1983009808
        %v3233 = vunpack.c.0.s8 %v3232
        %v3234 = vlaneseq
        %v3235 = vshrl.u32 %v3234, 7
        %v3236 = vsub.s32 %v3233, %v3235
        %v3237 = vrot.slane %v3230, %v3236
        %v3238 = vcombine.low %v2867, %v2874
        %v3240 = vunpack.c.l.s4 1983009808
        %v3241 = vunpack.c.0.s8 %v3240
        %v3242 = vlaneseq
        %v3243 = vshrl.u32 %v3242, 7
        %v3244 = vsub.s32 %v3241, %v3243
        %v3245 = vrot.slane %v3238, %v3244
        %v3246 = vcombine.low %v2877, %v2878
        %v3248 = vunpack.c.l.s4 1983009808
        %v3249 = vunpack.c.0.s8 %v3248
        %v3250 = vlaneseq
        %v3251 = vshrl.u32 %v3250, 7
        %v3252 = vsub.s32 %v3249, %v3251
        %v3253 = vrot.slane %v3246, %v3252
        %v3254 = vcombine.low %v3229, %v3237
        %v3256 = vunpack.c.l.s4 1934713408
        %v3257 = vunpack.c.0.s8 %v3256
        %v3258 = vlaneseq
        %v3259 = vshrl.u32 %v3258, 7
        %v3260 = vsub.s32 %v3257, %v3259
        %v3261 = vrot.slane %v3254, %v3260
        %v3262 = vcombine.low %v3245, %v3253
        %v3264 = vunpack.c.l.s4 1934713408
        %v3265 = vunpack.c.0.s8 %v3264
        %v3266 = vlaneseq
        %v3267 = vshrl.u32 %v3266, 7
        %v3268 = vsub.s32 %v3265, %v3267
        %v3269 = vrot.slane %v3262, %v3268
        %v3270 = vcombine.low %v3261, %v3269
        %v3271 = vcombine.low %v2901, %v2908
        %v3273 = vunpack.c.l.s4 1983009808
        %v3274 = vunpack.c.0.s8 %v3273
        %v3275 = vlaneseq
        %v3276 = vshrl.u32 %v3275, 7
        %v3277 = vsub.s32 %v3274, %v3276
        %v3278 = vrot.slane %v3271, %v3277
        %v3279 = vcombine.low %v2924, %v2925
        %v3281 = vunpack.c.l.s4 1983009808
        %v3282 = vunpack.c.0.s8 %v3281
        %v3283 = vlaneseq
        %v3284 = vshrl.u32 %v3283, 7
        %v3285 = vsub.s32 %v3282, %v3284
        %v3286 = vrot.slane %v3279, %v3285
        %v3287 = vcombine.low %v2916, %v2923
        %v3289 = vunpack.c.l.s4 1983009808
        %v3290 = vunpack.c.0.s8 %v3289
        %v3291 = vlaneseq
        %v3292 = vshrl.u32 %v3291, 7
        %v3293 = vsub.s32 %v3290, %v3292
        %v3294 = vrot.slane %v3287, %v3293
        %v3295 = vcombine.low %v2926, %v2927
        %v3297 = vunpack.c.l.s4 1983009808
        %v3298 = vunpack.c.0.s8 %v3297
        %v3299 = vlaneseq
        %v3300 = vshrl.u32 %v3299, 7
        %v3301 = vsub.s32 %v3298, %v3300
        %v3302 = vrot.slane %v3295, %v3301
        %v3303 = vcombine.low %v3278, %v3286
        %v3305 = vunpack.c.l.s4 1934713408
        %v3306 = vunpack.c.0.s8 %v3305
        %v3307 = vlaneseq
        %v3308 = vshrl.u32 %v3307, 7
        %v3309 = vsub.s32 %v3306, %v3308
        %v3310 = vrot.slane %v3303, %v3309
        %v3311 = vcombine.low %v3294, %v3302
        %v3313 = vunpack.c.l.s4 1934713408
        %v3314 = vunpack.c.0.s8 %v3313
        %v3315 = vlaneseq
        %v3316 = vshrl.u32 %v3315, 7
        %v3317 = vsub.s32 %v3314, %v3316
        %v3318 = vrot.slane %v3311, %v3317
        %v3319 = vcombine.low %v3310, %v3318
        %v3320 = vcombine.low %v2950, %v2957
        %v3322 = vunpack.c.l.s4 1983009808
        %v3323 = vunpack.c.0.s8 %v3322
        %v3324 = vlaneseq
        %v3325 = vshrl.u32 %v3324, 7
        %v3326 = vsub.s32 %v3323, %v3325
        %v3327 = vrot.slane %v3320, %v3326
        %v3328 = vcombine.low %v2973, %v2974
        %v3330 = vunpack.c.l.s4 1983009808
        %v3331 = vunpack.c.0.s8 %v3330
        %v3332 = vlaneseq
        %v3333 = vshrl.u32 %v3332, 7
        %v3334 = vsub.s32 %v3331, %v3333
        %v3335 = vrot.slane %v3328, %v3334
        %v3336 = vcombine.low %v2965, %v2972
        %v3338 = vunpack.c.l.s4 1983009808
        %v3339 = vunpack.c.0.s8 %v3338
        %v3340 = vlaneseq
        %v3341 = vshrl.u32 %v3340, 7
        %v3342 = vsub.s32 %v3339, %v3341
        %v3343 = vrot.slane %v3336, %v3342
        %v3344 = vcombine.low %v2975, %v2976
        %v3346 = vunpack.c.l.s4 1983009808
        %v3347 = vunpack.c.0.s8 %v3346
        %v3348 = vlaneseq
        %v3349 = vshrl.u32 %v3348, 7
        %v3350 = vsub.s32 %v3347, %v3349
        %v3351 = vrot.slane %v3344, %v3350
        %v3352 = vcombine.low %v3327, %v3335
        %v3354 = vunpack.c.l.s4 1934713408
        %v3355 = vunpack.c.0.s8 %v3354
        %v3356 = vlaneseq
        %v3357 = vshrl.u32 %v3356, 7
        %v3358 = vsub.s32 %v3355, %v3357
        %v3359 = vrot.slane %v3352, %v3358
        %v3360 = vcombine.low %v3343, %v3351
        %v3362 = vunpack.c.l.s4 1934713408
        %v3363 = vunpack.c.0.s8 %v3362
        %v3364 = vlaneseq
        %v3365 = vshrl.u32 %v3364, 7
        %v3366 = vsub.s32 %v3363, %v3365
        %v3367 = vrot.slane %v3360, %v3366
        %v3368 = vcombine.low %v3359, %v3367
        %v3369 = vcombine.low %v2999, %v3006
        %v3371 = vunpack.c.l.s4 1983009808
        %v3372 = vunpack.c.0.s8 %v3371
        %v3373 = vlaneseq
        %v3374 = vshrl.u32 %v3373, 7
        %v3375 = vsub.s32 %v3372, %v3374
        %v3376 = vrot.slane %v3369, %v3375
        %v3377 = vcombine.low %v3022, %v3023
        %v3379 = vunpack.c.l.s4 1983009808
        %v3380 = vunpack.c.0.s8 %v3379
        %v3381 = vlaneseq
        %v3382 = vshrl.u32 %v3381, 7
        %v3383 = vsub.s32 %v3380, %v3382
        %v3384 = vrot.slane %v3377, %v3383
        %v3385 = vcombine.low %v3014, %v3021
        %v3387 = vunpack.c.l.s4 1983009808
        %v3388 = vunpack.c.0.s8 %v3387
        %v3389 = vlaneseq
        %v3390 = vshrl.u32 %v3389, 7
        %v3391 = vsub.s32 %v3388, %v3390
        %v3392 = vrot.slane %v3385, %v3391
        %v3393 = vcombine.low %v3024, %v3025
        %v3395 = vunpack.c.l.s4 1983009808
        %v3396 = vunpack.c.0.s8 %v3395
        %v3397 = vlaneseq
        %v3398 = vshrl.u32 %v3397, 7
        %v3399 = vsub.s32 %v3396, %v3398
        %v3400 = vrot.slane %v3393, %v3399
        %v3401 = vcombine.low %v3376, %v3384
        %v3403 = vunpack.c.l.s4 1934713408
        %v3404 = vunpack.c.0.s8 %v3403
        %v3405 = vlaneseq
        %v3406 = vshrl.u32 %v3405, 7
        %v3407 = vsub.s32 %v3404, %v3406
        %v3408 = vrot.slane %v3401, %v3407
        %v3409 = vcombine.low %v3392, %v3400
        %v3411 = vunpack.c.l.s4 1934713408
        %v3412 = vunpack.c.0.s8 %v3411
        %v3413 = vlaneseq
        %v3414 = vshrl.u32 %v3413, 7
        %v3415 = vsub.s32 %v3412, %v3414
        %v3416 = vrot.slane %v3409, %v3415
        %v3417 = vcombine.low %v3408, %v3416
        %v3418 = vcombine.low %v3048, %v3055
        %v3420 = vunpack.c.l.s4 1983009808
        %v3421 = vunpack.c.0.s8 %v3420
        %v3422 = vlaneseq
        %v3423 = vshrl.u32 %v3422, 7
        %v3424 = vsub.s32 %v3421, %v3423
        %v3425 = vrot.slane %v3418, %v3424
        %v3426 = vcombine.low %v3071, %v3072
        %v3428 = vunpack.c.l.s4 1983009808
        %v3429 = vunpack.c.0.s8 %v3428
        %v3430 = vlaneseq
        %v3431 = vshrl.u32 %v3430, 7
        %v3432 = vsub.s32 %v3429, %v3431
        %v3433 = vrot.slane %v3426, %v3432
        %v3434 = vcombine.low %v3063, %v3070
        %v3436 = vunpack.c.l.s4 1983009808
        %v3437 = vunpack.c.0.s8 %v3436
        %v3438 = vlaneseq
        %v3439 = vshrl.u32 %v3438, 7
        %v3440 = vsub.s32 %v3437, %v3439
        %v3441 = vrot.slane %v3434, %v3440
        %v3442 = vcombine.low %v3073, %v3074
        %v3444 = vunpack.c.l.s4 1983009808
        %v3445 = vunpack.c.0.s8 %v3444
        %v3446 = vlaneseq
        %v3447 = vshrl.u32 %v3446, 7
        %v3448 = vsub.s32 %v3445, %v3447
        %v3449 = vrot.slane %v3442, %v3448
        %v3450 = vcombine.low %v3425, %v3433
        %v3452 = vunpack.c.l.s4 1934713408
        %v3453 = vunpack.c.0.s8 %v3452
        %v3454 = vlaneseq
        %v3455 = vshrl.u32 %v3454, 7
        %v3456 = vsub.s32 %v3453, %v3455
        %v3457 = vrot.slane %v3450, %v3456
        %v3458 = vcombine.low %v3441, %v3449
        %v3460 = vunpack.c.l.s4 1934713408
        %v3461 = vunpack.c.0.s8 %v3460
        %v3462 = vlaneseq
        %v3463 = vshrl.u32 %v3462, 7
        %v3464 = vsub.s32 %v3461, %v3463
        %v3465 = vrot.slane %v3458, %v3464
        %v3466 = vcombine.low %v3457, %v3465
        %v3467 = vcombine.low %v3097, %v3104
        %v3469 = vunpack.c.l.s4 1983009808
        %v3470 = vunpack.c.0.s8 %v3469
        %v3471 = vlaneseq
        %v3472 = vshrl.u32 %v3471, 7
        %v3473 = vsub.s32 %v3470, %v3472
        %v3474 = vrot.slane %v3467, %v3473
        %v3475 = vcombine.low %v3120, %v3121
        %v3477 = vunpack.c.l.s4 1983009808
        %v3478 = vunpack.c.0.s8 %v3477
        %v3479 = vlaneseq
        %v3480 = vshrl.u32 %v3479, 7
        %v3481 = vsub.s32 %v3478, %v3480
        %v3482 = vrot.slane %v3475, %v3481
        %v3483 = vcombine.low %v3112, %v3119
        %v3485 = vunpack.c.l.s4 1983009808
        %v3486 = vunpack.c.0.s8 %v3485
        %v3487 = vlaneseq
        %v3488 = vshrl.u32 %v3487, 7
        %v3489 = vsub.s32 %v3486, %v3488
        %v3490 = vrot.slane %v3483, %v3489
        %v3491 = vcombine.low %v3122, %v3123
        %v3493 = vunpack.c.l.s4 1983009808
        %v3494 = vunpack.c.0.s8 %v3493
        %v3495 = vlaneseq
        %v3496 = vshrl.u32 %v3495, 7
        %v3497 = vsub.s32 %v3494, %v3496
        %v3498 = vrot.slane %v3491, %v3497
        %v3499 = vcombine.low %v3474, %v3482
        %v3501 = vunpack.c.l.s4 1934713408
        %v3502 = vunpack.c.0.s8 %v3501
        %v3503 = vlaneseq
        %v3504 = vshrl.u32 %v3503, 7
        %v3505 = vsub.s32 %v3502, %v3504
        %v3506 = vrot.slane %v3499, %v3505
        %v3507 = vcombine.low %v3490, %v3498
        %v3509 = vunpack.c.l.s4 1934713408
        %v3510 = vunpack.c.0.s8 %v3509
        %v3511 = vlaneseq
        %v3512 = vshrl.u32 %v3511, 7
        %v3513 = vsub.s32 %v3510, %v3512
        %v3514 = vrot.slane %v3507, %v3513
        %v3515 = vcombine.low %v3506, %v3514
        %v3518 = vpack.i.b16 %v3221, %v3172
        %v3519 = vshrl.u32 %v3172, 16
        %v3520 = vshrl.u32 %v3221, 16
        %v3521 = vpack.i.b16 %v3520, %v3519
        %v3524 = vpack.i.b16 %v3319, %v3270
        %v3525 = vshrl.u32 %v3270, 16
        %v3526 = vshrl.u32 %v3319, 16
        %v3527 = vpack.i.b16 %v3526, %v3525
        %v3530 = vpack.i.b16 %v3417, %v3368
        %v3531 = vshrl.u32 %v3368, 16
        %v3532 = vshrl.u32 %v3417, 16
        %v3533 = vpack.i.b16 %v3532, %v3531
        %v3536 = vpack.i.b16 %v3515, %v3466
        %v3537 = vshrl.u32 %v3466, 16
        %v3538 = vshrl.u32 %v3515, 16
        %v3539 = vpack.i.b16 %v3538, %v3537
        %3540 = vxpose.xlu0.c.b16.start [1/8] %v1790, 128
        %3541 = vxpose.xlu0.c.b16.cont [2/8] 0, 128
        %3542 = vxpose.xlu0.c.b16.cont [3/8] 0, 128
        %3543 = vxpose.xlu0.c.b16.cont [4/8] 0, 128
        %3544 = vxpose.xlu0.c.b16.cont [5/8] 0, 128
        %3545 = vxpose.xlu0.c.b16.cont [6/8] 0, 128
        %3546 = vxpose.xlu0.c.b16.cont [7/8] 0, 128
        %3547 = vxpose.xlu0.c.b16.end [8/8] 0, 128
        %v3548 = vpop.trf.xlu0
        %v3549 = vpop.trf.xlu0
        %v3550 = vpop.trf.xlu0
        %v3551 = vpop.trf.xlu0
        %v3552 = vpop.trf.xlu0
        %v3553 = vpop.trf.xlu0
        %v3554 = vpop.trf.xlu0
        %v3555 = vpop.trf.xlu0
        %vm3556 = vcmask 130048
        %v3558 = vsel %vm3556, %v3548, 0
        %v3561 = vsel %vm3556, %v3549, 0
        %v3564 = vsel %vm3556, %v3550, 0
        %v3567 = vsel %vm3556, %v3551, 0
        %3569 = vmatprep.subr.bf16.mxu0 0
        %3570 = vmatpush1.bf16.msra.mxu0 %v2654
        %3571 = vmatprep.subr.bf16.mxu0 0
        %3572 = vmatpush1.bf16.msra.mxu0 0
        %3573 = vmatprep.subr.bf16.mxu0 0
        %3574 = vmatpush1.bf16.msra.mxu0 0
        %3575 = vmatprep.subr.bf16.mxu0 0
        %3576 = vmatpush1.bf16.msra.mxu0 0
        %3577 = vmatprep.subr.bf16.mxu0 0
        %3578 = vmatpush1.bf16.msra.mxu0 0
        %3579 = vmatprep.subr.bf16.mxu0 0
        %3580 = vmatpush1.bf16.msra.mxu0 0
        %3581 = vmatprep.subr.bf16.mxu0 0
        %3582 = vmatpush1.bf16.msra.mxu0 0
        %3583 = vmatprep.subr.bf16.mxu0 0
        %3584 = vmatpush1.bf16.msra.mxu0 0
        %3585 = vmatprep.subr.bf16.mxu0 0
        %3586 = vmatpush1.bf16.msra.mxu0 0
        %3587 = vmatprep.subr.bf16.mxu0 0
        %3588 = vmatpush1.bf16.msra.mxu0 0
        %3589 = vmatprep.subr.bf16.mxu0 0
        %3590 = vmatpush1.bf16.msra.mxu0 0
        %3591 = vmatprep.subr.bf16.mxu0 0
        %3592 = vmatpush1.bf16.msra.mxu0 0
        %3593 = vmatprep.subr.bf16.mxu0 0
        %3594 = vmatpush1.bf16.msra.mxu0 0
        %3595 = vmatprep.subr.bf16.mxu0 0
        %3596 = vmatpush1.bf16.msra.mxu0 0
        %3597 = vmatprep.subr.bf16.mxu0 0
        %3598 = vmatpush1.bf16.msra.mxu0 0
        %3599 = vmatprep.subr.bf16.mxu0 0
        %3600 = vmatpush1.bf16.msra.mxu0 0
        %3601 = vmatprep.mubr.bf16.mxu0 0
        %3602 = vmatmul.mubr.bf16.gmra.mrb[0].mxu0 %v3558
        %v3603 = vpop.f32.mrb[0].mxu0
        %v3604 = vadd.f32 0.0, %v3603
        %v3605 = vpop.f32.mrb[0].mxu0
        %v3606 = vpop.f32.mrb[0].mxu0
        %v3607 = vadd.f32 0.0, %v3606
        %v3608 = vpop.f32.mrb[0].mxu0
        %3609 = vmatprep.mubr.bf16.mxu0 0
        %3610 = vmatmul.mubr.bf16.gmra.mrb[0].mxu0 %v3561
        %v3611 = vpop.f32.mrb[0].mxu0
        %v3612 = vadd.f32 0.0, %v3611
        %v3613 = vpop.f32.mrb[0].mxu0
        %v3614 = vpop.f32.mrb[0].mxu0
        %v3615 = vadd.f32 0.0, %v3614
        %v3616 = vpop.f32.mrb[0].mxu0
        %3617 = vmatprep.mubr.bf16.mxu0 0
        %3618 = vmatmul.mubr.bf16.gmra.mrb[0].mxu0 %v3564
        %v3619 = vpop.f32.mrb[0].mxu0
        %v3620 = vadd.f32 0.0, %v3619
        %v3621 = vpop.f32.mrb[0].mxu0
        %v3622 = vpop.f32.mrb[0].mxu0
        %v3623 = vadd.f32 0.0, %v3622
        %v3624 = vpop.f32.mrb[0].mxu0
        %3625 = vmatprep.mubr.bf16.mxu0 0
        %3626 = vmatmul.mubr.bf16.gmra.mrb[0].mxu0 %v3567
        %v3627 = vpop.f32.mrb[0].mxu0
        %v3628 = vadd.f32 0.0, %v3627
        %v3629 = vpop.f32.mrb[0].mxu0
        %v3630 = vpop.f32.mrb[0].mxu0
        %v3631 = vadd.f32 0.0, %v3630
        %v3632 = vpop.f32.mrb[0].mxu0
        %3633 = vdwg.mxu0
        %3634 = vxpose.xlu0.c.b16.start [1/8] %v1794, 128
        %3635 = vxpose.xlu0.c.b16.cont [2/8] 0, 128
        %3636 = vxpose.xlu0.c.b16.cont [3/8] 0, 128
        %3637 = vxpose.xlu0.c.b16.cont [4/8] 0, 128
        %3638 = vxpose.xlu0.c.b16.cont [5/8] 0, 128
        %3639 = vxpose.xlu0.c.b16.cont [6/8] 0, 128
        %3640 = vxpose.xlu0.c.b16.cont [7/8] 0, 128
        %3641 = vxpose.xlu0.c.b16.end [8/8] 0, 128
        %v3642 = vpop.trf.xlu0
        %v3643 = vpop.trf.xlu0
        %v3644 = vpop.trf.xlu0
        %v3645 = vpop.trf.xlu0
        %v3646 = vpop.trf.xlu0
        %v3647 = vpop.trf.xlu0
        %v3648 = vpop.trf.xlu0
        %v3649 = vpop.trf.xlu0
        %v3651 = vsel %vm3556, %v3642, 0
        %v3654 = vsel %vm3556, %v3643, 0
        %v3657 = vsel %vm3556, %v3644, 0
        %v3660 = vsel %vm3556, %v3645, 0
        %3662 = vmatprep.subr.bf16.mxu0 0
        %3663 = vmatpush1.bf16.msra.mxu0 %v2658
        %3664 = vmatprep.subr.bf16.mxu0 0
        %3665 = vmatpush1.bf16.msra.mxu0 0
        %3666 = vmatprep.subr.bf16.mxu0 0
        %3667 = vmatpush1.bf16.msra.mxu0 0
        %3668 = vmatprep.subr.bf16.mxu0 0
        %3669 = vmatpush1.bf16.msra.mxu0 0
        %3670 = vmatprep.subr.bf16.mxu0 0
        %3671 = vmatpush1.bf16.msra.mxu0 0
        %3672 = vmatprep.subr.bf16.mxu0 0
        %3673 = vmatpush1.bf16.msra.mxu0 0
        %3674 = vmatprep.subr.bf16.mxu0 0
        %3675 = vmatpush1.bf16.msra.mxu0 0
        %3676 = vmatprep.subr.bf16.mxu0 0
        %3677 = vmatpush1.bf16.msra.mxu0 0
        %3678 = vmatprep.subr.bf16.mxu0 0
        %3679 = vmatpush1.bf16.msra.mxu0 0
        %3680 = vmatprep.subr.bf16.mxu0 0
        %3681 = vmatpush1.bf16.msra.mxu0 0
        %3682 = vmatprep.subr.bf16.mxu0 0
        %3683 = vmatpush1.bf16.msra.mxu0 0
        %3684 = vmatprep.subr.bf16.mxu0 0
        %3685 = vmatpush1.bf16.msra.mxu0 0
        %3686 = vmatprep.subr.bf16.mxu0 0
        %3687 = vmatpush1.bf16.msra.mxu0 0
        %3688 = vmatprep.subr.bf16.mxu0 0
        %3689 = vmatpush1.bf16.msra.mxu0 0
        %3690 = vmatprep.subr.bf16.mxu0 0
        %3691 = vmatpush1.bf16.msra.mxu0 0
        %3692 = vmatprep.subr.bf16.mxu0 0
        %3693 = vmatpush1.bf16.msra.mxu0 0
        %3694 = vmatprep.mubr.bf16.mxu0 0
        %3695 = vmatmul.mubr.bf16.gmra.mrb[0].mxu0 %v3651
        %v3696 = vpop.f32.mrb[0].mxu0
        %v3697 = vadd.f32 0.0, %v3696
        %v3698 = vpop.f32.mrb[0].mxu0
        %v3699 = vpop.f32.mrb[0].mxu0
        %v3700 = vadd.f32 0.0, %v3699
        %v3701 = vpop.f32.mrb[0].mxu0
        %3702 = vmatprep.mubr.bf16.mxu0 0
        %3703 = vmatmul.mubr.bf16.gmra.mrb[0].mxu0 %v3654
        %v3704 = vpop.f32.mrb[0].mxu0
        %v3705 = vadd.f32 0.0, %v3704
        %v3706 = vpop.f32.mrb[0].mxu0
        %v3707 = vpop.f32.mrb[0].mxu0
        %v3708 = vadd.f32 0.0, %v3707
        %v3709 = vpop.f32.mrb[0].mxu0
        %3710 = vmatprep.mubr.bf16.mxu0 0
        %3711 = vmatmul.mubr.bf16.gmra.mrb[0].mxu0 %v3657
        %v3712 = vpop.f32.mrb[0].mxu0
        %v3713 = vadd.f32 0.0, %v3712
        %v3714 = vpop.f32.mrb[0].mxu0
        %v3715 = vpop.f32.mrb[0].mxu0
        %v3716 = vadd.f32 0.0, %v3715
        %v3717 = vpop.f32.mrb[0].mxu0
        %3718 = vmatprep.mubr.bf16.mxu0 0
        %3719 = vmatmul.mubr.bf16.gmra.mrb[0].mxu0 %v3660
        %v3720 = vpop.f32.mrb[0].mxu0
        %v3721 = vadd.f32 0.0, %v3720
        %v3722 = vpop.f32.mrb[0].mxu0
        %v3723 = vpop.f32.mrb[0].mxu0
        %v3724 = vadd.f32 0.0, %v3723
        %v3725 = vpop.f32.mrb[0].mxu0
        %3726 = vdwg.mxu0
        %3727 = vxpose.xlu0.c.b16.start [1/8] %v1798, 128
        %3728 = vxpose.xlu0.c.b16.cont [2/8] 0, 128
        %3729 = vxpose.xlu0.c.b16.cont [3/8] 0, 128
        %3730 = vxpose.xlu0.c.b16.cont [4/8] 0, 128
        %3731 = vxpose.xlu0.c.b16.cont [5/8] 0, 128
        %3732 = vxpose.xlu0.c.b16.cont [6/8] 0, 128
        %3733 = vxpose.xlu0.c.b16.cont [7/8] 0, 128
        %3734 = vxpose.xlu0.c.b16.end [8/8] 0, 128
        %v3735 = vpop.trf.xlu0
        %v3736 = vpop.trf.xlu0
        %v3737 = vpop.trf.xlu0
        %v3738 = vpop.trf.xlu0
        %v3739 = vpop.trf.xlu0
        %v3740 = vpop.trf.xlu0
        %v3741 = vpop.trf.xlu0
        %v3742 = vpop.trf.xlu0
        %v3744 = vsel %vm3556, %v3735, 0
        %v3747 = vsel %vm3556, %v3736, 0
        %v3750 = vsel %vm3556, %v3737, 0
        %v3753 = vsel %vm3556, %v3738, 0
        %3755 = vmatprep.subr.bf16.mxu0 0
        %3756 = vmatpush1.bf16.msra.mxu0 %v2662
        %3757 = vmatprep.subr.bf16.mxu0 0
        %3758 = vmatpush1.bf16.msra.mxu0 0
        %3759 = vmatprep.subr.bf16.mxu0 0
        %3760 = vmatpush1.bf16.msra.mxu0 0
        %3761 = vmatprep.subr.bf16.mxu0 0
        %3762 = vmatpush1.bf16.msra.mxu0 0
        %3763 = vmatprep.subr.bf16.mxu0 0
        %3764 = vmatpush1.bf16.msra.mxu0 0
        %3765 = vmatprep.subr.bf16.mxu0 0
        %3766 = vmatpush1.bf16.msra.mxu0 0
        %3767 = vmatprep.subr.bf16.mxu0 0
        %3768 = vmatpush1.bf16.msra.mxu0 0
        %3769 = vmatprep.subr.bf16.mxu0 0
        %3770 = vmatpush1.bf16.msra.mxu0 0
        %3771 = vmatprep.subr.bf16.mxu0 0
        %3772 = vmatpush1.bf16.msra.mxu0 0
        %3773 = vmatprep.subr.bf16.mxu0 0
        %3774 = vmatpush1.bf16.msra.mxu0 0
        %3775 = vmatprep.subr.bf16.mxu0 0
        %3776 = vmatpush1.bf16.msra.mxu0 0
        %3777 = vmatprep.subr.bf16.mxu0 0
        %3778 = vmatpush1.bf16.msra.mxu0 0
        %3779 = vmatprep.subr.bf16.mxu0 0
        %3780 = vmatpush1.bf16.msra.mxu0 0
        %3781 = vmatprep.subr.bf16.mxu0 0
        %3782 = vmatpush1.bf16.msra.mxu0 0
        %3783 = vmatprep.subr.bf16.mxu0 0
        %3784 = vmatpush1.bf16.msra.mxu0 0
        %3785 = vmatprep.subr.bf16.mxu0 0
        %3786 = vmatpush1.bf16.msra.mxu0 0
        %3787 = vmatprep.mubr.bf16.mxu0 0
        %3788 = vmatmul.mubr.bf16.gmra.mrb[0].mxu0 %v3744
        %v3789 = vpop.f32.mrb[0].mxu0
        %v3790 = vadd.f32 0.0, %v3789
        %v3791 = vpop.f32.mrb[0].mxu0
        %v3792 = vpop.f32.mrb[0].mxu0
        %v3793 = vadd.f32 0.0, %v3792
        %v3794 = vpop.f32.mrb[0].mxu0
        %3795 = vmatprep.mubr.bf16.mxu0 0
        %3796 = vmatmul.mubr.bf16.gmra.mrb[0].mxu0 %v3747
        %v3797 = vpop.f32.mrb[0].mxu0
        %v3798 = vadd.f32 0.0, %v3797
        %v3799 = vpop.f32.mrb[0].mxu0
        %v3800 = vpop.f32.mrb[0].mxu0
        %v3801 = vadd.f32 0.0, %v3800
        %v3802 = vpop.f32.mrb[0].mxu0
        %3803 = vmatprep.mubr.bf16.mxu0 0
        %3804 = vmatmul.mubr.bf16.gmra.mrb[0].mxu0 %v3750
        %v3805 = vpop.f32.mrb[0].mxu0
        %v3806 = vadd.f32 0.0, %v3805
        %v3807 = vpop.f32.mrb[0].mxu0
        %v3808 = vpop.f32.mrb[0].mxu0
        %v3809 = vadd.f32 0.0, %v3808
        %v3810 = vpop.f32.mrb[0].mxu0
        %3811 = vmatprep.mubr.bf16.mxu0 0
        %3812 = vmatmul.mubr.bf16.gmra.mrb[0].mxu0 %v3753
        %v3813 = vpop.f32.mrb[0].mxu0
        %v3814 = vadd.f32 0.0, %v3813
        %v3815 = vpop.f32.mrb[0].mxu0
        %v3816 = vpop.f32.mrb[0].mxu0
        %v3817 = vadd.f32 0.0, %v3816
        %v3818 = vpop.f32.mrb[0].mxu0
        %3819 = vdwg.mxu0
        %3820 = vxpose.xlu0.c.b16.start [1/8] %v1802, 128
        %3821 = vxpose.xlu0.c.b16.cont [2/8] 0, 128
        %3822 = vxpose.xlu0.c.b16.cont [3/8] 0, 128
        %3823 = vxpose.xlu0.c.b16.cont [4/8] 0, 128
        %3824 = vxpose.xlu0.c.b16.cont [5/8] 0, 128
        %3825 = vxpose.xlu0.c.b16.cont [6/8] 0, 128
        %3826 = vxpose.xlu0.c.b16.cont [7/8] 0, 128
        %3827 = vxpose.xlu0.c.b16.end [8/8] 0, 128
        %v3828 = vpop.trf.xlu0
        %v3829 = vpop.trf.xlu0
        %v3830 = vpop.trf.xlu0
        %v3831 = vpop.trf.xlu0
        %v3832 = vpop.trf.xlu0
        %v3833 = vpop.trf.xlu0
        %v3834 = vpop.trf.xlu0
        %v3835 = vpop.trf.xlu0
        %v3837 = vsel %vm3556, %v3828, 0
        %v3840 = vsel %vm3556, %v3829, 0
        %v3843 = vsel %vm3556, %v3830, 0
        %v3846 = vsel %vm3556, %v3831, 0
        %3848 = vmatprep.subr.bf16.mxu0 0
        %3849 = vmatpush1.bf16.msra.mxu0 %v2666
        %3850 = vmatprep.subr.bf16.mxu0 0
        %3851 = vmatpush1.bf16.msra.mxu0 0
        %3852 = vmatprep.subr.bf16.mxu0 0
        %3853 = vmatpush1.bf16.msra.mxu0 0
        %3854 = vmatprep.subr.bf16.mxu0 0
        %3855 = vmatpush1.bf16.msra.mxu0 0
        %3856 = vmatprep.subr.bf16.mxu0 0
        %3857 = vmatpush1.bf16.msra.mxu0 0
        %3858 = vmatprep.subr.bf16.mxu0 0
        %3859 = vmatpush1.bf16.msra.mxu0 0
        %3860 = vmatprep.subr.bf16.mxu0 0
        %3861 = vmatpush1.bf16.msra.mxu0 0
        %3862 = vmatprep.subr.bf16.mxu0 0
        %3863 = vmatpush1.bf16.msra.mxu0 0
        %3864 = vmatprep.subr.bf16.mxu0 0
        %3865 = vmatpush1.bf16.msra.mxu0 0
        %3866 = vmatprep.subr.bf16.mxu0 0
        %3867 = vmatpush1.bf16.msra.mxu0 0
        %3868 = vmatprep.subr.bf16.mxu0 0
        %3869 = vmatpush1.bf16.msra.mxu0 0
        %3870 = vmatprep.subr.bf16.mxu0 0
        %3871 = vmatpush1.bf16.msra.mxu0 0
        %3872 = vmatprep.subr.bf16.mxu0 0
        %3873 = vmatpush1.bf16.msra.mxu0 0
        %3874 = vmatprep.subr.bf16.mxu0 0
        %3875 = vmatpush1.bf16.msra.mxu0 0
        %3876 = vmatprep.subr.bf16.mxu0 0
        %3877 = vmatpush1.bf16.msra.mxu0 0
        %3878 = vmatprep.subr.bf16.mxu0 0
        %3879 = vmatpush1.bf16.msra.mxu0 0
        %3880 = vmatprep.mubr.bf16.mxu0 0
        %3881 = vmatmul.mubr.bf16.gmra.mrb[0].mxu0 %v3837
        %v3882 = vpop.f32.mrb[0].mxu0
        %v3883 = vadd.f32 0.0, %v3882
        %v3884 = vpop.f32.mrb[0].mxu0
        %v3885 = vpop.f32.mrb[0].mxu0
        %v3886 = vadd.f32 0.0, %v3885
        %v3887 = vpop.f32.mrb[0].mxu0
        %3888 = vmatprep.mubr.bf16.mxu0 0
        %3889 = vmatmul.mubr.bf16.gmra.mrb[0].mxu0 %v3840
        %v3890 = vpop.f32.mrb[0].mxu0
        %v3891 = vadd.f32 0.0, %v3890
        %v3892 = vpop.f32.mrb[0].mxu0
        %v3893 = vpop.f32.mrb[0].mxu0
        %v3894 = vadd.f32 0.0, %v3893
        %v3895 = vpop.f32.mrb[0].mxu0
        %3896 = vmatprep.mubr.bf16.mxu0 0
        %3897 = vmatmul.mubr.bf16.gmra.mrb[0].mxu0 %v3843
        %v3898 = vpop.f32.mrb[0].mxu0
        %v3899 = vadd.f32 0.0, %v3898
        %v3900 = vpop.f32.mrb[0].mxu0
        %v3901 = vpop.f32.mrb[0].mxu0
        %v3902 = vadd.f32 0.0, %v3901
        %v3903 = vpop.f32.mrb[0].mxu0
        %3904 = vmatprep.mubr.bf16.mxu0 0
        %3905 = vmatmul.mubr.bf16.gmra.mrb[0].mxu0 %v3846
        %v3906 = vpop.f32.mrb[0].mxu0
        %v3907 = vadd.f32 0.0, %v3906
        %v3908 = vpop.f32.mrb[0].mxu0
        %v3909 = vpop.f32.mrb[0].mxu0
        %v3910 = vadd.f32 0.0, %v3909
        %v3911 = vpop.f32.mrb[0].mxu0
        %3912 = vdwg.mxu0
        %3913 = vxpose.xlu0.c.b16.start [1/8] %v1806, 128
        %3914 = vxpose.xlu0.c.b16.cont [2/8] 0, 128
        %3915 = vxpose.xlu0.c.b16.cont [3/8] 0, 128
        %3916 = vxpose.xlu0.c.b16.cont [4/8] 0, 128
        %3917 = vxpose.xlu0.c.b16.cont [5/8] 0, 128
        %3918 = vxpose.xlu0.c.b16.cont [6/8] 0, 128
        %3919 = vxpose.xlu0.c.b16.cont [7/8] 0, 128
        %3920 = vxpose.xlu0.c.b16.end [8/8] 0, 128
        %v3921 = vpop.trf.xlu0
        %v3922 = vpop.trf.xlu0
        %v3923 = vpop.trf.xlu0
        %v3924 = vpop.trf.xlu0
        %v3925 = vpop.trf.xlu0
        %v3926 = vpop.trf.xlu0
        %v3927 = vpop.trf.xlu0
        %v3928 = vpop.trf.xlu0
        %v3930 = vsel %vm3556, %v3921, 0
        %v3933 = vsel %vm3556, %v3922, 0
        %v3936 = vsel %vm3556, %v3923, 0
        %v3939 = vsel %vm3556, %v3924, 0
        %3941 = vmatprep.subr.bf16.mxu0 0
        %3942 = vmatpush1.bf16.msra.mxu0 %v2670
        %3943 = vmatprep.subr.bf16.mxu0 0
        %3944 = vmatpush1.bf16.msra.mxu0 0
        %3945 = vmatprep.subr.bf16.mxu0 0
        %3946 = vmatpush1.bf16.msra.mxu0 0
        %3947 = vmatprep.subr.bf16.mxu0 0
        %3948 = vmatpush1.bf16.msra.mxu0 0
        %3949 = vmatprep.subr.bf16.mxu0 0
        %3950 = vmatpush1.bf16.msra.mxu0 0
        %3951 = vmatprep.subr.bf16.mxu0 0
        %3952 = vmatpush1.bf16.msra.mxu0 0
        %3953 = vmatprep.subr.bf16.mxu0 0
        %3954 = vmatpush1.bf16.msra.mxu0 0
        %3955 = vmatprep.subr.bf16.mxu0 0
        %3956 = vmatpush1.bf16.msra.mxu0 0
        %3957 = vmatprep.subr.bf16.mxu0 0
        %3958 = vmatpush1.bf16.msra.mxu0 0
        %3959 = vmatprep.subr.bf16.mxu0 0
        %3960 = vmatpush1.bf16.msra.mxu0 0
        %3961 = vmatprep.subr.bf16.mxu0 0
        %3962 = vmatpush1.bf16.msra.mxu0 0
        %3963 = vmatprep.subr.bf16.mxu0 0
        %3964 = vmatpush1.bf16.msra.mxu0 0
        %3965 = vmatprep.subr.bf16.mxu0 0
        %3966 = vmatpush1.bf16.msra.mxu0 0
        %3967 = vmatprep.subr.bf16.mxu0 0
        %3968 = vmatpush1.bf16.msra.mxu0 0
        %3969 = vmatprep.subr.bf16.mxu0 0
        %3970 = vmatpush1.bf16.msra.mxu0 0
        %3971 = vmatprep.subr.bf16.mxu0 0
        %3972 = vmatpush1.bf16.msra.mxu0 0
        %3973 = vmatprep.mubr.bf16.mxu0 0
        %3974 = vmatmul.mubr.bf16.gmra.mrb[0].mxu0 %v3930
        %v3975 = vpop.f32.mrb[0].mxu0
        %v3976 = vadd.f32 0.0, %v3975
        %v3977 = vpop.f32.mrb[0].mxu0
        %v3978 = vpop.f32.mrb[0].mxu0
        %v3979 = vadd.f32 0.0, %v3978
        %v3980 = vpop.f32.mrb[0].mxu0
        %3981 = vmatprep.mubr.bf16.mxu0 0
        %3982 = vmatmul.mubr.bf16.gmra.mrb[0].mxu0 %v3933
        %v3983 = vpop.f32.mrb[0].mxu0
        %v3984 = vadd.f32 0.0, %v3983
        %v3985 = vpop.f32.mrb[0].mxu0
        %v3986 = vpop.f32.mrb[0].mxu0
        %v3987 = vadd.f32 0.0, %v3986
        %v3988 = vpop.f32.mrb[0].mxu0
        %3989 = vmatprep.mubr.bf16.mxu0 0
        %3990 = vmatmul.mubr.bf16.gmra.mrb[0].mxu0 %v3936
        %v3991 = vpop.f32.mrb[0].mxu0
        %v3992 = vadd.f32 0.0, %v3991
        %v3993 = vpop.f32.mrb[0].mxu0
        %v3994 = vpop.f32.mrb[0].mxu0
        %v3995 = vadd.f32 0.0, %v3994
        %v3996 = vpop.f32.mrb[0].mxu0
        %3997 = vmatprep.mubr.bf16.mxu0 0
        %3998 = vmatmul.mubr.bf16.gmra.mrb[0].mxu0 %v3939
        %v3999 = vpop.f32.mrb[0].mxu0
        %v4000 = vadd.f32 0.0, %v3999
        %v4001 = vpop.f32.mrb[0].mxu0
        %v4002 = vpop.f32.mrb[0].mxu0
        %v4003 = vadd.f32 0.0, %v4002
        %v4004 = vpop.f32.mrb[0].mxu0
        %4005 = vdwg.mxu0
        %4006 = vxpose.xlu0.c.b16.start [1/8] %v1810, 128
        %4007 = vxpose.xlu0.c.b16.cont [2/8] 0, 128
        %4008 = vxpose.xlu0.c.b16.cont [3/8] 0, 128
        %4009 = vxpose.xlu0.c.b16.cont [4/8] 0, 128
        %4010 = vxpose.xlu0.c.b16.cont [5/8] 0, 128
        %4011 = vxpose.xlu0.c.b16.cont [6/8] 0, 128
        %4012 = vxpose.xlu0.c.b16.cont [7/8] 0, 128
        %4013 = vxpose.xlu0.c.b16.end [8/8] 0, 128
        %v4014 = vpop.trf.xlu0
        %v4015 = vpop.trf.xlu0
        %v4016 = vpop.trf.xlu0
        %v4017 = vpop.trf.xlu0
        %v4018 = vpop.trf.xlu0
        %v4019 = vpop.trf.xlu0
        %v4020 = vpop.trf.xlu0
        %v4021 = vpop.trf.xlu0
        %v4023 = vsel %vm3556, %v4014, 0
        %v4026 = vsel %vm3556, %v4015, 0
        %v4029 = vsel %vm3556, %v4016, 0
        %v4032 = vsel %vm3556, %v4017, 0
        %4034 = vmatprep.subr.bf16.mxu0 0
        %4035 = vmatpush1.bf16.msra.mxu0 %v2674
        %4036 = vmatprep.subr.bf16.mxu0 0
        %4037 = vmatpush1.bf16.msra.mxu0 0
        %4038 = vmatprep.subr.bf16.mxu0 0
        %4039 = vmatpush1.bf16.msra.mxu0 0
        %4040 = vmatprep.subr.bf16.mxu0 0
        %4041 = vmatpush1.bf16.msra.mxu0 0
        %4042 = vmatprep.subr.bf16.mxu0 0
        %4043 = vmatpush1.bf16.msra.mxu0 0
        %4044 = vmatprep.subr.bf16.mxu0 0
        %4045 = vmatpush1.bf16.msra.mxu0 0
        %4046 = vmatprep.subr.bf16.mxu0 0
        %4047 = vmatpush1.bf16.msra.mxu0 0
        %4048 = vmatprep.subr.bf16.mxu0 0
        %4049 = vmatpush1.bf16.msra.mxu0 0
        %4050 = vmatprep.subr.bf16.mxu0 0
        %4051 = vmatpush1.bf16.msra.mxu0 0
        %4052 = vmatprep.subr.bf16.mxu0 0
        %4053 = vmatpush1.bf16.msra.mxu0 0
        %4054 = vmatprep.subr.bf16.mxu0 0
        %4055 = vmatpush1.bf16.msra.mxu0 0
        %4056 = vmatprep.subr.bf16.mxu0 0
        %4057 = vmatpush1.bf16.msra.mxu0 0
        %4058 = vmatprep.subr.bf16.mxu0 0
        %4059 = vmatpush1.bf16.msra.mxu0 0
        %4060 = vmatprep.subr.bf16.mxu0 0
        %4061 = vmatpush1.bf16.msra.mxu0 0
        %4062 = vmatprep.subr.bf16.mxu0 0
        %4063 = vmatpush1.bf16.msra.mxu0 0
        %4064 = vmatprep.subr.bf16.mxu0 0
        %4065 = vmatpush1.bf16.msra.mxu0 0
        %4066 = vmatprep.mubr.bf16.mxu0 0
        %4067 = vmatmul.mubr.bf16.gmra.mrb[0].mxu0 %v4023
        %v4068 = vpop.f32.mrb[0].mxu0
        %v4069 = vadd.f32 0.0, %v4068
        %v4070 = vpop.f32.mrb[0].mxu0
        %v4071 = vpop.f32.mrb[0].mxu0
        %v4072 = vadd.f32 0.0, %v4071
        %v4073 = vpop.f32.mrb[0].mxu0
        %4074 = vmatprep.mubr.bf16.mxu0 0
        %4075 = vmatmul.mubr.bf16.gmra.mrb[0].mxu0 %v4026
        %v4076 = vpop.f32.mrb[0].mxu0
        %v4077 = vadd.f32 0.0, %v4076
        %v4078 = vpop.f32.mrb[0].mxu0
        %v4079 = vpop.f32.mrb[0].mxu0
        %v4080 = vadd.f32 0.0, %v4079
        %v4081 = vpop.f32.mrb[0].mxu0
        %4082 = vmatprep.mubr.bf16.mxu0 0
        %4083 = vmatmul.mubr.bf16.gmra.mrb[0].mxu0 %v4029
        %v4084 = vpop.f32.mrb[0].mxu0
        %v4085 = vadd.f32 0.0, %v4084
        %v4086 = vpop.f32.mrb[0].mxu0
        %v4087 = vpop.f32.mrb[0].mxu0
        %v4088 = vadd.f32 0.0, %v4087
        %v4089 = vpop.f32.mrb[0].mxu0
        %4090 = vmatprep.mubr.bf16.mxu0 0
        %4091 = vmatmul.mubr.bf16.gmra.mrb[0].mxu0 %v4032
        %v4092 = vpop.f32.mrb[0].mxu0
        %v4093 = vadd.f32 0.0, %v4092
        %v4094 = vpop.f32.mrb[0].mxu0
        %v4095 = vpop.f32.mrb[0].mxu0
        %v4096 = vadd.f32 0.0, %v4095
        %v4097 = vpop.f32.mrb[0].mxu0
        %4098 = vdwg.mxu0
        %4099 = vxpose.xlu0.c.b16.start [1/8] %v1814, 128
        %4100 = vxpose.xlu0.c.b16.cont [2/8] 0, 128
        %4101 = vxpose.xlu0.c.b16.cont [3/8] 0, 128
        %4102 = vxpose.xlu0.c.b16.cont [4/8] 0, 128
        %4103 = vxpose.xlu0.c.b16.cont [5/8] 0, 128
        %4104 = vxpose.xlu0.c.b16.cont [6/8] 0, 128
        %4105 = vxpose.xlu0.c.b16.cont [7/8] 0, 128
        %4106 = vxpose.xlu0.c.b16.end [8/8] 0, 128
        %v4107 = vpop.trf.xlu0
        %v4108 = vpop.trf.xlu0
        %v4109 = vpop.trf.xlu0
        %v4110 = vpop.trf.xlu0
        %v4111 = vpop.trf.xlu0
        %v4112 = vpop.trf.xlu0
        %v4113 = vpop.trf.xlu0
        %v4114 = vpop.trf.xlu0
        %v4116 = vsel %vm3556, %v4107, 0
        %v4119 = vsel %vm3556, %v4108, 0
        %v4122 = vsel %vm3556, %v4109, 0
        %v4125 = vsel %vm3556, %v4110, 0
        %4127 = vmatprep.subr.bf16.mxu0 0
        %4128 = vmatpush1.bf16.msra.mxu0 %v2678
        %4129 = vmatprep.subr.bf16.mxu0 0
        %4130 = vmatpush1.bf16.msra.mxu0 0
        %4131 = vmatprep.subr.bf16.mxu0 0
        %4132 = vmatpush1.bf16.msra.mxu0 0
        %4133 = vmatprep.subr.bf16.mxu0 0
        %4134 = vmatpush1.bf16.msra.mxu0 0
        %4135 = vmatprep.subr.bf16.mxu0 0
        %4136 = vmatpush1.bf16.msra.mxu0 0
        %4137 = vmatprep.subr.bf16.mxu0 0
        %4138 = vmatpush1.bf16.msra.mxu0 0
        %4139 = vmatprep.subr.bf16.mxu0 0
        %4140 = vmatpush1.bf16.msra.mxu0 0
        %4141 = vmatprep.subr.bf16.mxu0 0
        %4142 = vmatpush1.bf16.msra.mxu0 0
        %4143 = vmatprep.subr.bf16.mxu0 0
        %4144 = vmatpush1.bf16.msra.mxu0 0
        %4145 = vmatprep.subr.bf16.mxu0 0
        %4146 = vmatpush1.bf16.msra.mxu0 0
        %4147 = vmatprep.subr.bf16.mxu0 0
        %4148 = vmatpush1.bf16.msra.mxu0 0
        %4149 = vmatprep.subr.bf16.mxu0 0
        %4150 = vmatpush1.bf16.msra.mxu0 0
        %4151 = vmatprep.subr.bf16.mxu0 0
        %4152 = vmatpush1.bf16.msra.mxu0 0
        %4153 = vmatprep.subr.bf16.mxu0 0
        %4154 = vmatpush1.bf16.msra.mxu0 0
        %4155 = vmatprep.subr.bf16.mxu0 0
        %4156 = vmatpush1.bf16.msra.mxu0 0
        %4157 = vmatprep.subr.bf16.mxu0 0
        %4158 = vmatpush1.bf16.msra.mxu0 0
        %4159 = vmatprep.mubr.bf16.mxu0 0
        %4160 = vmatmul.mubr.bf16.gmra.mrb[0].mxu0 %v4116
        %v4161 = vpop.f32.mrb[0].mxu0
        %v4162 = vadd.f32 0.0, %v4161
        %v4163 = vpop.f32.mrb[0].mxu0
        %v4164 = vpop.f32.mrb[0].mxu0
        %v4165 = vadd.f32 0.0, %v4164
        %v4166 = vpop.f32.mrb[0].mxu0
        %4167 = vmatprep.mubr.bf16.mxu0 0
        %4168 = vmatmul.mubr.bf16.gmra.mrb[0].mxu0 %v4119
        %v4169 = vpop.f32.mrb[0].mxu0
        %v4170 = vadd.f32 0.0, %v4169
        %v4171 = vpop.f32.mrb[0].mxu0
        %v4172 = vpop.f32.mrb[0].mxu0
        %v4173 = vadd.f32 0.0, %v4172
        %v4174 = vpop.f32.mrb[0].mxu0
        %4175 = vmatprep.mubr.bf16.mxu0 0
        %4176 = vmatmul.mubr.bf16.gmra.mrb[0].mxu0 %v4122
        %v4177 = vpop.f32.mrb[0].mxu0
        %v4178 = vadd.f32 0.0, %v4177
        %v4179 = vpop.f32.mrb[0].mxu0
        %v4180 = vpop.f32.mrb[0].mxu0
        %v4181 = vadd.f32 0.0, %v4180
        %v4182 = vpop.f32.mrb[0].mxu0
        %4183 = vmatprep.mubr.bf16.mxu0 0
        %4184 = vmatmul.mubr.bf16.gmra.mrb[0].mxu0 %v4125
        %v4185 = vpop.f32.mrb[0].mxu0
        %v4186 = vadd.f32 0.0, %v4185
        %v4187 = vpop.f32.mrb[0].mxu0
        %v4188 = vpop.f32.mrb[0].mxu0
        %v4189 = vadd.f32 0.0, %v4188
        %v4190 = vpop.f32.mrb[0].mxu0
        %4191 = vdwg.mxu0
        %4192 = vxpose.xlu0.c.b16.start [1/8] %v1818, 128
        %4193 = vxpose.xlu0.c.b16.cont [2/8] 0, 128
        %4194 = vxpose.xlu0.c.b16.cont [3/8] 0, 128
        %4195 = vxpose.xlu0.c.b16.cont [4/8] 0, 128
        %4196 = vxpose.xlu0.c.b16.cont [5/8] 0, 128
        %4197 = vxpose.xlu0.c.b16.cont [6/8] 0, 128
        %4198 = vxpose.xlu0.c.b16.cont [7/8] 0, 128
        %4199 = vxpose.xlu0.c.b16.end [8/8] 0, 128
        %v4200 = vpop.trf.xlu0
        %v4201 = vpop.trf.xlu0
        %v4202 = vpop.trf.xlu0
        %v4203 = vpop.trf.xlu0
        %v4204 = vpop.trf.xlu0
        %v4205 = vpop.trf.xlu0
        %v4206 = vpop.trf.xlu0
        %v4207 = vpop.trf.xlu0
        %v4209 = vsel %vm3556, %v4200, 0
        %v4212 = vsel %vm3556, %v4201, 0
        %v4215 = vsel %vm3556, %v4202, 0
        %v4218 = vsel %vm3556, %v4203, 0
        %4220 = vmatprep.subr.bf16.mxu0 0
        %4221 = vmatpush1.bf16.msra.mxu0 %v2682
        %4222 = vmatprep.subr.bf16.mxu0 0
        %4223 = vmatpush1.bf16.msra.mxu0 0
        %4224 = vmatprep.subr.bf16.mxu0 0
        %4225 = vmatpush1.bf16.msra.mxu0 0
        %4226 = vmatprep.subr.bf16.mxu0 0
        %4227 = vmatpush1.bf16.msra.mxu0 0
        %4228 = vmatprep.subr.bf16.mxu0 0
        %4229 = vmatpush1.bf16.msra.mxu0 0
        %4230 = vmatprep.subr.bf16.mxu0 0
        %4231 = vmatpush1.bf16.msra.mxu0 0
        %4232 = vmatprep.subr.bf16.mxu0 0
        %4233 = vmatpush1.bf16.msra.mxu0 0
        %4234 = vmatprep.subr.bf16.mxu0 0
        %4235 = vmatpush1.bf16.msra.mxu0 0
        %4236 = vmatprep.subr.bf16.mxu0 0
        %4237 = vmatpush1.bf16.msra.mxu0 0
        %4238 = vmatprep.subr.bf16.mxu0 0
        %4239 = vmatpush1.bf16.msra.mxu0 0
        %4240 = vmatprep.subr.bf16.mxu0 0
        %4241 = vmatpush1.bf16.msra.mxu0 0
        %4242 = vmatprep.subr.bf16.mxu0 0
        %4243 = vmatpush1.bf16.msra.mxu0 0
        %4244 = vmatprep.subr.bf16.mxu0 0
        %4245 = vmatpush1.bf16.msra.mxu0 0
        %4246 = vmatprep.subr.bf16.mxu0 0
        %4247 = vmatpush1.bf16.msra.mxu0 0
        %4248 = vmatprep.subr.bf16.mxu0 0
        %4249 = vmatpush1.bf16.msra.mxu0 0
        %4250 = vmatprep.subr.bf16.mxu0 0
        %4251 = vmatpush1.bf16.msra.mxu0 0
        %4252 = vmatprep.mubr.bf16.mxu0 0
        %4253 = vmatmul.mubr.bf16.gmra.mrb[0].mxu0 %v4209
        %v4254 = vpop.f32.mrb[0].mxu0
        %v4255 = vadd.f32 0.0, %v4254
        %v4256 = vpop.f32.mrb[0].mxu0
        %v4257 = vpop.f32.mrb[0].mxu0
        %v4258 = vadd.f32 0.0, %v4257
        %v4259 = vpop.f32.mrb[0].mxu0
        %4260 = vmatprep.mubr.bf16.mxu0 0
        %4261 = vmatmul.mubr.bf16.gmra.mrb[0].mxu0 %v4212
        %v4262 = vpop.f32.mrb[0].mxu0
        %v4263 = vadd.f32 0.0, %v4262
        %v4264 = vpop.f32.mrb[0].mxu0
        %v4265 = vpop.f32.mrb[0].mxu0
        %v4266 = vadd.f32 0.0, %v4265
        %v4267 = vpop.f32.mrb[0].mxu0
        %4268 = vmatprep.mubr.bf16.mxu0 0
        %4269 = vmatmul.mubr.bf16.gmra.mrb[0].mxu0 %v4215
        %v4270 = vpop.f32.mrb[0].mxu0
        %v4271 = vadd.f32 0.0, %v4270
        %v4272 = vpop.f32.mrb[0].mxu0
        %v4273 = vpop.f32.mrb[0].mxu0
        %v4274 = vadd.f32 0.0, %v4273
        %v4275 = vpop.f32.mrb[0].mxu0
        %4276 = vmatprep.mubr.bf16.mxu0 0
        %4277 = vmatmul.mubr.bf16.gmra.mrb[0].mxu0 %v4218
        %v4278 = vpop.f32.mrb[0].mxu0
        %v4279 = vadd.f32 0.0, %v4278
        %v4280 = vpop.f32.mrb[0].mxu0
        %v4281 = vpop.f32.mrb[0].mxu0
        %v4282 = vadd.f32 0.0, %v4281
        %v4283 = vpop.f32.mrb[0].mxu0
        %4284 = vdwg.mxu0
        %v4285 = vsel %vm575, %v3604, -inf
        %4286 = vmax.xlane.f32.xlu0 %v4285
        %v4287 = vpop.xlane.xlu0 %4286
        %v4288 = vsel %vm575, %v3607, -inf
        %4289 = vmax.xlane.f32.xlu0 %v4288
        %v4290 = vpop.xlane.xlu0 %4289
        %v4291 = vsel %vm575, %v3612, -inf
        %4292 = vmax.xlane.f32.xlu0 %v4291
        %v4293 = vpop.xlane.xlu0 %4292
        %v4294 = vsel %vm575, %v3615, -inf
        %4295 = vmax.xlane.f32.xlu0 %v4294
        %v4296 = vpop.xlane.xlu0 %4295
        %v4297 = vsel %vm575, %v3620, -inf
        %4298 = vmax.xlane.f32.xlu0 %v4297
        %v4299 = vpop.xlane.xlu0 %4298
        %v4300 = vsel %vm575, %v3623, -inf
        %4301 = vmax.xlane.f32.xlu0 %v4300
        %v4302 = vpop.xlane.xlu0 %4301
        %v4303 = vsel %vm575, %v3628, -inf
        %4304 = vmax.xlane.f32.xlu0 %v4303
        %v4305 = vpop.xlane.xlu0 %4304
        %v4306 = vsel %vm575, %v3631, -inf
        %4307 = vmax.xlane.f32.xlu0 %v4306
        %v4308 = vpop.xlane.xlu0 %4307
        %v4309 = vsel %vm575, %v3697, -inf
        %4310 = vmax.xlane.f32.xlu0 %v4309
        %v4311 = vpop.xlane.xlu0 %4310
        %v4312 = vsel %vm575, %v3700, -inf
        %4313 = vmax.xlane.f32.xlu0 %v4312
        %v4314 = vpop.xlane.xlu0 %4313
        %v4315 = vsel %vm575, %v3705, -inf
        %4316 = vmax.xlane.f32.xlu0 %v4315
        %v4317 = vpop.xlane.xlu0 %4316
        %v4318 = vsel %vm575, %v3708, -inf
        %4319 = vmax.xlane.f32.xlu0 %v4318
        %v4320 = vpop.xlane.xlu0 %4319
        %v4321 = vsel %vm575, %v3713, -inf
        %4322 = vmax.xlane.f32.xlu0 %v4321
        %v4323 = vpop.xlane.xlu0 %4322
        %v4324 = vsel %vm575, %v3716, -inf
        %4325 = vmax.xlane.f32.xlu0 %v4324
        %v4326 = vpop.xlane.xlu0 %4325
        %v4327 = vsel %vm575, %v3721, -inf
        %4328 = vmax.xlane.f32.xlu0 %v4327
        %v4329 = vpop.xlane.xlu0 %4328
        %v4330 = vsel %vm575, %v3724, -inf
        %4331 = vmax.xlane.f32.xlu0 %v4330
        %v4332 = vpop.xlane.xlu0 %4331
        %v4333 = vsel %vm575, %v3790, -inf
        %4334 = vmax.xlane.f32.xlu0 %v4333
        %v4335 = vpop.xlane.xlu0 %4334
        %v4336 = vsel %vm575, %v3793, -inf
        %4337 = vmax.xlane.f32.xlu0 %v4336
        %v4338 = vpop.xlane.xlu0 %4337
        %v4339 = vsel %vm575, %v3798, -inf
        %4340 = vmax.xlane.f32.xlu0 %v4339
        %v4341 = vpop.xlane.xlu0 %4340
        %v4342 = vsel %vm575, %v3801, -inf
        %4343 = vmax.xlane.f32.xlu0 %v4342
        %v4344 = vpop.xlane.xlu0 %4343
        %v4345 = vsel %vm575, %v3806, -inf
        %4346 = vmax.xlane.f32.xlu0 %v4345
        %v4347 = vpop.xlane.xlu0 %4346
        %v4348 = vsel %vm575, %v3809, -inf
        %4349 = vmax.xlane.f32.xlu0 %v4348
        %v4350 = vpop.xlane.xlu0 %4349
        %v4351 = vsel %vm575, %v3814, -inf
        %4352 = vmax.xlane.f32.xlu0 %v4351
        %v4353 = vpop.xlane.xlu0 %4352
        %v4354 = vsel %vm575, %v3817, -inf
        %4355 = vmax.xlane.f32.xlu0 %v4354
        %v4356 = vpop.xlane.xlu0 %4355
        %v4357 = vsel %vm575, %v3883, -inf
        %4358 = vmax.xlane.f32.xlu0 %v4357
        %v4359 = vpop.xlane.xlu0 %4358
        %v4360 = vsel %vm575, %v3886, -inf
        %4361 = vmax.xlane.f32.xlu0 %v4360
        %v4362 = vpop.xlane.xlu0 %4361
        %v4363 = vsel %vm575, %v3891, -inf
        %4364 = vmax.xlane.f32.xlu0 %v4363
        %v4365 = vpop.xlane.xlu0 %4364
        %v4366 = vsel %vm575, %v3894, -inf
        %4367 = vmax.xlane.f32.xlu0 %v4366
        %v4368 = vpop.xlane.xlu0 %4367
        %v4369 = vsel %vm575, %v3899, -inf
        %4370 = vmax.xlane.f32.xlu0 %v4369
        %v4371 = vpop.xlane.xlu0 %4370
        %v4372 = vsel %vm575, %v3902, -inf
        %4373 = vmax.xlane.f32.xlu0 %v4372
        %v4374 = vpop.xlane.xlu0 %4373
        %v4375 = vsel %vm575, %v3907, -inf
        %4376 = vmax.xlane.f32.xlu0 %v4375
        %v4377 = vpop.xlane.xlu0 %4376
        %v4378 = vsel %vm575, %v3910, -inf
        %4379 = vmax.xlane.f32.xlu0 %v4378
        %v4380 = vpop.xlane.xlu0 %4379
        %v4381 = vsel %vm575, %v3976, -inf
        %4382 = vmax.xlane.f32.xlu0 %v4381
        %v4383 = vpop.xlane.xlu0 %4382
        %v4384 = vsel %vm575, %v3979, -inf
        %4385 = vmax.xlane.f32.xlu0 %v4384
        %v4386 = vpop.xlane.xlu0 %4385
        %v4387 = vsel %vm575, %v3984, -inf
        %4388 = vmax.xlane.f32.xlu0 %v4387
        %v4389 = vpop.xlane.xlu0 %4388
        %v4390 = vsel %vm575, %v3987, -inf
        %4391 = vmax.xlane.f32.xlu0 %v4390
        %v4392 = vpop.xlane.xlu0 %4391
        %v4393 = vsel %vm575, %v3992, -inf
        %4394 = vmax.xlane.f32.xlu0 %v4393
        %v4395 = vpop.xlane.xlu0 %4394
        %v4396 = vsel %vm575, %v3995, -inf
        %4397 = vmax.xlane.f32.xlu0 %v4396
        %v4398 = vpop.xlane.xlu0 %4397
        %v4399 = vsel %vm575, %v4000, -inf
        %4400 = vmax.xlane.f32.xlu0 %v4399
        %v4401 = vpop.xlane.xlu0 %4400
        %v4402 = vsel %vm575, %v4003, -inf
        %4403 = vmax.xlane.f32.xlu0 %v4402
        %v4404 = vpop.xlane.xlu0 %4403
        %v4405 = vsel %vm575, %v4069, -inf
        %4406 = vmax.xlane.f32.xlu0 %v4405
        %v4407 = vpop.xlane.xlu0 %4406
        %v4408 = vsel %vm575, %v4072, -inf
        %4409 = vmax.xlane.f32.xlu0 %v4408
        %v4410 = vpop.xlane.xlu0 %4409
        %v4411 = vsel %vm575, %v4077, -inf
        %4412 = vmax.xlane.f32.xlu0 %v4411
        %v4413 = vpop.xlane.xlu0 %4412
        %v4414 = vsel %vm575, %v4080, -inf
        %4415 = vmax.xlane.f32.xlu0 %v4414
        %v4416 = vpop.xlane.xlu0 %4415
        %v4417 = vsel %vm575, %v4085, -inf
        %4418 = vmax.xlane.f32.xlu0 %v4417
        %v4419 = vpop.xlane.xlu0 %4418
        %v4420 = vsel %vm575, %v4088, -inf
        %4421 = vmax.xlane.f32.xlu0 %v4420
        %v4422 = vpop.xlane.xlu0 %4421
        %v4423 = vsel %vm575, %v4093, -inf
        %4424 = vmax.xlane.f32.xlu0 %v4423
        %v4425 = vpop.xlane.xlu0 %4424
        %v4426 = vsel %vm575, %v4096, -inf
        %4427 = vmax.xlane.f32.xlu0 %v4426
        %v4428 = vpop.xlane.xlu0 %4427
        %v4429 = vsel %vm575, %v4162, -inf
        %4430 = vmax.xlane.f32.xlu0 %v4429
        %v4431 = vpop.xlane.xlu0 %4430
        %v4432 = vsel %vm575, %v4165, -inf
        %4433 = vmax.xlane.f32.xlu0 %v4432
        %v4434 = vpop.xlane.xlu0 %4433
        %v4435 = vsel %vm575, %v4170, -inf
        %4436 = vmax.xlane.f32.xlu0 %v4435
        %v4437 = vpop.xlane.xlu0 %4436
        %v4438 = vsel %vm575, %v4173, -inf
        %4439 = vmax.xlane.f32.xlu0 %v4438
        %v4440 = vpop.xlane.xlu0 %4439
        %v4441 = vsel %vm575, %v4178, -inf
        %4442 = vmax.xlane.f32.xlu0 %v4441
        %v4443 = vpop.xlane.xlu0 %4442
        %v4444 = vsel %vm575, %v4181, -inf
        %4445 = vmax.xlane.f32.xlu0 %v4444
        %v4446 = vpop.xlane.xlu0 %4445
        %v4447 = vsel %vm575, %v4186, -inf
        %4448 = vmax.xlane.f32.xlu0 %v4447
        %v4449 = vpop.xlane.xlu0 %4448
        %v4450 = vsel %vm575, %v4189, -inf
        %4451 = vmax.xlane.f32.xlu0 %v4450
        %v4452 = vpop.xlane.xlu0 %4451
        %v4453 = vsel %vm575, %v4255, -inf
        %4454 = vmax.xlane.f32.xlu0 %v4453
        %v4455 = vpop.xlane.xlu0 %4454
        %v4456 = vsel %vm575, %v4258, -inf
        %4457 = vmax.xlane.f32.xlu0 %v4456
        %v4458 = vpop.xlane.xlu0 %4457
        %v4459 = vsel %vm575, %v4263, -inf
        %4460 = vmax.xlane.f32.xlu0 %v4459
        %v4461 = vpop.xlane.xlu0 %4460
        %v4462 = vsel %vm575, %v4266, -inf
        %4463 = vmax.xlane.f32.xlu0 %v4462
        %v4464 = vpop.xlane.xlu0 %4463
        %v4465 = vsel %vm575, %v4271, -inf
        %4466 = vmax.xlane.f32.xlu0 %v4465
        %v4467 = vpop.xlane.xlu0 %4466
        %v4468 = vsel %vm575, %v4274, -inf
        %4469 = vmax.xlane.f32.xlu0 %v4468
        %v4470 = vpop.xlane.xlu0 %4469
        %v4471 = vsel %vm575, %v4279, -inf
        %4472 = vmax.xlane.f32.xlu0 %v4471
        %v4473 = vpop.xlane.xlu0 %4472
        %v4474 = vsel %vm575, %v4282, -inf
        %4475 = vmax.xlane.f32.xlu0 %v4474
        %v4476 = vpop.xlane.xlu0 %4475
        %v4477 = vsub.f32 %v3604, %v4287
        %v4478 = vsub.f32 %v3607, %v4290
        %v4479 = vsub.f32 %v3612, %v4293
        %v4480 = vsub.f32 %v3615, %v4296
        %v4481 = vsub.f32 %v3620, %v4299
        %v4482 = vsub.f32 %v3623, %v4302
        %v4483 = vsub.f32 %v3628, %v4305
        %v4484 = vsub.f32 %v3631, %v4308
        %v4485 = vsub.f32 %v3697, %v4311
        %v4486 = vsub.f32 %v3700, %v4314
        %v4487 = vsub.f32 %v3705, %v4317
        %v4488 = vsub.f32 %v3708, %v4320
        %v4489 = vsub.f32 %v3713, %v4323
        %v4490 = vsub.f32 %v3716, %v4326
        %v4491 = vsub.f32 %v3721, %v4329
        %v4492 = vsub.f32 %v3724, %v4332
        %v4493 = vsub.f32 %v3790, %v4335
        %v4494 = vsub.f32 %v3793, %v4338
        %v4495 = vsub.f32 %v3798, %v4341
        %v4496 = vsub.f32 %v3801, %v4344
        %v4497 = vsub.f32 %v3806, %v4347
        %v4498 = vsub.f32 %v3809, %v4350
        %v4499 = vsub.f32 %v3814, %v4353
        %v4500 = vsub.f32 %v3817, %v4356
        %v4501 = vsub.f32 %v3883, %v4359
        %v4502 = vsub.f32 %v3886, %v4362
        %v4503 = vsub.f32 %v3891, %v4365
        %v4504 = vsub.f32 %v3894, %v4368
        %v4505 = vsub.f32 %v3899, %v4371
        %v4506 = vsub.f32 %v3902, %v4374
        %v4507 = vsub.f32 %v3907, %v4377
        %v4508 = vsub.f32 %v3910, %v4380
        %v4509 = vsub.f32 %v3976, %v4383
        %v4510 = vsub.f32 %v3979, %v4386
        %v4511 = vsub.f32 %v3984, %v4389
        %v4512 = vsub.f32 %v3987, %v4392
        %v4513 = vsub.f32 %v3992, %v4395
        %v4514 = vsub.f32 %v3995, %v4398
        %v4515 = vsub.f32 %v4000, %v4401
        %v4516 = vsub.f32 %v4003, %v4404
        %v4517 = vsub.f32 %v4069, %v4407
        %v4518 = vsub.f32 %v4072, %v4410
        %v4519 = vsub.f32 %v4077, %v4413
        %v4520 = vsub.f32 %v4080, %v4416
        %v4521 = vsub.f32 %v4085, %v4419
        %v4522 = vsub.f32 %v4088, %v4422
        %v4523 = vsub.f32 %v4093, %v4425
        %v4524 = vsub.f32 %v4096, %v4428
        %v4525 = vsub.f32 %v4162, %v4431
        %v4526 = vsub.f32 %v4165, %v4434
        %v4527 = vsub.f32 %v4170, %v4437
        %v4528 = vsub.f32 %v4173, %v4440
        %v4529 = vsub.f32 %v4178, %v4443
        %v4530 = vsub.f32 %v4181, %v4446
        %v4531 = vsub.f32 %v4186, %v4449
        %v4532 = vsub.f32 %v4189, %v4452
        %v4533 = vsub.f32 %v4255, %v4455
        %v4534 = vsub.f32 %v4258, %v4458
        %v4535 = vsub.f32 %v4263, %v4461
        %v4536 = vsub.f32 %v4266, %v4464
        %v4537 = vsub.f32 %v4271, %v4467
        %v4538 = vsub.f32 %v4274, %v4470
        %v4539 = vsub.f32 %v4279, %v4473
        %v4540 = vsub.f32 %v4282, %v4476
        %v4541 = vmul.f32 %v4477, 1.442695
        %v4542 = vpow.pop %v4541
        %v4543 = vmul.f32 %v4478, 1.442695
        %v4544 = vpow.pop %v4543
        %v4545 = vmul.f32 %v4479, 1.442695
        %v4546 = vpow.pop %v4545
        %v4547 = vmul.f32 %v4480, 1.442695
        %v4548 = vpow.pop %v4547
        %v4549 = vmul.f32 %v4481, 1.442695
        %v4550 = vpow.pop %v4549
        %v4551 = vmul.f32 %v4482, 1.442695
        %v4552 = vpow.pop %v4551
        %v4553 = vmul.f32 %v4483, 1.442695
        %v4554 = vpow.pop %v4553
        %v4555 = vmul.f32 %v4484, 1.442695
        %v4556 = vpow.pop %v4555
        %v4557 = vmul.f32 %v4485, 1.442695
        %v4558 = vpow.pop %v4557
        %v4559 = vmul.f32 %v4486, 1.442695
        %v4560 = vpow.pop %v4559
        %v4561 = vmul.f32 %v4487, 1.442695
        %v4562 = vpow.pop %v4561
        %v4563 = vmul.f32 %v4488, 1.442695
        %v4564 = vpow.pop %v4563
        %v4565 = vmul.f32 %v4489, 1.442695
        %v4566 = vpow.pop %v4565
        %v4567 = vmul.f32 %v4490, 1.442695
        %v4568 = vpow.pop %v4567
        %v4569 = vmul.f32 %v4491, 1.442695
        %v4570 = vpow.pop %v4569
        %v4571 = vmul.f32 %v4492, 1.442695
        %v4572 = vpow.pop %v4571
        %v4573 = vmul.f32 %v4493, 1.442695
        %v4574 = vpow.pop %v4573
        %v4575 = vmul.f32 %v4494, 1.442695
        %v4576 = vpow.pop %v4575
        %v4577 = vmul.f32 %v4495, 1.442695
        %v4578 = vpow.pop %v4577
        %v4579 = vmul.f32 %v4496, 1.442695
        %v4580 = vpow.pop %v4579
        %v4581 = vmul.f32 %v4497, 1.442695
        %v4582 = vpow.pop %v4581
        %v4583 = vmul.f32 %v4498, 1.442695
        %v4584 = vpow.pop %v4583
        %v4585 = vmul.f32 %v4499, 1.442695
        %v4586 = vpow.pop %v4585
        %v4587 = vmul.f32 %v4500, 1.442695
        %v4588 = vpow.pop %v4587
        %v4589 = vmul.f32 %v4501, 1.442695
        %v4590 = vpow.pop %v4589
        %v4591 = vmul.f32 %v4502, 1.442695
        %v4592 = vpow.pop %v4591
        %v4593 = vmul.f32 %v4503, 1.442695
        %v4594 = vpow.pop %v4593
        %v4595 = vmul.f32 %v4504, 1.442695
        %v4596 = vpow.pop %v4595
        %v4597 = vmul.f32 %v4505, 1.442695
        %v4598 = vpow.pop %v4597
        %v4599 = vmul.f32 %v4506, 1.442695
        %v4600 = vpow.pop %v4599
        %v4601 = vmul.f32 %v4507, 1.442695
        %v4602 = vpow.pop %v4601
        %v4603 = vmul.f32 %v4508, 1.442695
        %v4604 = vpow.pop %v4603
        %v4605 = vmul.f32 %v4509, 1.442695
        %v4606 = vpow.pop %v4605
        %v4607 = vmul.f32 %v4510, 1.442695
        %v4608 = vpow.pop %v4607
        %v4609 = vmul.f32 %v4511, 1.442695
        %v4610 = vpow.pop %v4609
        %v4611 = vmul.f32 %v4512, 1.442695
        %v4612 = vpow.pop %v4611
        %v4613 = vmul.f32 %v4513, 1.442695
        %v4614 = vpow.pop %v4613
        %v4615 = vmul.f32 %v4514, 1.442695
        %v4616 = vpow.pop %v4615
        %v4617 = vmul.f32 %v4515, 1.442695
        %v4618 = vpow.pop %v4617
        %v4619 = vmul.f32 %v4516, 1.442695
        %v4620 = vpow.pop %v4619
        %v4621 = vmul.f32 %v4517, 1.442695
        %v4622 = vpow.pop %v4621
        %v4623 = vmul.f32 %v4518, 1.442695
        %v4624 = vpow.pop %v4623
        %v4625 = vmul.f32 %v4519, 1.442695
        %v4626 = vpow.pop %v4625
        %v4627 = vmul.f32 %v4520, 1.442695
        %v4628 = vpow.pop %v4627
        %v4629 = vmul.f32 %v4521, 1.442695
        %v4630 = vpow.pop %v4629
        %v4631 = vmul.f32 %v4522, 1.442695
        %v4632 = vpow.pop %v4631
        %v4633 = vmul.f32 %v4523, 1.442695
        %v4634 = vpow.pop %v4633
        %v4635 = vmul.f32 %v4524, 1.442695
        %v4636 = vpow.pop %v4635
        %v4637 = vmul.f32 %v4525, 1.442695
        %v4638 = vpow.pop %v4637
        %v4639 = vmul.f32 %v4526, 1.442695
        %v4640 = vpow.pop %v4639
        %v4641 = vmul.f32 %v4527, 1.442695
        %v4642 = vpow.pop %v4641
        %v4643 = vmul.f32 %v4528, 1.442695
        %v4644 = vpow.pop %v4643
        %v4645 = vmul.f32 %v4529, 1.442695
        %v4646 = vpow.pop %v4645
        %v4647 = vmul.f32 %v4530, 1.442695
        %v4648 = vpow.pop %v4647
        %v4649 = vmul.f32 %v4531, 1.442695
        %v4650 = vpow.pop %v4649
        %v4651 = vmul.f32 %v4532, 1.442695
        %v4652 = vpow.pop %v4651
        %v4653 = vmul.f32 %v4533, 1.442695
        %v4654 = vpow.pop %v4653
        %v4655 = vmul.f32 %v4534, 1.442695
        %v4656 = vpow.pop %v4655
        %v4657 = vmul.f32 %v4535, 1.442695
        %v4658 = vpow.pop %v4657
        %v4659 = vmul.f32 %v4536, 1.442695
        %v4660 = vpow.pop %v4659
        %v4661 = vmul.f32 %v4537, 1.442695
        %v4662 = vpow.pop %v4661
        %v4663 = vmul.f32 %v4538, 1.442695
        %v4664 = vpow.pop %v4663
        %v4665 = vmul.f32 %v4539, 1.442695
        %v4666 = vpow.pop %v4665
        %v4667 = vmul.f32 %v4540, 1.442695
        %v4668 = vpow.pop %v4667
        %v4669 = vsel %vm575, %v4542, 0.0
        %4670 = vadd.xlane.f32.xlu0 %v4669
        %v4671 = vpop.xlane.xlu0 %4670
        %v4672 = vsel %vm575, %v4544, 0.0
        %4673 = vadd.xlane.f32.xlu0 %v4672
        %v4674 = vpop.xlane.xlu0 %4673
        %v4675 = vsel %vm575, %v4546, 0.0
        %4676 = vadd.xlane.f32.xlu0 %v4675
        %v4677 = vpop.xlane.xlu0 %4676
        %v4678 = vsel %vm575, %v4548, 0.0
        %4679 = vadd.xlane.f32.xlu0 %v4678
        %v4680 = vpop.xlane.xlu0 %4679
        %v4681 = vsel %vm575, %v4550, 0.0
        %4682 = vadd.xlane.f32.xlu0 %v4681
        %v4683 = vpop.xlane.xlu0 %4682
        %v4684 = vsel %vm575, %v4552, 0.0
        %4685 = vadd.xlane.f32.xlu0 %v4684
        %v4686 = vpop.xlane.xlu0 %4685
        %v4687 = vsel %vm575, %v4554, 0.0
        %4688 = vadd.xlane.f32.xlu0 %v4687
        %v4689 = vpop.xlane.xlu0 %4688
        %v4690 = vsel %vm575, %v4556, 0.0
        %4691 = vadd.xlane.f32.xlu0 %v4690
        %v4692 = vpop.xlane.xlu0 %4691
        %v4693 = vsel %vm575, %v4558, 0.0
        %4694 = vadd.xlane.f32.xlu0 %v4693
        %v4695 = vpop.xlane.xlu0 %4694
        %v4696 = vsel %vm575, %v4560, 0.0
        %4697 = vadd.xlane.f32.xlu0 %v4696
        %v4698 = vpop.xlane.xlu0 %4697
        %v4699 = vsel %vm575, %v4562, 0.0
        %4700 = vadd.xlane.f32.xlu0 %v4699
        %v4701 = vpop.xlane.xlu0 %4700
        %v4702 = vsel %vm575, %v4564, 0.0
        %4703 = vadd.xlane.f32.xlu0 %v4702
        %v4704 = vpop.xlane.xlu0 %4703
        %v4705 = vsel %vm575, %v4566, 0.0
        %4706 = vadd.xlane.f32.xlu0 %v4705
        %v4707 = vpop.xlane.xlu0 %4706
        %v4708 = vsel %vm575, %v4568, 0.0
        %4709 = vadd.xlane.f32.xlu0 %v4708
        %v4710 = vpop.xlane.xlu0 %4709
        %v4711 = vsel %vm575, %v4570, 0.0
        %4712 = vadd.xlane.f32.xlu0 %v4711
        %v4713 = vpop.xlane.xlu0 %4712
        %v4714 = vsel %vm575, %v4572, 0.0
        %4715 = vadd.xlane.f32.xlu0 %v4714
        %v4716 = vpop.xlane.xlu0 %4715
        %v4717 = vsel %vm575, %v4574, 0.0
        %4718 = vadd.xlane.f32.xlu0 %v4717
        %v4719 = vpop.xlane.xlu0 %4718
        %v4720 = vsel %vm575, %v4576, 0.0
        %4721 = vadd.xlane.f32.xlu0 %v4720
        %v4722 = vpop.xlane.xlu0 %4721
        %v4723 = vsel %vm575, %v4578, 0.0
        %4724 = vadd.xlane.f32.xlu0 %v4723
        %v4725 = vpop.xlane.xlu0 %4724
        %v4726 = vsel %vm575, %v4580, 0.0
        %4727 = vadd.xlane.f32.xlu0 %v4726
        %v4728 = vpop.xlane.xlu0 %4727
        %v4729 = vsel %vm575, %v4582, 0.0
        %4730 = vadd.xlane.f32.xlu0 %v4729
        %v4731 = vpop.xlane.xlu0 %4730
        %v4732 = vsel %vm575, %v4584, 0.0
        %4733 = vadd.xlane.f32.xlu0 %v4732
        %v4734 = vpop.xlane.xlu0 %4733
        %v4735 = vsel %vm575, %v4586, 0.0
        %4736 = vadd.xlane.f32.xlu0 %v4735
        %v4737 = vpop.xlane.xlu0 %4736
        %v4738 = vsel %vm575, %v4588, 0.0
        %4739 = vadd.xlane.f32.xlu0 %v4738
        %v4740 = vpop.xlane.xlu0 %4739
        %v4741 = vsel %vm575, %v4590, 0.0
        %4742 = vadd.xlane.f32.xlu0 %v4741
        %v4743 = vpop.xlane.xlu0 %4742
        %v4744 = vsel %vm575, %v4592, 0.0
        %4745 = vadd.xlane.f32.xlu0 %v4744
        %v4746 = vpop.xlane.xlu0 %4745
        %v4747 = vsel %vm575, %v4594, 0.0
        %4748 = vadd.xlane.f32.xlu0 %v4747
        %v4749 = vpop.xlane.xlu0 %4748
        %v4750 = vsel %vm575, %v4596, 0.0
        %4751 = vadd.xlane.f32.xlu0 %v4750
        %v4752 = vpop.xlane.xlu0 %4751
        %v4753 = vsel %vm575, %v4598, 0.0
        %4754 = vadd.xlane.f32.xlu0 %v4753
        %v4755 = vpop.xlane.xlu0 %4754
        %v4756 = vsel %vm575, %v4600, 0.0
        %4757 = vadd.xlane.f32.xlu0 %v4756
        %v4758 = vpop.xlane.xlu0 %4757
        %v4759 = vsel %vm575, %v4602, 0.0
        %4760 = vadd.xlane.f32.xlu0 %v4759
        %v4761 = vpop.xlane.xlu0 %4760
        %v4762 = vsel %vm575, %v4604, 0.0
        %4763 = vadd.xlane.f32.xlu0 %v4762
        %v4764 = vpop.xlane.xlu0 %4763
        %v4765 = vsel %vm575, %v4606, 0.0
        %4766 = vadd.xlane.f32.xlu0 %v4765
        %v4767 = vpop.xlane.xlu0 %4766
        %v4768 = vsel %vm575, %v4608, 0.0
        %4769 = vadd.xlane.f32.xlu0 %v4768
        %v4770 = vpop.xlane.xlu0 %4769
        %v4771 = vsel %vm575, %v4610, 0.0
        %4772 = vadd.xlane.f32.xlu0 %v4771
        %v4773 = vpop.xlane.xlu0 %4772
        %v4774 = vsel %vm575, %v4612, 0.0
        %4775 = vadd.xlane.f32.xlu0 %v4774
        %v4776 = vpop.xlane.xlu0 %4775
        %v4777 = vsel %vm575, %v4614, 0.0
        %4778 = vadd.xlane.f32.xlu0 %v4777
        %v4779 = vpop.xlane.xlu0 %4778
        %v4780 = vsel %vm575, %v4616, 0.0
        %4781 = vadd.xlane.f32.xlu0 %v4780
        %v4782 = vpop.xlane.xlu0 %4781
        %v4783 = vsel %vm575, %v4618, 0.0
        %4784 = vadd.xlane.f32.xlu0 %v4783
        %v4785 = vpop.xlane.xlu0 %4784
        %v4786 = vsel %vm575, %v4620, 0.0
        %4787 = vadd.xlane.f32.xlu0 %v4786
        %v4788 = vpop.xlane.xlu0 %4787
        %v4789 = vsel %vm575, %v4622, 0.0
        %4790 = vadd.xlane.f32.xlu0 %v4789
        %v4791 = vpop.xlane.xlu0 %4790
        %v4792 = vsel %vm575, %v4624, 0.0
        %4793 = vadd.xlane.f32.xlu0 %v4792
        %v4794 = vpop.xlane.xlu0 %4793
        %v4795 = vsel %vm575, %v4626, 0.0
        %4796 = vadd.xlane.f32.xlu0 %v4795
        %v4797 = vpop.xlane.xlu0 %4796
        %v4798 = vsel %vm575, %v4628, 0.0
        %4799 = vadd.xlane.f32.xlu0 %v4798
        %v4800 = vpop.xlane.xlu0 %4799
        %v4801 = vsel %vm575, %v4630, 0.0
        %4802 = vadd.xlane.f32.xlu0 %v4801
        %v4803 = vpop.xlane.xlu0 %4802
        %v4804 = vsel %vm575, %v4632, 0.0
        %4805 = vadd.xlane.f32.xlu0 %v4804
        %v4806 = vpop.xlane.xlu0 %4805
        %v4807 = vsel %vm575, %v4634, 0.0
        %4808 = vadd.xlane.f32.xlu0 %v4807
        %v4809 = vpop.xlane.xlu0 %4808
        %v4810 = vsel %vm575, %v4636, 0.0
        %4811 = vadd.xlane.f32.xlu0 %v4810
        %v4812 = vpop.xlane.xlu0 %4811
        %v4813 = vsel %vm575, %v4638, 0.0
        %4814 = vadd.xlane.f32.xlu0 %v4813
        %v4815 = vpop.xlane.xlu0 %4814
        %v4816 = vsel %vm575, %v4640, 0.0
        %4817 = vadd.xlane.f32.xlu0 %v4816
        %v4818 = vpop.xlane.xlu0 %4817
        %v4819 = vsel %vm575, %v4642, 0.0
        %4820 = vadd.xlane.f32.xlu0 %v4819
        %v4821 = vpop.xlane.xlu0 %4820
        %v4822 = vsel %vm575, %v4644, 0.0
        %4823 = vadd.xlane.f32.xlu0 %v4822
        %v4824 = vpop.xlane.xlu0 %4823
        %v4825 = vsel %vm575, %v4646, 0.0
        %4826 = vadd.xlane.f32.xlu0 %v4825
        %v4827 = vpop.xlane.xlu0 %4826
        %v4828 = vsel %vm575, %v4648, 0.0
        %4829 = vadd.xlane.f32.xlu0 %v4828
        %v4830 = vpop.xlane.xlu0 %4829
        %v4831 = vsel %vm575, %v4650, 0.0
        %4832 = vadd.xlane.f32.xlu0 %v4831
        %v4833 = vpop.xlane.xlu0 %4832
        %v4834 = vsel %vm575, %v4652, 0.0
        %4835 = vadd.xlane.f32.xlu0 %v4834
        %v4836 = vpop.xlane.xlu0 %4835
        %v4837 = vsel %vm575, %v4654, 0.0
        %4838 = vadd.xlane.f32.xlu0 %v4837
        %v4839 = vpop.xlane.xlu0 %4838
        %v4840 = vsel %vm575, %v4656, 0.0
        %4841 = vadd.xlane.f32.xlu0 %v4840
        %v4842 = vpop.xlane.xlu0 %4841
        %v4843 = vsel %vm575, %v4658, 0.0
        %4844 = vadd.xlane.f32.xlu0 %v4843
        %v4845 = vpop.xlane.xlu0 %4844
        %v4846 = vsel %vm575, %v4660, 0.0
        %4847 = vadd.xlane.f32.xlu0 %v4846
        %v4848 = vpop.xlane.xlu0 %4847
        %v4849 = vsel %vm575, %v4662, 0.0
        %4850 = vadd.xlane.f32.xlu0 %v4849
        %v4851 = vpop.xlane.xlu0 %4850
        %v4852 = vsel %vm575, %v4664, 0.0
        %4853 = vadd.xlane.f32.xlu0 %v4852
        %v4854 = vpop.xlane.xlu0 %4853
        %v4855 = vsel %vm575, %v4666, 0.0
        %4856 = vadd.xlane.f32.xlu0 %v4855
        %v4857 = vpop.xlane.xlu0 %4856
        %v4858 = vsel %vm575, %v4668, 0.0
        %4859 = vadd.xlane.f32.xlu0 %v4858
        %v4860 = vpop.xlane.xlu0 %4859
        %v4861 = vrcp.pop %v4671
        %v4862 = vrcp.pop %v4674
        %v4863 = vrcp.pop %v4677
        %v4864 = vrcp.pop %v4680
        %v4865 = vrcp.pop %v4683
        %v4866 = vrcp.pop %v4686
        %v4867 = vrcp.pop %v4689
        %v4868 = vrcp.pop %v4692
        %v4869 = vrcp.pop %v4695
        %v4870 = vrcp.pop %v4698
        %v4871 = vrcp.pop %v4701
        %v4872 = vrcp.pop %v4704
        %v4873 = vrcp.pop %v4707
        %v4874 = vrcp.pop %v4710
        %v4875 = vrcp.pop %v4713
        %v4876 = vrcp.pop %v4716
        %v4877 = vrcp.pop %v4719
        %v4878 = vrcp.pop %v4722
        %v4879 = vrcp.pop %v4725
        %v4880 = vrcp.pop %v4728
        %v4881 = vrcp.pop %v4731
        %v4882 = vrcp.pop %v4734
        %v4883 = vrcp.pop %v4737
        %v4884 = vrcp.pop %v4740
        %v4885 = vrcp.pop %v4743
        %v4886 = vrcp.pop %v4746
        %v4887 = vrcp.pop %v4749
        %v4888 = vrcp.pop %v4752
        %v4889 = vrcp.pop %v4755
        %v4890 = vrcp.pop %v4758
        %v4891 = vrcp.pop %v4761
        %v4892 = vrcp.pop %v4764
        %v4893 = vrcp.pop %v4767
        %v4894 = vrcp.pop %v4770
        %v4895 = vrcp.pop %v4773
        %v4896 = vrcp.pop %v4776
        %v4897 = vrcp.pop %v4779
        %v4898 = vrcp.pop %v4782
        %v4899 = vrcp.pop %v4785
        %v4900 = vrcp.pop %v4788
        %v4901 = vrcp.pop %v4791
        %v4902 = vrcp.pop %v4794
        %v4903 = vrcp.pop %v4797
        %v4904 = vrcp.pop %v4800
        %v4905 = vrcp.pop %v4803
        %v4906 = vrcp.pop %v4806
        %v4907 = vrcp.pop %v4809
        %v4908 = vrcp.pop %v4812
        %v4909 = vrcp.pop %v4815
        %v4910 = vrcp.pop %v4818
        %v4911 = vrcp.pop %v4821
        %v4912 = vrcp.pop %v4824
        %v4913 = vrcp.pop %v4827
        %v4914 = vrcp.pop %v4830
        %v4915 = vrcp.pop %v4833
        %v4916 = vrcp.pop %v4836
        %v4917 = vrcp.pop %v4839
        %v4918 = vrcp.pop %v4842
        %v4919 = vrcp.pop %v4845
        %v4920 = vrcp.pop %v4848
        %v4921 = vrcp.pop %v4851
        %v4922 = vrcp.pop %v4854
        %v4923 = vrcp.pop %v4857
        %v4924 = vrcp.pop %v4860
        %v4925 = vmul.f32 %v4542, %v4861
        %v4926 = vmul.f32 %v4544, %v4862
        %v4927 = vmul.f32 %v4546, %v4863
        %v4928 = vmul.f32 %v4548, %v4864
        %v4929 = vmul.f32 %v4550, %v4865
        %v4930 = vmul.f32 %v4552, %v4866
        %v4931 = vmul.f32 %v4554, %v4867
        %v4932 = vmul.f32 %v4556, %v4868
        %v4933 = vmul.f32 %v4558, %v4869
        %v4934 = vmul.f32 %v4560, %v4870
        %v4935 = vmul.f32 %v4562, %v4871
        %v4936 = vmul.f32 %v4564, %v4872
        %v4937 = vmul.f32 %v4566, %v4873
        %v4938 = vmul.f32 %v4568, %v4874
        %v4939 = vmul.f32 %v4570, %v4875
        %v4940 = vmul.f32 %v4572, %v4876
        %v4941 = vmul.f32 %v4574, %v4877
        %v4942 = vmul.f32 %v4576, %v4878
        %v4943 = vmul.f32 %v4578, %v4879
        %v4944 = vmul.f32 %v4580, %v4880
        %v4945 = vmul.f32 %v4582, %v4881
        %v4946 = vmul.f32 %v4584, %v4882
        %v4947 = vmul.f32 %v4586, %v4883
        %v4948 = vmul.f32 %v4588, %v4884
        %v4949 = vmul.f32 %v4590, %v4885
        %v4950 = vmul.f32 %v4592, %v4886
        %v4951 = vmul.f32 %v4594, %v4887
        %v4952 = vmul.f32 %v4596, %v4888
        %v4953 = vmul.f32 %v4598, %v4889
        %v4954 = vmul.f32 %v4600, %v4890
        %v4955 = vmul.f32 %v4602, %v4891
        %v4956 = vmul.f32 %v4604, %v4892
        %v4957 = vmul.f32 %v4606, %v4893
        %v4958 = vmul.f32 %v4608, %v4894
        %v4959 = vmul.f32 %v4610, %v4895
        %v4960 = vmul.f32 %v4612, %v4896
        %v4961 = vmul.f32 %v4614, %v4897
        %v4962 = vmul.f32 %v4616, %v4898
        %v4963 = vmul.f32 %v4618, %v4899
        %v4964 = vmul.f32 %v4620, %v4900
        %v4965 = vmul.f32 %v4622, %v4901
        %v4966 = vmul.f32 %v4624, %v4902
        %v4967 = vmul.f32 %v4626, %v4903
        %v4968 = vmul.f32 %v4628, %v4904
        %v4969 = vmul.f32 %v4630, %v4905
        %v4970 = vmul.f32 %v4632, %v4906
        %v4971 = vmul.f32 %v4634, %v4907
        %v4972 = vmul.f32 %v4636, %v4908
        %v4973 = vmul.f32 %v4638, %v4909
        %v4974 = vmul.f32 %v4640, %v4910
        %v4975 = vmul.f32 %v4642, %v4911
        %v4976 = vmul.f32 %v4644, %v4912
        %v4977 = vmul.f32 %v4646, %v4913
        %v4978 = vmul.f32 %v4648, %v4914
        %v4979 = vmul.f32 %v4650, %v4915
        %v4980 = vmul.f32 %v4652, %v4916
        %v4981 = vmul.f32 %v4654, %v4917
        %v4982 = vmul.f32 %v4656, %v4918
        %v4983 = vmul.f32 %v4658, %v4919
        %v4984 = vmul.f32 %v4660, %v4920
        %v4985 = vmul.f32 %v4662, %v4921
        %v4986 = vmul.f32 %v4664, %v4922
        %v4987 = vmul.f32 %v4666, %v4923
        %v4988 = vmul.f32 %v4668, %v4924
        %v4989 = vpack.c.bf16 %v4926, %v4925
        %v4990 = vpack.c.bf16 %v4928, %v4927
        %v4991 = vpack.c.bf16 %v4930, %v4929
        %v4992 = vpack.c.bf16 %v4932, %v4931
        %v4993 = vpack.c.bf16 %v4934, %v4933
        %v4994 = vpack.c.bf16 %v4936, %v4935
        %v4995 = vpack.c.bf16 %v4938, %v4937
        %v4996 = vpack.c.bf16 %v4940, %v4939
        %v4997 = vpack.c.bf16 %v4942, %v4941
        %v4998 = vpack.c.bf16 %v4944, %v4943
        %v4999 = vpack.c.bf16 %v4946, %v4945
        %v5000 = vpack.c.bf16 %v4948, %v4947
        %v5001 = vpack.c.bf16 %v4950, %v4949
        %v5002 = vpack.c.bf16 %v4952, %v4951
        %v5003 = vpack.c.bf16 %v4954, %v4953
        %v5004 = vpack.c.bf16 %v4956, %v4955
        %v5005 = vpack.c.bf16 %v4958, %v4957
        %v5006 = vpack.c.bf16 %v4960, %v4959
        %v5007 = vpack.c.bf16 %v4962, %v4961
        %v5008 = vpack.c.bf16 %v4964, %v4963
        %v5009 = vpack.c.bf16 %v4966, %v4965
        %v5010 = vpack.c.bf16 %v4968, %v4967
        %v5011 = vpack.c.bf16 %v4970, %v4969
        %v5012 = vpack.c.bf16 %v4972, %v4971
        %v5013 = vpack.c.bf16 %v4974, %v4973
        %v5014 = vpack.c.bf16 %v4976, %v4975
        %v5015 = vpack.c.bf16 %v4978, %v4977
        %v5016 = vpack.c.bf16 %v4980, %v4979
        %v5017 = vpack.c.bf16 %v4982, %v4981
        %v5018 = vpack.c.bf16 %v4984, %v4983
        %v5019 = vpack.c.bf16 %v4986, %v4985
        %v5020 = vpack.c.bf16 %v4988, %v4987
        %v5022 = vsel %vm575, %v3518, 0
        %v5025 = vsel %vm575, %v4989, 0
        %v5028 = vsel %vm575, %v4990, 0
        %v5031 = vsel %vm575, %v4991, 0
        %v5034 = vsel %vm575, %v4992, 0
        %5036 = vmatprep.subr.bf16.mxu0 0
        %5037 = vmatpush1.bf16.xpose.msra.mxu0 %v5025
        %5038 = vmatprep.subr.bf16.mxu0 0
        %5039 = vmatpush1.bf16.xpose.msra.mxu0 %v5028
        %5040 = vmatprep.subr.bf16.mxu0 0
        %5041 = vmatpush1.bf16.xpose.msra.mxu0 %v5031
        %5042 = vmatprep.subr.bf16.mxu0 0
        %5043 = vmatpush1.bf16.xpose.msra.mxu0 %v5034
        %5044 = vmatprep.subr.bf16.mxu0 0
        %5045 = vmatpush1.bf16.xpose.msra.mxu0 0
        %5046 = vmatprep.subr.bf16.mxu0 0
        %5047 = vmatpush1.bf16.xpose.msra.mxu0 0
        %5048 = vmatprep.subr.bf16.mxu0 0
        %5049 = vmatpush1.bf16.xpose.msra.mxu0 0
        %5050 = vmatprep.subr.bf16.mxu0 0
        %5051 = vmatpush1.bf16.xpose.msra.mxu0 0
        %5052 = vmatprep.subr.bf16.mxu0 0
        %5053 = vmatpush1.bf16.xpose.msra.mxu0 0
        %5054 = vmatprep.subr.bf16.mxu0 0
        %5055 = vmatpush1.bf16.xpose.msra.mxu0 0
        %5056 = vmatprep.subr.bf16.mxu0 0
        %5057 = vmatpush1.bf16.xpose.msra.mxu0 0
        %5058 = vmatprep.subr.bf16.mxu0 0
        %5059 = vmatpush1.bf16.xpose.msra.mxu0 0
        %5060 = vmatprep.subr.bf16.mxu0 0
        %5061 = vmatpush1.bf16.xpose.msra.mxu0 0
        %5062 = vmatprep.subr.bf16.mxu0 0
        %5063 = vmatpush1.bf16.xpose.msra.mxu0 0
        %5064 = vmatprep.subr.bf16.mxu0 0
        %5065 = vmatpush1.bf16.xpose.msra.mxu0 0
        %5066 = vmatprep.subr.bf16.mxu0 0
        %5067 = vmatpush1.bf16.xpose.msra.mxu0 0
        %5068 = vmatprep.mubr.bf16.mxu0 0
        %5069 = vmatmul.mubr.bf16.gmra.mrb[0].mxu0 %v5022
        %v5070 = vpop.f32.mrb[0].mxu0
        %v5071 = vadd.f32 0.0, %v5070
        %v5072 = vpop.f32.mrb[0].mxu0
        %v5073 = vpop.f32.mrb[0].mxu0
        %v5074 = vadd.f32 0.0, %v5073
        %v5075 = vpop.f32.mrb[0].mxu0
        %5076 = vdwg.mxu0
        %v5078 = vsel %vm575, %v3521, 0
        %v5081 = vsel %vm575, %v4993, 0
        %v5084 = vsel %vm575, %v4994, 0
        %v5087 = vsel %vm575, %v4995, 0
        %v5090 = vsel %vm575, %v4996, 0
        %5092 = vmatprep.subr.bf16.mxu0 0
        %5093 = vmatpush1.bf16.xpose.msra.mxu0 %v5081
        %5094 = vmatprep.subr.bf16.mxu0 0
        %5095 = vmatpush1.bf16.xpose.msra.mxu0 %v5084
        %5096 = vmatprep.subr.bf16.mxu0 0
        %5097 = vmatpush1.bf16.xpose.msra.mxu0 %v5087
        %5098 = vmatprep.subr.bf16.mxu0 0
        %5099 = vmatpush1.bf16.xpose.msra.mxu0 %v5090
        %5100 = vmatprep.subr.bf16.mxu0 0
        %5101 = vmatpush1.bf16.xpose.msra.mxu0 0
        %5102 = vmatprep.subr.bf16.mxu0 0
        %5103 = vmatpush1.bf16.xpose.msra.mxu0 0
        %5104 = vmatprep.subr.bf16.mxu0 0
        %5105 = vmatpush1.bf16.xpose.msra.mxu0 0
        %5106 = vmatprep.subr.bf16.mxu0 0
        %5107 = vmatpush1.bf16.xpose.msra.mxu0 0
        %5108 = vmatprep.subr.bf16.mxu0 0
        %5109 = vmatpush1.bf16.xpose.msra.mxu0 0
        %5110 = vmatprep.subr.bf16.mxu0 0
        %5111 = vmatpush1.bf16.xpose.msra.mxu0 0
        %5112 = vmatprep.subr.bf16.mxu0 0
        %5113 = vmatpush1.bf16.xpose.msra.mxu0 0
        %5114 = vmatprep.subr.bf16.mxu0 0
        %5115 = vmatpush1.bf16.xpose.msra.mxu0 0
        %5116 = vmatprep.subr.bf16.mxu0 0
        %5117 = vmatpush1.bf16.xpose.msra.mxu0 0
        %5118 = vmatprep.subr.bf16.mxu0 0
        %5119 = vmatpush1.bf16.xpose.msra.mxu0 0
        %5120 = vmatprep.subr.bf16.mxu0 0
        %5121 = vmatpush1.bf16.xpose.msra.mxu0 0
        %5122 = vmatprep.subr.bf16.mxu0 0
        %5123 = vmatpush1.bf16.xpose.msra.mxu0 0
        %5124 = vmatprep.mubr.bf16.mxu0 0
        %5125 = vmatmul.mubr.bf16.gmra.mrb[0].mxu0 %v5078
        %v5126 = vpop.f32.mrb[0].mxu0
        %v5127 = vadd.f32 0.0, %v5126
        %v5128 = vpop.f32.mrb[0].mxu0
        %v5129 = vpop.f32.mrb[0].mxu0
        %v5130 = vadd.f32 0.0, %v5129
        %v5131 = vpop.f32.mrb[0].mxu0
        %5132 = vdwg.mxu0
        %v5134 = vsel %vm575, %v3524, 0
        %v5137 = vsel %vm575, %v4997, 0
        %v5140 = vsel %vm575, %v4998, 0
        %v5143 = vsel %vm575, %v4999, 0
        %v5146 = vsel %vm575, %v5000, 0
        %5148 = vmatprep.subr.bf16.mxu0 0
        %5149 = vmatpush1.bf16.xpose.msra.mxu0 %v5137
        %5150 = vmatprep.subr.bf16.mxu0 0
        %5151 = vmatpush1.bf16.xpose.msra.mxu0 %v5140
        %5152 = vmatprep.subr.bf16.mxu0 0
        %5153 = vmatpush1.bf16.xpose.msra.mxu0 %v5143
        %5154 = vmatprep.subr.bf16.mxu0 0
        %5155 = vmatpush1.bf16.xpose.msra.mxu0 %v5146
        %5156 = vmatprep.subr.bf16.mxu0 0
        %5157 = vmatpush1.bf16.xpose.msra.mxu0 0
        %5158 = vmatprep.subr.bf16.mxu0 0
        %5159 = vmatpush1.bf16.xpose.msra.mxu0 0
        %5160 = vmatprep.subr.bf16.mxu0 0
        %5161 = vmatpush1.bf16.xpose.msra.mxu0 0
        %5162 = vmatprep.subr.bf16.mxu0 0
        %5163 = vmatpush1.bf16.xpose.msra.mxu0 0
        %5164 = vmatprep.subr.bf16.mxu0 0
        %5165 = vmatpush1.bf16.xpose.msra.mxu0 0
        %5166 = vmatprep.subr.bf16.mxu0 0
        %5167 = vmatpush1.bf16.xpose.msra.mxu0 0
        %5168 = vmatprep.subr.bf16.mxu0 0
        %5169 = vmatpush1.bf16.xpose.msra.mxu0 0
        %5170 = vmatprep.subr.bf16.mxu0 0
        %5171 = vmatpush1.bf16.xpose.msra.mxu0 0
        %5172 = vmatprep.subr.bf16.mxu0 0
        %5173 = vmatpush1.bf16.xpose.msra.mxu0 0
        %5174 = vmatprep.subr.bf16.mxu0 0
        %5175 = vmatpush1.bf16.xpose.msra.mxu0 0
        %5176 = vmatprep.subr.bf16.mxu0 0
        %5177 = vmatpush1.bf16.xpose.msra.mxu0 0
        %5178 = vmatprep.subr.bf16.mxu0 0
        %5179 = vmatpush1.bf16.xpose.msra.mxu0 0
        %5180 = vmatprep.mubr.bf16.mxu0 0
        %5181 = vmatmul.mubr.bf16.gmra.mrb[0].mxu0 %v5134
        %v5182 = vpop.f32.mrb[0].mxu0
        %v5183 = vadd.f32 0.0, %v5182
        %v5184 = vpop.f32.mrb[0].mxu0
        %v5185 = vpop.f32.mrb[0].mxu0
        %v5186 = vadd.f32 0.0, %v5185
        %v5187 = vpop.f32.mrb[0].mxu0
        %5188 = vdwg.mxu0
        %v5190 = vsel %vm575, %v3527, 0
        %v5193 = vsel %vm575, %v5001, 0
        %v5196 = vsel %vm575, %v5002, 0
        %v5199 = vsel %vm575, %v5003, 0
        %v5202 = vsel %vm575, %v5004, 0
        %5204 = vmatprep.subr.bf16.mxu0 0
        %5205 = vmatpush1.bf16.xpose.msra.mxu0 %v5193
        %5206 = vmatprep.subr.bf16.mxu0 0
        %5207 = vmatpush1.bf16.xpose.msra.mxu0 %v5196
        %5208 = vmatprep.subr.bf16.mxu0 0
        %5209 = vmatpush1.bf16.xpose.msra.mxu0 %v5199
        %5210 = vmatprep.subr.bf16.mxu0 0
        %5211 = vmatpush1.bf16.xpose.msra.mxu0 %v5202
        %5212 = vmatprep.subr.bf16.mxu0 0
        %5213 = vmatpush1.bf16.xpose.msra.mxu0 0
        %5214 = vmatprep.subr.bf16.mxu0 0
        %5215 = vmatpush1.bf16.xpose.msra.mxu0 0
        %5216 = vmatprep.subr.bf16.mxu0 0
        %5217 = vmatpush1.bf16.xpose.msra.mxu0 0
        %5218 = vmatprep.subr.bf16.mxu0 0
        %5219 = vmatpush1.bf16.xpose.msra.mxu0 0
        %5220 = vmatprep.subr.bf16.mxu0 0
        %5221 = vmatpush1.bf16.xpose.msra.mxu0 0
        %5222 = vmatprep.subr.bf16.mxu0 0
        %5223 = vmatpush1.bf16.xpose.msra.mxu0 0
        %5224 = vmatprep.subr.bf16.mxu0 0
        %5225 = vmatpush1.bf16.xpose.msra.mxu0 0
        %5226 = vmatprep.subr.bf16.mxu0 0
        %5227 = vmatpush1.bf16.xpose.msra.mxu0 0
        %5228 = vmatprep.subr.bf16.mxu0 0
        %5229 = vmatpush1.bf16.xpose.msra.mxu0 0
        %5230 = vmatprep.subr.bf16.mxu0 0
        %5231 = vmatpush1.bf16.xpose.msra.mxu0 0
        %5232 = vmatprep.subr.bf16.mxu0 0
        %5233 = vmatpush1.bf16.xpose.msra.mxu0 0
        %5234 = vmatprep.subr.bf16.mxu0 0
        %5235 = vmatpush1.bf16.xpose.msra.mxu0 0
        %5236 = vmatprep.mubr.bf16.mxu0 0
        %5237 = vmatmul.mubr.bf16.gmra.mrb[0].mxu0 %v5190
        %v5238 = vpop.f32.mrb[0].mxu0
        %v5239 = vadd.f32 0.0, %v5238
        %v5240 = vpop.f32.mrb[0].mxu0
        %v5241 = vpop.f32.mrb[0].mxu0
        %v5242 = vadd.f32 0.0, %v5241
        %v5243 = vpop.f32.mrb[0].mxu0
        %5244 = vdwg.mxu0
        %v5246 = vsel %vm575, %v3530, 0
        %v5249 = vsel %vm575, %v5005, 0
        %v5252 = vsel %vm575, %v5006, 0
        %v5255 = vsel %vm575, %v5007, 0
        %v5258 = vsel %vm575, %v5008, 0
        %5260 = vmatprep.subr.bf16.mxu0 0
        %5261 = vmatpush1.bf16.xpose.msra.mxu0 %v5249
        %5262 = vmatprep.subr.bf16.mxu0 0
        %5263 = vmatpush1.bf16.xpose.msra.mxu0 %v5252
        %5264 = vmatprep.subr.bf16.mxu0 0
        %5265 = vmatpush1.bf16.xpose.msra.mxu0 %v5255
        %5266 = vmatprep.subr.bf16.mxu0 0
        %5267 = vmatpush1.bf16.xpose.msra.mxu0 %v5258
        %5268 = vmatprep.subr.bf16.mxu0 0
        %5269 = vmatpush1.bf16.xpose.msra.mxu0 0
        %5270 = vmatprep.subr.bf16.mxu0 0
        %5271 = vmatpush1.bf16.xpose.msra.mxu0 0
        %5272 = vmatprep.subr.bf16.mxu0 0
        %5273 = vmatpush1.bf16.xpose.msra.mxu0 0
        %5274 = vmatprep.subr.bf16.mxu0 0
        %5275 = vmatpush1.bf16.xpose.msra.mxu0 0
        %5276 = vmatprep.subr.bf16.mxu0 0
        %5277 = vmatpush1.bf16.xpose.msra.mxu0 0
        %5278 = vmatprep.subr.bf16.mxu0 0
        %5279 = vmatpush1.bf16.xpose.msra.mxu0 0
        %5280 = vmatprep.subr.bf16.mxu0 0
        %5281 = vmatpush1.bf16.xpose.msra.mxu0 0
        %5282 = vmatprep.subr.bf16.mxu0 0
        %5283 = vmatpush1.bf16.xpose.msra.mxu0 0
        %5284 = vmatprep.subr.bf16.mxu0 0
        %5285 = vmatpush1.bf16.xpose.msra.mxu0 0
        %5286 = vmatprep.subr.bf16.mxu0 0
        %5287 = vmatpush1.bf16.xpose.msra.mxu0 0
        %5288 = vmatprep.subr.bf16.mxu0 0
        %5289 = vmatpush1.bf16.xpose.msra.mxu0 0
        %5290 = vmatprep.subr.bf16.mxu0 0
        %5291 = vmatpush1.bf16.xpose.msra.mxu0 0
        %5292 = vmatprep.mubr.bf16.mxu0 0
        %5293 = vmatmul.mubr.bf16.gmra.mrb[0].mxu0 %v5246
        %v5294 = vpop.f32.mrb[0].mxu0
        %v5295 = vadd.f32 0.0, %v5294
        %v5296 = vpop.f32.mrb[0].mxu0
        %v5297 = vpop.f32.mrb[0].mxu0
        %v5298 = vadd.f32 0.0, %v5297
        %v5299 = vpop.f32.mrb[0].mxu0
        %5300 = vdwg.mxu0
        %v5302 = vsel %vm575, %v3533, 0
        %v5305 = vsel %vm575, %v5009, 0
        %v5308 = vsel %vm575, %v5010, 0
        %v5311 = vsel %vm575, %v5011, 0
        %v5314 = vsel %vm575, %v5012, 0
        %5316 = vmatprep.subr.bf16.mxu0 0
        %5317 = vmatpush1.bf16.xpose.msra.mxu0 %v5305
        %5318 = vmatprep.subr.bf16.mxu0 0
        %5319 = vmatpush1.bf16.xpose.msra.mxu0 %v5308
        %5320 = vmatprep.subr.bf16.mxu0 0
        %5321 = vmatpush1.bf16.xpose.msra.mxu0 %v5311
        %5322 = vmatprep.subr.bf16.mxu0 0
        %5323 = vmatpush1.bf16.xpose.msra.mxu0 %v5314
        %5324 = vmatprep.subr.bf16.mxu0 0
        %5325 = vmatpush1.bf16.xpose.msra.mxu0 0
        %5326 = vmatprep.subr.bf16.mxu0 0
        %5327 = vmatpush1.bf16.xpose.msra.mxu0 0
        %5328 = vmatprep.subr.bf16.mxu0 0
        %5329 = vmatpush1.bf16.xpose.msra.mxu0 0
        %5330 = vmatprep.subr.bf16.mxu0 0
        %5331 = vmatpush1.bf16.xpose.msra.mxu0 0
        %5332 = vmatprep.subr.bf16.mxu0 0
        %5333 = vmatpush1.bf16.xpose.msra.mxu0 0
        %5334 = vmatprep.subr.bf16.mxu0 0
        %5335 = vmatpush1.bf16.xpose.msra.mxu0 0
        %5336 = vmatprep.subr.bf16.mxu0 0
        %5337 = vmatpush1.bf16.xpose.msra.mxu0 0
        %5338 = vmatprep.subr.bf16.mxu0 0
        %5339 = vmatpush1.bf16.xpose.msra.mxu0 0
        %5340 = vmatprep.subr.bf16.mxu0 0
        %5341 = vmatpush1.bf16.xpose.msra.mxu0 0
        %5342 = vmatprep.subr.bf16.mxu0 0
        %5343 = vmatpush1.bf16.xpose.msra.mxu0 0
        %5344 = vmatprep.subr.bf16.mxu0 0
        %5345 = vmatpush1.bf16.xpose.msra.mxu0 0
        %5346 = vmatprep.subr.bf16.mxu0 0
        %5347 = vmatpush1.bf16.xpose.msra.mxu0 0
        %5348 = vmatprep.mubr.bf16.mxu0 0
        %5349 = vmatmul.mubr.bf16.gmra.mrb[0].mxu0 %v5302
        %v5350 = vpop.f32.mrb[0].mxu0
        %v5351 = vadd.f32 0.0, %v5350
        %v5352 = vpop.f32.mrb[0].mxu0
        %v5353 = vpop.f32.mrb[0].mxu0
        %v5354 = vadd.f32 0.0, %v5353
        %v5355 = vpop.f32.mrb[0].mxu0
        %5356 = vdwg.mxu0
        %v5358 = vsel %vm575, %v3536, 0
        %v5361 = vsel %vm575, %v5013, 0
        %v5364 = vsel %vm575, %v5014, 0
        %v5367 = vsel %vm575, %v5015, 0
        %v5370 = vsel %vm575, %v5016, 0
        %5372 = vmatprep.subr.bf16.mxu0 0
        %5373 = vmatpush1.bf16.xpose.msra.mxu0 %v5361
        %5374 = vmatprep.subr.bf16.mxu0 0
        %5375 = vmatpush1.bf16.xpose.msra.mxu0 %v5364
        %5376 = vmatprep.subr.bf16.mxu0 0
        %5377 = vmatpush1.bf16.xpose.msra.mxu0 %v5367
        %5378 = vmatprep.subr.bf16.mxu0 0
        %5379 = vmatpush1.bf16.xpose.msra.mxu0 %v5370
        %5380 = vmatprep.subr.bf16.mxu0 0
        %5381 = vmatpush1.bf16.xpose.msra.mxu0 0
        %5382 = vmatprep.subr.bf16.mxu0 0
        %5383 = vmatpush1.bf16.xpose.msra.mxu0 0
        %5384 = vmatprep.subr.bf16.mxu0 0
        %5385 = vmatpush1.bf16.xpose.msra.mxu0 0
        %5386 = vmatprep.subr.bf16.mxu0 0
        %5387 = vmatpush1.bf16.xpose.msra.mxu0 0
        %5388 = vmatprep.subr.bf16.mxu0 0
        %5389 = vmatpush1.bf16.xpose.msra.mxu0 0
        %5390 = vmatprep.subr.bf16.mxu0 0
        %5391 = vmatpush1.bf16.xpose.msra.mxu0 0
        %5392 = vmatprep.subr.bf16.mxu0 0
        %5393 = vmatpush1.bf16.xpose.msra.mxu0 0
        %5394 = vmatprep.subr.bf16.mxu0 0
        %5395 = vmatpush1.bf16.xpose.msra.mxu0 0
        %5396 = vmatprep.subr.bf16.mxu0 0
        %5397 = vmatpush1.bf16.xpose.msra.mxu0 0
        %5398 = vmatprep.subr.bf16.mxu0 0
        %5399 = vmatpush1.bf16.xpose.msra.mxu0 0
        %5400 = vmatprep.subr.bf16.mxu0 0
        %5401 = vmatpush1.bf16.xpose.msra.mxu0 0
        %5402 = vmatprep.subr.bf16.mxu0 0
        %5403 = vmatpush1.bf16.xpose.msra.mxu0 0
        %5404 = vmatprep.mubr.bf16.mxu0 0
        %5405 = vmatmul.mubr.bf16.gmra.mrb[0].mxu0 %v5358
        %v5406 = vpop.f32.mrb[0].mxu0
        %v5407 = vadd.f32 0.0, %v5406
        %v5408 = vpop.f32.mrb[0].mxu0
        %v5409 = vpop.f32.mrb[0].mxu0
        %v5410 = vadd.f32 0.0, %v5409
        %v5411 = vpop.f32.mrb[0].mxu0
        %5412 = vdwg.mxu0
        %v5414 = vsel %vm575, %v3539, 0
        %v5417 = vsel %vm575, %v5017, 0
        %v5420 = vsel %vm575, %v5018, 0
        %v5423 = vsel %vm575, %v5019, 0
        %v5426 = vsel %vm575, %v5020, 0
        %5428 = vmatprep.subr.bf16.mxu0 0
        %5429 = vmatpush1.bf16.xpose.msra.mxu0 %v5417
        %5430 = vmatprep.subr.bf16.mxu0 0
        %5431 = vmatpush1.bf16.xpose.msra.mxu0 %v5420
        %5432 = vmatprep.subr.bf16.mxu0 0
        %5433 = vmatpush1.bf16.xpose.msra.mxu0 %v5423
        %5434 = vmatprep.subr.bf16.mxu0 0
        %5435 = vmatpush1.bf16.xpose.msra.mxu0 %v5426
        %5436 = vmatprep.subr.bf16.mxu0 0
        %5437 = vmatpush1.bf16.xpose.msra.mxu0 0
        %5438 = vmatprep.subr.bf16.mxu0 0
        %5439 = vmatpush1.bf16.xpose.msra.mxu0 0
        %5440 = vmatprep.subr.bf16.mxu0 0
        %5441 = vmatpush1.bf16.xpose.msra.mxu0 0
        %5442 = vmatprep.subr.bf16.mxu0 0
        %5443 = vmatpush1.bf16.xpose.msra.mxu0 0
        %5444 = vmatprep.subr.bf16.mxu0 0
        %5445 = vmatpush1.bf16.xpose.msra.mxu0 0
        %5446 = vmatprep.subr.bf16.mxu0 0
        %5447 = vmatpush1.bf16.xpose.msra.mxu0 0
        %5448 = vmatprep.subr.bf16.mxu0 0
        %5449 = vmatpush1.bf16.xpose.msra.mxu0 0
        %5450 = vmatprep.subr.bf16.mxu0 0
        %5451 = vmatpush1.bf16.xpose.msra.mxu0 0
        %5452 = vmatprep.subr.bf16.mxu0 0
        %5453 = vmatpush1.bf16.xpose.msra.mxu0 0
        %5454 = vmatprep.subr.bf16.mxu0 0
        %5455 = vmatpush1.bf16.xpose.msra.mxu0 0
        %5456 = vmatprep.subr.bf16.mxu0 0
        %5457 = vmatpush1.bf16.xpose.msra.mxu0 0
        %5458 = vmatprep.subr.bf16.mxu0 0
        %5459 = vmatpush1.bf16.xpose.msra.mxu0 0
        %5460 = vmatprep.mubr.bf16.mxu0 0
        %5461 = vmatmul.mubr.bf16.gmra.mrb[0].mxu0 %v5414
        %v5462 = vpop.f32.mrb[0].mxu0
        %v5463 = vadd.f32 0.0, %v5462
        %v5464 = vpop.f32.mrb[0].mxu0
        %v5465 = vpop.f32.mrb[0].mxu0
        %v5466 = vadd.f32 0.0, %v5465
        %v5467 = vpop.f32.mrb[0].mxu0
        %5468 = vdwg.mxu0
        %v5469 = vpack.c.bf16 %v5074, %v5071
        %v5470 = vpack.c.bf16 %v5130, %v5127
        %v5471 = vpack.c.bf16 %v5186, %v5183
        %v5472 = vpack.c.bf16 %v5242, %v5239
        %v5473 = vpack.c.bf16 %v5298, %v5295
        %v5474 = vpack.c.bf16 %v5354, %v5351
        %v5475 = vpack.c.bf16 %v5410, %v5407
        %v5476 = vpack.c.bf16 %v5466, %v5463
        %v5479 = vpack.i.b16 %v5470, %v5469
        %v5481 = vshrl.u32 %v5469, 16
        %v5482 = vshrl.u32 %v5470, 16
        %v5483 = vpack.i.b16 %v5482, %v5481
        %v5487 = vpack.i.b16 %v5472, %v5471
        %v5489 = vshrl.u32 %v5471, 16
        %v5490 = vshrl.u32 %v5472, 16
        %v5491 = vpack.i.b16 %v5490, %v5489
        %v5495 = vpack.i.b16 %v5474, %v5473
        %v5497 = vshrl.u32 %v5473, 16
        %v5498 = vshrl.u32 %v5474, 16
        %v5499 = vpack.i.b16 %v5498, %v5497
        %v5503 = vpack.i.b16 %v5476, %v5475
        %v5505 = vshrl.u32 %v5475, 16
        %v5506 = vshrl.u32 %v5476, 16
        %v5507 = vpack.i.b16 %v5506, %v5505
        %v5509 = vcombine.high %v5479, %v975
        %v5511 = vunpack.c.l.s4 1983009808
        %v5512 = vunpack.c.0.s8 %v5511
        %v5513 = vlaneseq
        %v5514 = vshrl.u32 %v5513, 7
        %v5515 = vsub.s32 %v5512, %v5514
        %v5516 = vrot.slane %v5479, %v5515
        %v5518 = vunpack.c.l.s4 1983009808
        %v5519 = vunpack.c.0.s8 %v5518
        %v5520 = vlaneseq
        %v5521 = vshrl.u32 %v5520, 7
        %v5522 = vsub.s32 %v5519, %v5521
        %v5523 = vrot.slane %v5509, %v5522
        %v5524 = vcombine.high %v5516, 0
        %v5526 = vunpack.c.l.s4 1934713408
        %v5527 = vunpack.c.0.s8 %v5526
        %v5528 = vlaneseq
        %v5529 = vshrl.u32 %v5528, 7
        %v5530 = vsub.s32 %v5527, %v5529
        %v5531 = vrot.slane %v5516, %v5530
        %v5533 = vunpack.c.l.s4 1934713408
        %v5534 = vunpack.c.0.s8 %v5533
        %v5535 = vlaneseq
        %v5536 = vshrl.u32 %v5535, 7
        %v5537 = vsub.s32 %v5534, %v5536
        %v5538 = vrot.slane %v5524, %v5537
        %v5539 = vcombine.high %v5523, 0
        %v5541 = vunpack.c.l.s4 1934713408
        %v5542 = vunpack.c.0.s8 %v5541
        %v5543 = vlaneseq
        %v5544 = vshrl.u32 %v5543, 7
        %v5545 = vsub.s32 %v5542, %v5544
        %v5546 = vrot.slane %v5523, %v5545
        %v5548 = vunpack.c.l.s4 1934713408
        %v5549 = vunpack.c.0.s8 %v5548
        %v5550 = vlaneseq
        %v5551 = vshrl.u32 %v5550, 7
        %v5552 = vsub.s32 %v5549, %v5551
        %v5553 = vrot.slane %v5539, %v5552
        %v5554 = vcombine.high %v5531, 0
        %v5555 = vcombine.high %v5538, 0
        %v5556 = vcombine.high %v5546, 0
        %v5557 = vcombine.high %v5553, 0
        %v5558 = vcombine.high %v5483, %v978
        %v5560 = vunpack.c.l.s4 1983009808
        %v5561 = vunpack.c.0.s8 %v5560
        %v5562 = vlaneseq
        %v5563 = vshrl.u32 %v5562, 7
        %v5564 = vsub.s32 %v5561, %v5563
        %v5565 = vrot.slane %v5483, %v5564
        %v5567 = vunpack.c.l.s4 1983009808
        %v5568 = vunpack.c.0.s8 %v5567
        %v5569 = vlaneseq
        %v5570 = vshrl.u32 %v5569, 7
        %v5571 = vsub.s32 %v5568, %v5570
        %v5572 = vrot.slane %v5558, %v5571
        %v5573 = vcombine.high %v5565, 0
        %v5575 = vunpack.c.l.s4 1934713408
        %v5576 = vunpack.c.0.s8 %v5575
        %v5577 = vlaneseq
        %v5578 = vshrl.u32 %v5577, 7
        %v5579 = vsub.s32 %v5576, %v5578
        %v5580 = vrot.slane %v5565, %v5579
        %v5582 = vunpack.c.l.s4 1934713408
        %v5583 = vunpack.c.0.s8 %v5582
        %v5584 = vlaneseq
        %v5585 = vshrl.u32 %v5584, 7
        %v5586 = vsub.s32 %v5583, %v5585
        %v5587 = vrot.slane %v5573, %v5586
        %v5588 = vcombine.high %v5572, 0
        %v5590 = vunpack.c.l.s4 1934713408
        %v5591 = vunpack.c.0.s8 %v5590
        %v5592 = vlaneseq
        %v5593 = vshrl.u32 %v5592, 7
        %v5594 = vsub.s32 %v5591, %v5593
        %v5595 = vrot.slane %v5572, %v5594
        %v5597 = vunpack.c.l.s4 1934713408
        %v5598 = vunpack.c.0.s8 %v5597
        %v5599 = vlaneseq
        %v5600 = vshrl.u32 %v5599, 7
        %v5601 = vsub.s32 %v5598, %v5600
        %v5602 = vrot.slane %v5588, %v5601
        %v5603 = vcombine.high %v5580, 0
        %v5604 = vcombine.high %v5587, 0
        %v5605 = vcombine.high %v5595, 0
        %v5606 = vcombine.high %v5602, 0
        %v5607 = vcombine.high %v5487, %v975
        %v5609 = vunpack.c.l.s4 1983009808
        %v5610 = vunpack.c.0.s8 %v5609
        %v5611 = vlaneseq
        %v5612 = vshrl.u32 %v5611, 7
        %v5613 = vsub.s32 %v5610, %v5612
        %v5614 = vrot.slane %v5487, %v5613
        %v5616 = vunpack.c.l.s4 1983009808
        %v5617 = vunpack.c.0.s8 %v5616
        %v5618 = vlaneseq
        %v5619 = vshrl.u32 %v5618, 7
        %v5620 = vsub.s32 %v5617, %v5619
        %v5621 = vrot.slane %v5607, %v5620
        %v5622 = vcombine.high %v5614, 0
        %v5624 = vunpack.c.l.s4 1934713408
        %v5625 = vunpack.c.0.s8 %v5624
        %v5626 = vlaneseq
        %v5627 = vshrl.u32 %v5626, 7
        %v5628 = vsub.s32 %v5625, %v5627
        %v5629 = vrot.slane %v5614, %v5628
        %v5631 = vunpack.c.l.s4 1934713408
        %v5632 = vunpack.c.0.s8 %v5631
        %v5633 = vlaneseq
        %v5634 = vshrl.u32 %v5633, 7
        %v5635 = vsub.s32 %v5632, %v5634
        %v5636 = vrot.slane %v5622, %v5635
        %v5637 = vcombine.high %v5621, 0
        %v5639 = vunpack.c.l.s4 1934713408
        %v5640 = vunpack.c.0.s8 %v5639
        %v5641 = vlaneseq
        %v5642 = vshrl.u32 %v5641, 7
        %v5643 = vsub.s32 %v5640, %v5642
        %v5644 = vrot.slane %v5621, %v5643
        %v5646 = vunpack.c.l.s4 1934713408
        %v5647 = vunpack.c.0.s8 %v5646
        %v5648 = vlaneseq
        %v5649 = vshrl.u32 %v5648, 7
        %v5650 = vsub.s32 %v5647, %v5649
        %v5651 = vrot.slane %v5637, %v5650
        %v5652 = vcombine.high %v5629, 0
        %v5653 = vcombine.high %v5636, 0
        %v5654 = vcombine.high %v5644, 0
        %v5655 = vcombine.high %v5651, 0
        %v5656 = vcombine.high %v5491, %v978
        %v5658 = vunpack.c.l.s4 1983009808
        %v5659 = vunpack.c.0.s8 %v5658
        %v5660 = vlaneseq
        %v5661 = vshrl.u32 %v5660, 7
        %v5662 = vsub.s32 %v5659, %v5661
        %v5663 = vrot.slane %v5491, %v5662
        %v5665 = vunpack.c.l.s4 1983009808
        %v5666 = vunpack.c.0.s8 %v5665
        %v5667 = vlaneseq
        %v5668 = vshrl.u32 %v5667, 7
        %v5669 = vsub.s32 %v5666, %v5668
        %v5670 = vrot.slane %v5656, %v5669
        %v5671 = vcombine.high %v5663, 0
        %v5673 = vunpack.c.l.s4 1934713408
        %v5674 = vunpack.c.0.s8 %v5673
        %v5675 = vlaneseq
        %v5676 = vshrl.u32 %v5675, 7
        %v5677 = vsub.s32 %v5674, %v5676
        %v5678 = vrot.slane %v5663, %v5677
        %v5680 = vunpack.c.l.s4 1934713408
        %v5681 = vunpack.c.0.s8 %v5680
        %v5682 = vlaneseq
        %v5683 = vshrl.u32 %v5682, 7
        %v5684 = vsub.s32 %v5681, %v5683
        %v5685 = vrot.slane %v5671, %v5684
        %v5686 = vcombine.high %v5670, 0
        %v5688 = vunpack.c.l.s4 1934713408
        %v5689 = vunpack.c.0.s8 %v5688
        %v5690 = vlaneseq
        %v5691 = vshrl.u32 %v5690, 7
        %v5692 = vsub.s32 %v5689, %v5691
        %v5693 = vrot.slane %v5670, %v5692
        %v5695 = vunpack.c.l.s4 1934713408
        %v5696 = vunpack.c.0.s8 %v5695
        %v5697 = vlaneseq
        %v5698 = vshrl.u32 %v5697, 7
        %v5699 = vsub.s32 %v5696, %v5698
        %v5700 = vrot.slane %v5686, %v5699
        %v5701 = vcombine.high %v5678, 0
        %v5702 = vcombine.high %v5685, 0
        %v5703 = vcombine.high %v5693, 0
        %v5704 = vcombine.high %v5700, 0
        %v5705 = vcombine.high %v5495, %v975
        %v5707 = vunpack.c.l.s4 1983009808
        %v5708 = vunpack.c.0.s8 %v5707
        %v5709 = vlaneseq
        %v5710 = vshrl.u32 %v5709, 7
        %v5711 = vsub.s32 %v5708, %v5710
        %v5712 = vrot.slane %v5495, %v5711
        %v5714 = vunpack.c.l.s4 1983009808
        %v5715 = vunpack.c.0.s8 %v5714
        %v5716 = vlaneseq
        %v5717 = vshrl.u32 %v5716, 7
        %v5718 = vsub.s32 %v5715, %v5717
        %v5719 = vrot.slane %v5705, %v5718
        %v5720 = vcombine.high %v5712, 0
        %v5722 = vunpack.c.l.s4 1934713408
        %v5723 = vunpack.c.0.s8 %v5722
        %v5724 = vlaneseq
        %v5725 = vshrl.u32 %v5724, 7
        %v5726 = vsub.s32 %v5723, %v5725
        %v5727 = vrot.slane %v5712, %v5726
        %v5729 = vunpack.c.l.s4 1934713408
        %v5730 = vunpack.c.0.s8 %v5729
        %v5731 = vlaneseq
        %v5732 = vshrl.u32 %v5731, 7
        %v5733 = vsub.s32 %v5730, %v5732
        %v5734 = vrot.slane %v5720, %v5733
        %v5735 = vcombine.high %v5719, 0
        %v5737 = vunpack.c.l.s4 1934713408
        %v5738 = vunpack.c.0.s8 %v5737
        %v5739 = vlaneseq
        %v5740 = vshrl.u32 %v5739, 7
        %v5741 = vsub.s32 %v5738, %v5740
        %v5742 = vrot.slane %v5719, %v5741
        %v5744 = vunpack.c.l.s4 1934713408
        %v5745 = vunpack.c.0.s8 %v5744
        %v5746 = vlaneseq
        %v5747 = vshrl.u32 %v5746, 7
        %v5748 = vsub.s32 %v5745, %v5747
        %v5749 = vrot.slane %v5735, %v5748
        %v5750 = vcombine.high %v5727, 0
        %v5751 = vcombine.high %v5734, 0
        %v5752 = vcombine.high %v5742, 0
        %v5753 = vcombine.high %v5749, 0
        %v5754 = vcombine.high %v5499, %v978
        %v5756 = vunpack.c.l.s4 1983009808
        %v5757 = vunpack.c.0.s8 %v5756
        %v5758 = vlaneseq
        %v5759 = vshrl.u32 %v5758, 7
        %v5760 = vsub.s32 %v5757, %v5759
        %v5761 = vrot.slane %v5499, %v5760
        %v5763 = vunpack.c.l.s4 1983009808
        %v5764 = vunpack.c.0.s8 %v5763
        %v5765 = vlaneseq
        %v5766 = vshrl.u32 %v5765, 7
        %v5767 = vsub.s32 %v5764, %v5766
        %v5768 = vrot.slane %v5754, %v5767
        %v5769 = vcombine.high %v5761, 0
        %v5771 = vunpack.c.l.s4 1934713408
        %v5772 = vunpack.c.0.s8 %v5771
        %v5773 = vlaneseq
        %v5774 = vshrl.u32 %v5773, 7
        %v5775 = vsub.s32 %v5772, %v5774
        %v5776 = vrot.slane %v5761, %v5775
        %v5778 = vunpack.c.l.s4 1934713408
        %v5779 = vunpack.c.0.s8 %v5778
        %v5780 = vlaneseq
        %v5781 = vshrl.u32 %v5780, 7
        %v5782 = vsub.s32 %v5779, %v5781
        %v5783 = vrot.slane %v5769, %v5782
        %v5784 = vcombine.high %v5768, 0
        %v5786 = vunpack.c.l.s4 1934713408
        %v5787 = vunpack.c.0.s8 %v5786
        %v5788 = vlaneseq
        %v5789 = vshrl.u32 %v5788, 7
        %v5790 = vsub.s32 %v5787, %v5789
        %v5791 = vrot.slane %v5768, %v5790
        %v5793 = vunpack.c.l.s4 1934713408
        %v5794 = vunpack.c.0.s8 %v5793
        %v5795 = vlaneseq
        %v5796 = vshrl.u32 %v5795, 7
        %v5797 = vsub.s32 %v5794, %v5796
        %v5798 = vrot.slane %v5784, %v5797
        %v5799 = vcombine.high %v5776, 0
        %v5800 = vcombine.high %v5783, 0
        %v5801 = vcombine.high %v5791, 0
        %v5802 = vcombine.high %v5798, 0
        %v5803 = vcombine.high %v5503, %v975
        %v5805 = vunpack.c.l.s4 1983009808
        %v5806 = vunpack.c.0.s8 %v5805
        %v5807 = vlaneseq
        %v5808 = vshrl.u32 %v5807, 7
        %v5809 = vsub.s32 %v5806, %v5808
        %v5810 = vrot.slane %v5503, %v5809
        %v5812 = vunpack.c.l.s4 1983009808
        %v5813 = vunpack.c.0.s8 %v5812
        %v5814 = vlaneseq
        %v5815 = vshrl.u32 %v5814, 7
        %v5816 = vsub.s32 %v5813, %v5815
        %v5817 = vrot.slane %v5803, %v5816
        %v5818 = vcombine.high %v5810, 0
        %v5820 = vunpack.c.l.s4 1934713408
        %v5821 = vunpack.c.0.s8 %v5820
        %v5822 = vlaneseq
        %v5823 = vshrl.u32 %v5822, 7
        %v5824 = vsub.s32 %v5821, %v5823
        %v5825 = vrot.slane %v5810, %v5824
        %v5827 = vunpack.c.l.s4 1934713408
        %v5828 = vunpack.c.0.s8 %v5827
        %v5829 = vlaneseq
        %v5830 = vshrl.u32 %v5829, 7
        %v5831 = vsub.s32 %v5828, %v5830
        %v5832 = vrot.slane %v5818, %v5831
        %v5833 = vcombine.high %v5817, 0
        %v5835 = vunpack.c.l.s4 1934713408
        %v5836 = vunpack.c.0.s8 %v5835
        %v5837 = vlaneseq
        %v5838 = vshrl.u32 %v5837, 7
        %v5839 = vsub.s32 %v5836, %v5838
        %v5840 = vrot.slane %v5817, %v5839
        %v5842 = vunpack.c.l.s4 1934713408
        %v5843 = vunpack.c.0.s8 %v5842
        %v5844 = vlaneseq
        %v5845 = vshrl.u32 %v5844, 7
        %v5846 = vsub.s32 %v5843, %v5845
        %v5847 = vrot.slane %v5833, %v5846
        %v5848 = vcombine.high %v5825, 0
        %v5849 = vcombine.high %v5832, 0
        %v5850 = vcombine.high %v5840, 0
        %v5851 = vcombine.high %v5847, 0
        %v5852 = vcombine.high %v5507, %v978
        %v5854 = vunpack.c.l.s4 1983009808
        %v5855 = vunpack.c.0.s8 %v5854
        %v5856 = vlaneseq
        %v5857 = vshrl.u32 %v5856, 7
        %v5858 = vsub.s32 %v5855, %v5857
        %v5859 = vrot.slane %v5507, %v5858
        %v5861 = vunpack.c.l.s4 1983009808
        %v5862 = vunpack.c.0.s8 %v5861
        %v5863 = vlaneseq
        %v5864 = vshrl.u32 %v5863, 7
        %v5865 = vsub.s32 %v5862, %v5864
        %v5866 = vrot.slane %v5852, %v5865
        %v5867 = vcombine.high %v5859, 0
        %v5869 = vunpack.c.l.s4 1934713408
        %v5870 = vunpack.c.0.s8 %v5869
        %v5871 = vlaneseq
        %v5872 = vshrl.u32 %v5871, 7
        %v5873 = vsub.s32 %v5870, %v5872
        %v5874 = vrot.slane %v5859, %v5873
        %v5876 = vunpack.c.l.s4 1934713408
        %v5877 = vunpack.c.0.s8 %v5876
        %v5878 = vlaneseq
        %v5879 = vshrl.u32 %v5878, 7
        %v5880 = vsub.s32 %v5877, %v5879
        %v5881 = vrot.slane %v5867, %v5880
        %v5882 = vcombine.high %v5866, 0
        %v5884 = vunpack.c.l.s4 1934713408
        %v5885 = vunpack.c.0.s8 %v5884
        %v5886 = vlaneseq
        %v5887 = vshrl.u32 %v5886, 7
        %v5888 = vsub.s32 %v5885, %v5887
        %v5889 = vrot.slane %v5866, %v5888
        %v5891 = vunpack.c.l.s4 1934713408
        %v5892 = vunpack.c.0.s8 %v5891
        %v5893 = vlaneseq
        %v5894 = vshrl.u32 %v5893, 7
        %v5895 = vsub.s32 %v5892, %v5894
        %v5896 = vrot.slane %v5882, %v5895
        %v5897 = vcombine.high %v5874, 0
        %v5898 = vcombine.high %v5881, 0
        %v5899 = vcombine.high %v5889, 0
        %v5900 = vcombine.high %v5896, 0
        %v5901 = vcombine.low %v5531, %v5538
        %v5903 = vunpack.c.l.s4 1983009808
        %v5904 = vunpack.c.0.s8 %v5903
        %v5905 = vlaneseq
        %v5906 = vshrl.u32 %v5905, 7
        %v5907 = vsub.s32 %v5904, %v5906
        %v5908 = vrot.slane %v5901, %v5907
        %v5909 = vcombine.low %v5554, %v5555
        %v5911 = vunpack.c.l.s4 1983009808
        %v5912 = vunpack.c.0.s8 %v5911
        %v5913 = vlaneseq
        %v5914 = vshrl.u32 %v5913, 7
        %v5915 = vsub.s32 %v5912, %v5914
        %v5916 = vrot.slane %v5909, %v5915
        %v5917 = vcombine.low %v5546, %v5553
        %v5919 = vunpack.c.l.s4 1983009808
        %v5920 = vunpack.c.0.s8 %v5919
        %v5921 = vlaneseq
        %v5922 = vshrl.u32 %v5921, 7
        %v5923 = vsub.s32 %v5920, %v5922
        %v5924 = vrot.slane %v5917, %v5923
        %v5925 = vcombine.low %v5556, %v5557
        %v5927 = vunpack.c.l.s4 1983009808
        %v5928 = vunpack.c.0.s8 %v5927
        %v5929 = vlaneseq
        %v5930 = vshrl.u32 %v5929, 7
        %v5931 = vsub.s32 %v5928, %v5930
        %v5932 = vrot.slane %v5925, %v5931
        %v5933 = vcombine.low %v5908, %v5916
        %v5935 = vunpack.c.l.s4 1934713408
        %v5936 = vunpack.c.0.s8 %v5935
        %v5937 = vlaneseq
        %v5938 = vshrl.u32 %v5937, 7
        %v5939 = vsub.s32 %v5936, %v5938
        %v5940 = vrot.slane %v5933, %v5939
        %v5941 = vcombine.low %v5924, %v5932
        %v5943 = vunpack.c.l.s4 1934713408
        %v5944 = vunpack.c.0.s8 %v5943
        %v5945 = vlaneseq
        %v5946 = vshrl.u32 %v5945, 7
        %v5947 = vsub.s32 %v5944, %v5946
        %v5948 = vrot.slane %v5941, %v5947
        %v5949 = vcombine.low %v5940, %v5948
        %v5950 = vcombine.low %v5580, %v5587
        %v5952 = vunpack.c.l.s4 1983009808
        %v5953 = vunpack.c.0.s8 %v5952
        %v5954 = vlaneseq
        %v5955 = vshrl.u32 %v5954, 7
        %v5956 = vsub.s32 %v5953, %v5955
        %v5957 = vrot.slane %v5950, %v5956
        %v5958 = vcombine.low %v5603, %v5604
        %v5960 = vunpack.c.l.s4 1983009808
        %v5961 = vunpack.c.0.s8 %v5960
        %v5962 = vlaneseq
        %v5963 = vshrl.u32 %v5962, 7
        %v5964 = vsub.s32 %v5961, %v5963
        %v5965 = vrot.slane %v5958, %v5964
        %v5966 = vcombine.low %v5595, %v5602
        %v5968 = vunpack.c.l.s4 1983009808
        %v5969 = vunpack.c.0.s8 %v5968
        %v5970 = vlaneseq
        %v5971 = vshrl.u32 %v5970, 7
        %v5972 = vsub.s32 %v5969, %v5971
        %v5973 = vrot.slane %v5966, %v5972
        %v5974 = vcombine.low %v5605, %v5606
        %v5976 = vunpack.c.l.s4 1983009808
        %v5977 = vunpack.c.0.s8 %v5976
        %v5978 = vlaneseq
        %v5979 = vshrl.u32 %v5978, 7
        %v5980 = vsub.s32 %v5977, %v5979
        %v5981 = vrot.slane %v5974, %v5980
        %v5982 = vcombine.low %v5957, %v5965
        %v5984 = vunpack.c.l.s4 1934713408
        %v5985 = vunpack.c.0.s8 %v5984
        %v5986 = vlaneseq
        %v5987 = vshrl.u32 %v5986, 7
        %v5988 = vsub.s32 %v5985, %v5987
        %v5989 = vrot.slane %v5982, %v5988
        %v5990 = vcombine.low %v5973, %v5981
        %v5992 = vunpack.c.l.s4 1934713408
        %v5993 = vunpack.c.0.s8 %v5992
        %v5994 = vlaneseq
        %v5995 = vshrl.u32 %v5994, 7
        %v5996 = vsub.s32 %v5993, %v5995
        %v5997 = vrot.slane %v5990, %v5996
        %v5998 = vcombine.low %v5989, %v5997
        %v5999 = vcombine.low %v5629, %v5636
        %v6001 = vunpack.c.l.s4 1983009808
        %v6002 = vunpack.c.0.s8 %v6001
        %v6003 = vlaneseq
        %v6004 = vshrl.u32 %v6003, 7
        %v6005 = vsub.s32 %v6002, %v6004
        %v6006 = vrot.slane %v5999, %v6005
        %v6007 = vcombine.low %v5652, %v5653
        %v6009 = vunpack.c.l.s4 1983009808
        %v6010 = vunpack.c.0.s8 %v6009
        %v6011 = vlaneseq
        %v6012 = vshrl.u32 %v6011, 7
        %v6013 = vsub.s32 %v6010, %v6012
        %v6014 = vrot.slane %v6007, %v6013
        %v6015 = vcombine.low %v5644, %v5651
        %v6017 = vunpack.c.l.s4 1983009808
        %v6018 = vunpack.c.0.s8 %v6017
        %v6019 = vlaneseq
        %v6020 = vshrl.u32 %v6019, 7
        %v6021 = vsub.s32 %v6018, %v6020
        %v6022 = vrot.slane %v6015, %v6021
        %v6023 = vcombine.low %v5654, %v5655
        %v6025 = vunpack.c.l.s4 1983009808
        %v6026 = vunpack.c.0.s8 %v6025
        %v6027 = vlaneseq
        %v6028 = vshrl.u32 %v6027, 7
        %v6029 = vsub.s32 %v6026, %v6028
        %v6030 = vrot.slane %v6023, %v6029
        %v6031 = vcombine.low %v6006, %v6014
        %v6033 = vunpack.c.l.s4 1934713408
        %v6034 = vunpack.c.0.s8 %v6033
        %v6035 = vlaneseq
        %v6036 = vshrl.u32 %v6035, 7
        %v6037 = vsub.s32 %v6034, %v6036
        %v6038 = vrot.slane %v6031, %v6037
        %v6039 = vcombine.low %v6022, %v6030
        %v6041 = vunpack.c.l.s4 1934713408
        %v6042 = vunpack.c.0.s8 %v6041
        %v6043 = vlaneseq
        %v6044 = vshrl.u32 %v6043, 7
        %v6045 = vsub.s32 %v6042, %v6044
        %v6046 = vrot.slane %v6039, %v6045
        %v6047 = vcombine.low %v6038, %v6046
        %v6048 = vcombine.low %v5678, %v5685
        %v6050 = vunpack.c.l.s4 1983009808
        %v6051 = vunpack.c.0.s8 %v6050
        %v6052 = vlaneseq
        %v6053 = vshrl.u32 %v6052, 7
        %v6054 = vsub.s32 %v6051, %v6053
        %v6055 = vrot.slane %v6048, %v6054
        %v6056 = vcombine.low %v5701, %v5702
        %v6058 = vunpack.c.l.s4 1983009808
        %v6059 = vunpack.c.0.s8 %v6058
        %v6060 = vlaneseq
        %v6061 = vshrl.u32 %v6060, 7
        %v6062 = vsub.s32 %v6059, %v6061
        %v6063 = vrot.slane %v6056, %v6062
        %v6064 = vcombine.low %v5693, %v5700
        %v6066 = vunpack.c.l.s4 1983009808
        %v6067 = vunpack.c.0.s8 %v6066
        %v6068 = vlaneseq
        %v6069 = vshrl.u32 %v6068, 7
        %v6070 = vsub.s32 %v6067, %v6069
        %v6071 = vrot.slane %v6064, %v6070
        %v6072 = vcombine.low %v5703, %v5704
        %v6074 = vunpack.c.l.s4 1983009808
        %v6075 = vunpack.c.0.s8 %v6074
        %v6076 = vlaneseq
        %v6077 = vshrl.u32 %v6076, 7
        %v6078 = vsub.s32 %v6075, %v6077
        %v6079 = vrot.slane %v6072, %v6078
        %v6080 = vcombine.low %v6055, %v6063
        %v6082 = vunpack.c.l.s4 1934713408
        %v6083 = vunpack.c.0.s8 %v6082
        %v6084 = vlaneseq
        %v6085 = vshrl.u32 %v6084, 7
        %v6086 = vsub.s32 %v6083, %v6085
        %v6087 = vrot.slane %v6080, %v6086
        %v6088 = vcombine.low %v6071, %v6079
        %v6090 = vunpack.c.l.s4 1934713408
        %v6091 = vunpack.c.0.s8 %v6090
        %v6092 = vlaneseq
        %v6093 = vshrl.u32 %v6092, 7
        %v6094 = vsub.s32 %v6091, %v6093
        %v6095 = vrot.slane %v6088, %v6094
        %v6096 = vcombine.low %v6087, %v6095
        %v6097 = vcombine.low %v5727, %v5734
        %v6099 = vunpack.c.l.s4 1983009808
        %v6100 = vunpack.c.0.s8 %v6099
        %v6101 = vlaneseq
        %v6102 = vshrl.u32 %v6101, 7
        %v6103 = vsub.s32 %v6100, %v6102
        %v6104 = vrot.slane %v6097, %v6103
        %v6105 = vcombine.low %v5750, %v5751
        %v6107 = vunpack.c.l.s4 1983009808
        %v6108 = vunpack.c.0.s8 %v6107
        %v6109 = vlaneseq
        %v6110 = vshrl.u32 %v6109, 7
        %v6111 = vsub.s32 %v6108, %v6110
        %v6112 = vrot.slane %v6105, %v6111
        %v6113 = vcombine.low %v5742, %v5749
        %v6115 = vunpack.c.l.s4 1983009808
        %v6116 = vunpack.c.0.s8 %v6115
        %v6117 = vlaneseq
        %v6118 = vshrl.u32 %v6117, 7
        %v6119 = vsub.s32 %v6116, %v6118
        %v6120 = vrot.slane %v6113, %v6119
        %v6121 = vcombine.low %v5752, %v5753
        %v6123 = vunpack.c.l.s4 1983009808
        %v6124 = vunpack.c.0.s8 %v6123
        %v6125 = vlaneseq
        %v6126 = vshrl.u32 %v6125, 7
        %v6127 = vsub.s32 %v6124, %v6126
        %v6128 = vrot.slane %v6121, %v6127
        %v6129 = vcombine.low %v6104, %v6112
        %v6131 = vunpack.c.l.s4 1934713408
        %v6132 = vunpack.c.0.s8 %v6131
        %v6133 = vlaneseq
        %v6134 = vshrl.u32 %v6133, 7
        %v6135 = vsub.s32 %v6132, %v6134
        %v6136 = vrot.slane %v6129, %v6135
        %v6137 = vcombine.low %v6120, %v6128
        %v6139 = vunpack.c.l.s4 1934713408
        %v6140 = vunpack.c.0.s8 %v6139
        %v6141 = vlaneseq
        %v6142 = vshrl.u32 %v6141, 7
        %v6143 = vsub.s32 %v6140, %v6142
        %v6144 = vrot.slane %v6137, %v6143
        %v6145 = vcombine.low %v6136, %v6144
        %v6146 = vcombine.low %v5776, %v5783
        %v6148 = vunpack.c.l.s4 1983009808
        %v6149 = vunpack.c.0.s8 %v6148
        %v6150 = vlaneseq
        %v6151 = vshrl.u32 %v6150, 7
        %v6152 = vsub.s32 %v6149, %v6151
        %v6153 = vrot.slane %v6146, %v6152
        %v6154 = vcombine.low %v5799, %v5800
        %v6156 = vunpack.c.l.s4 1983009808
        %v6157 = vunpack.c.0.s8 %v6156
        %v6158 = vlaneseq
        %v6159 = vshrl.u32 %v6158, 7
        %v6160 = vsub.s32 %v6157, %v6159
        %v6161 = vrot.slane %v6154, %v6160
        %v6162 = vcombine.low %v5791, %v5798
        %v6164 = vunpack.c.l.s4 1983009808
        %v6165 = vunpack.c.0.s8 %v6164
        %v6166 = vlaneseq
        %v6167 = vshrl.u32 %v6166, 7
        %v6168 = vsub.s32 %v6165, %v6167
        %v6169 = vrot.slane %v6162, %v6168
        %v6170 = vcombine.low %v5801, %v5802
        %v6172 = vunpack.c.l.s4 1983009808
        %v6173 = vunpack.c.0.s8 %v6172
        %v6174 = vlaneseq
        %v6175 = vshrl.u32 %v6174, 7
        %v6176 = vsub.s32 %v6173, %v6175
        %v6177 = vrot.slane %v6170, %v6176
        %v6178 = vcombine.low %v6153, %v6161
        %v6180 = vunpack.c.l.s4 1934713408
        %v6181 = vunpack.c.0.s8 %v6180
        %v6182 = vlaneseq
        %v6183 = vshrl.u32 %v6182, 7
        %v6184 = vsub.s32 %v6181, %v6183
        %v6185 = vrot.slane %v6178, %v6184
        %v6186 = vcombine.low %v6169, %v6177
        %v6188 = vunpack.c.l.s4 1934713408
        %v6189 = vunpack.c.0.s8 %v6188
        %v6190 = vlaneseq
        %v6191 = vshrl.u32 %v6190, 7
        %v6192 = vsub.s32 %v6189, %v6191
        %v6193 = vrot.slane %v6186, %v6192
        %v6194 = vcombine.low %v6185, %v6193
        %v6195 = vcombine.low %v5825, %v5832
        %v6197 = vunpack.c.l.s4 1983009808
        %v6198 = vunpack.c.0.s8 %v6197
        %v6199 = vlaneseq
        %v6200 = vshrl.u32 %v6199, 7
        %v6201 = vsub.s32 %v6198, %v6200
        %v6202 = vrot.slane %v6195, %v6201
        %v6203 = vcombine.low %v5848, %v5849
        %v6205 = vunpack.c.l.s4 1983009808
        %v6206 = vunpack.c.0.s8 %v6205
        %v6207 = vlaneseq
        %v6208 = vshrl.u32 %v6207, 7
        %v6209 = vsub.s32 %v6206, %v6208
        %v6210 = vrot.slane %v6203, %v6209
        %v6211 = vcombine.low %v5840, %v5847
        %v6213 = vunpack.c.l.s4 1983009808
        %v6214 = vunpack.c.0.s8 %v6213
        %v6215 = vlaneseq
        %v6216 = vshrl.u32 %v6215, 7
        %v6217 = vsub.s32 %v6214, %v6216
        %v6218 = vrot.slane %v6211, %v6217
        %v6219 = vcombine.low %v5850, %v5851
        %v6221 = vunpack.c.l.s4 1983009808
        %v6222 = vunpack.c.0.s8 %v6221
        %v6223 = vlaneseq
        %v6224 = vshrl.u32 %v6223, 7
        %v6225 = vsub.s32 %v6222, %v6224
        %v6226 = vrot.slane %v6219, %v6225
        %v6227 = vcombine.low %v6202, %v6210
        %v6229 = vunpack.c.l.s4 1934713408
        %v6230 = vunpack.c.0.s8 %v6229
        %v6231 = vlaneseq
        %v6232 = vshrl.u32 %v6231, 7
        %v6233 = vsub.s32 %v6230, %v6232
        %v6234 = vrot.slane %v6227, %v6233
        %v6235 = vcombine.low %v6218, %v6226
        %v6237 = vunpack.c.l.s4 1934713408
        %v6238 = vunpack.c.0.s8 %v6237
        %v6239 = vlaneseq
        %v6240 = vshrl.u32 %v6239, 7
        %v6241 = vsub.s32 %v6238, %v6240
        %v6242 = vrot.slane %v6235, %v6241
        %v6243 = vcombine.low %v6234, %v6242
        %v6244 = vcombine.low %v5874, %v5881
        %v6246 = vunpack.c.l.s4 1983009808
        %v6247 = vunpack.c.0.s8 %v6246
        %v6248 = vlaneseq
        %v6249 = vshrl.u32 %v6248, 7
        %v6250 = vsub.s32 %v6247, %v6249
        %v6251 = vrot.slane %v6244, %v6250
        %v6252 = vcombine.low %v5897, %v5898
        %v6254 = vunpack.c.l.s4 1983009808
        %v6255 = vunpack.c.0.s8 %v6254
        %v6256 = vlaneseq
        %v6257 = vshrl.u32 %v6256, 7
        %v6258 = vsub.s32 %v6255, %v6257
        %v6259 = vrot.slane %v6252, %v6258
        %v6260 = vcombine.low %v5889, %v5896
        %v6262 = vunpack.c.l.s4 1983009808
        %v6263 = vunpack.c.0.s8 %v6262
        %v6264 = vlaneseq
        %v6265 = vshrl.u32 %v6264, 7
        %v6266 = vsub.s32 %v6263, %v6265
        %v6267 = vrot.slane %v6260, %v6266
        %v6268 = vcombine.low %v5899, %v5900
        %v6270 = vunpack.c.l.s4 1983009808
        %v6271 = vunpack.c.0.s8 %v6270
        %v6272 = vlaneseq
        %v6273 = vshrl.u32 %v6272, 7
        %v6274 = vsub.s32 %v6271, %v6273
        %v6275 = vrot.slane %v6268, %v6274
        %v6276 = vcombine.low %v6251, %v6259
        %v6278 = vunpack.c.l.s4 1934713408
        %v6279 = vunpack.c.0.s8 %v6278
        %v6280 = vlaneseq
        %v6281 = vshrl.u32 %v6280, 7
        %v6282 = vsub.s32 %v6279, %v6281
        %v6283 = vrot.slane %v6276, %v6282
        %v6284 = vcombine.low %v6267, %v6275
        %v6286 = vunpack.c.l.s4 1934713408
        %v6287 = vunpack.c.0.s8 %v6286
        %v6288 = vlaneseq
        %v6289 = vshrl.u32 %v6288, 7
        %v6290 = vsub.s32 %v6287, %v6289
        %v6291 = vrot.slane %v6284, %v6290
        %v6292 = vcombine.low %v6283, %v6291
        %v6295 = vpack.i.b16 %v5998, %v5949
        %v6296 = vshrl.u32 %v5949, 16
        %v6297 = vshrl.u32 %v5998, 16
        %v6298 = vpack.i.b16 %v6297, %v6296
        %v6301 = vpack.i.b16 %v6096, %v6047
        %v6302 = vshrl.u32 %v6047, 16
        %v6303 = vshrl.u32 %v6096, 16
        %v6304 = vpack.i.b16 %v6303, %v6302
        %v6307 = vpack.i.b16 %v6194, %v6145
        %v6308 = vshrl.u32 %v6145, 16
        %v6309 = vshrl.u32 %v6194, 16
        %v6310 = vpack.i.b16 %v6309, %v6308
        %v6313 = vpack.i.b16 %v6292, %v6243
        %v6314 = vshrl.u32 %v6243, 16
        %v6315 = vshrl.u32 %v6292, 16
        %v6316 = vpack.i.b16 %v6315, %v6314
        %6317 = vrot.lane.b32.xlu0 %v6298, 64
        %v6318 = vpop.permute.xlu0 %6317
        %6319 = vrot.lane.b32.xlu0 %v6304, 64
        %v6320 = vpop.permute.xlu0 %6319
        %6321 = vrot.lane.b32.xlu0 %v6310, 64
        %v6322 = vpop.permute.xlu0 %6321
        %6323 = vrot.lane.b32.xlu0 %v6316, 64
        %v6324 = vpop.permute.xlu0 %6323
        %v6327 = vsel %vm575, %v6295, %v6318
        %v6331 = vsel %vm575, %v6301, %v6320
        %v6335 = vsel %vm575, %v6307, %v6322
        %v6339 = vsel %vm575, %v6313, %v6324
        %v6341 = vld [vmem:[%s6] sm:$0xf]
        %v6342 = vld [vmem:[%s6 + $0x4] sm:$0xf]
        %v6343 = vld [vmem:[%s6 + $0x8] sm:$0xf]
        %v6344 = vld [vmem:[%s6 + $0xc] sm:$0xf]
        %v6345 = vld [vmem:[%s6 + $0x10] sm:$0xf]
        %v6346 = vld [vmem:[%s6 + $0x14] sm:$0xf]
        %v6347 = vld [vmem:[%s6 + $0x18] sm:$0xf]
        %v6348 = vld [vmem:[%s6 + $0x1c] sm:$0xf]
        %v6349 = vld [vmem:[%s7] sm:$0xff]
        %v6350 = vld [vmem:[%s7 + $0x8] sm:$0xff]
        %v6351 = vld [vmem:[%s7 + $0x10] sm:$0xff]
        %v6352 = vld [vmem:[%s7 + $0x18] sm:$0xff]
        %v6353 = vld [vmem:[%s7 + $0x20] sm:$0xff]
        %v6354 = vld [vmem:[%s7 + $0x28] sm:$0xff]
        %v6355 = vld [vmem:[%s7 + $0x30] sm:$0xff]
        %v6356 = vld [vmem:[%s7 + $0x38] sm:$0xff]
        %6358 = vset.pattern.permute.xlu0 0
        %6359 = vperm.xlu0 %6358, %v6349
        %v6360 = vpop.permute.xlu0 %6359
        %6363 = vset.pattern.permute.xlu0 0
        %6364 = vperm.xlu0 %6363, %v6350
        %v6365 = vpop.permute.xlu0 %6364
        %6368 = vset.pattern.permute.xlu0 0
        %6369 = vperm.xlu0 %6368, %v6351
        %v6370 = vpop.permute.xlu0 %6369
        %6373 = vset.pattern.permute.xlu0 0
        %6374 = vperm.xlu0 %6373, %v6352
        %v6375 = vpop.permute.xlu0 %6374
        %6378 = vset.pattern.permute.xlu0 0
        %6379 = vperm.xlu0 %6378, %v6353
        %v6380 = vpop.permute.xlu0 %6379
        %6383 = vset.pattern.permute.xlu0 0
        %6384 = vperm.xlu0 %6383, %v6354
        %v6385 = vpop.permute.xlu0 %6384
        %6388 = vset.pattern.permute.xlu0 0
        %6389 = vperm.xlu0 %6388, %v6355
        %v6390 = vpop.permute.xlu0 %6389
        %6393 = vset.pattern.permute.xlu0 0
        %6394 = vperm.xlu0 %6393, %v6356
        %v6395 = vpop.permute.xlu0 %6394
        %v6405 = vunpack.c.l.b16 %v6341
        %v6406 = vunpack.c.l.b16 %v6342
        %v6407 = vunpack.c.l.b16 %v6343
        %v6408 = vunpack.c.l.b16 %v6344
        %v6409 = vunpack.c.l.b16 %v6345
        %v6410 = vunpack.c.l.b16 %v6346
        %v6411 = vunpack.c.l.b16 %v6347
        %v6412 = vunpack.c.l.b16 %v6348
        %v6413 = vpack.c.b16 %v6406, %v6405
        %v6414 = vpack.c.b16 %v6408, %v6407
        %v6415 = vpack.c.b16 %v6410, %v6409
        %v6416 = vpack.c.b16 %v6412, %v6411
        %v6418 = vsel %vm575, %v6413, 0
        %v6421 = vsel %vm575, %v6414, 0
        %v6424 = vsel %vm575, %v6415, 0
        %v6427 = vsel %vm575, %v6416, 0
        %6429 = vmatprep.subr.bf16.mxu0 0
        %6430 = vmatpush1.bf16.msra.mxu0 %v6327
        %6431 = vmatprep.subr.bf16.mxu0 0
        %6432 = vmatpush1.bf16.msra.mxu0 %v6331
        %6433 = vmatprep.subr.bf16.mxu0 0
        %6434 = vmatpush1.bf16.msra.mxu0 %v6335
        %6435 = vmatprep.subr.bf16.mxu0 0
        %6436 = vmatpush1.bf16.msra.mxu0 %v6339
        %6437 = vmatprep.subr.bf16.mxu0 0
        %6438 = vmatpush1.bf16.msra.mxu0 0
        %6439 = vmatprep.subr.bf16.mxu0 0
        %6440 = vmatpush1.bf16.msra.mxu0 0
        %6441 = vmatprep.subr.bf16.mxu0 0
        %6442 = vmatpush1.bf16.msra.mxu0 0
        %6443 = vmatprep.subr.bf16.mxu0 0
        %6444 = vmatpush1.bf16.msra.mxu0 0
        %6445 = vmatprep.subr.bf16.mxu0 0
        %6446 = vmatpush1.bf16.msra.mxu0 0
        %6447 = vmatprep.subr.bf16.mxu0 0
        %6448 = vmatpush1.bf16.msra.mxu0 0
        %6449 = vmatprep.subr.bf16.mxu0 0
        %6450 = vmatpush1.bf16.msra.mxu0 0
        %6451 = vmatprep.subr.bf16.mxu0 0
        %6452 = vmatpush1.bf16.msra.mxu0 0
        %6453 = vmatprep.subr.bf16.mxu0 0
        %6454 = vmatpush1.bf16.msra.mxu0 0
        %6455 = vmatprep.subr.bf16.mxu0 0
        %6456 = vmatpush1.bf16.msra.mxu0 0
        %6457 = vmatprep.subr.bf16.mxu0 0
        %6458 = vmatpush1.bf16.msra.mxu0 0
        %6459 = vmatprep.subr.bf16.mxu0 0
        %6460 = vmatpush1.bf16.msra.mxu0 0
        %6461 = vmatprep.mubr.bf16.mxu0 0
        %6462 = vmatmul.mubr.bf16.gmra.mrb[0].mxu0 %v6418
        %v6463 = vpop.f32.mrb[0].mxu0
        %v6464 = vadd.f32 %v6360, %v6463
        %v6465 = vpop.f32.mrb[0].mxu0
        %v6466 = vpop.f32.mrb[0].mxu0
        %v6467 = vadd.f32 %v6365, %v6466
        %v6468 = vpop.f32.mrb[0].mxu0
        %6469 = vmatprep.mubr.bf16.mxu0 0
        %6470 = vmatmul.mubr.bf16.gmra.mrb[0].mxu0 %v6421
        %v6471 = vpop.f32.mrb[0].mxu0
        %v6472 = vadd.f32 %v6370, %v6471
        %v6473 = vpop.f32.mrb[0].mxu0
        %v6474 = vpop.f32.mrb[0].mxu0
        %v6475 = vadd.f32 %v6375, %v6474
        %v6476 = vpop.f32.mrb[0].mxu0
        %6477 = vmatprep.mubr.bf16.mxu0 0
        %6478 = vmatmul.mubr.bf16.gmra.mrb[0].mxu0 %v6424
        %v6479 = vpop.f32.mrb[0].mxu0
        %v6480 = vadd.f32 %v6380, %v6479
        %v6481 = vpop.f32.mrb[0].mxu0
        %v6482 = vpop.f32.mrb[0].mxu0
        %v6483 = vadd.f32 %v6385, %v6482
        %v6484 = vpop.f32.mrb[0].mxu0
        %6485 = vmatprep.mubr.bf16.mxu0 0
        %6486 = vmatmul.mubr.bf16.gmra.mrb[0].mxu0 %v6427
        %v6487 = vpop.f32.mrb[0].mxu0
        %v6488 = vadd.f32 %v6390, %v6487
        %v6489 = vpop.f32.mrb[0].mxu0
        %v6490 = vpop.f32.mrb[0].mxu0
        %v6491 = vadd.f32 %v6395, %v6490
        %v6492 = vpop.f32.mrb[0].mxu0
        %6493 = vdwg.mxu0
        %v6494 = vpack.c.bf16 %v6467, %v6464
        %v6495 = vpack.c.bf16 %v6475, %v6472
        %v6496 = vpack.c.bf16 %v6483, %v6480
        %v6497 = vpack.c.bf16 %v6491, %v6488
        %v6502 = vunpack.c.l.b16 %v6494
        %v6503 = vunpack.c.h.b16 %v6494
        %v6504 = vunpack.c.l.b16 %v6495
        %v6505 = vunpack.c.h.b16 %v6495
        %v6506 = vunpack.c.l.b16 %v6496
        %v6507 = vunpack.c.h.b16 %v6496
        %v6508 = vunpack.c.l.b16 %v6497
        %v6509 = vunpack.c.h.b16 %v6497
        %v6510 = vpack.c.b16 %v6502, %v6502
        %v6511 = vpack.c.b16 %v6503, %v6503
        %v6512 = vpack.c.b16 %v6504, %v6504
        %v6513 = vpack.c.b16 %v6505, %v6505
        %v6514 = vpack.c.b16 %v6506, %v6506
        %v6515 = vpack.c.b16 %v6507, %v6507
        %v6516 = vpack.c.b16 %v6508, %v6508
        %v6517 = vpack.c.b16 %v6509, %v6509
        %6526 = vst [vmem:[%s457] sm:$0xf] %v6510
        %6527 = vst [vmem:[%s457 + $0x4] sm:$0xf] %v6511
        %6528 = vst [vmem:[%s457 + $0x8] sm:$0xf] %v6512
        %6529 = vst [vmem:[%s457 + $0xc] sm:$0xf] %v6513
        %6530 = vst [vmem:[%s457 + $0x10] sm:$0xf] %v6514
        %6531 = vst [vmem:[%s457 + $0x14] sm:$0xf] %v6515
        %6532 = vst [vmem:[%s457 + $0x18] sm:$0xf] %v6516
        %6533 = vst [vmem:[%s457 + $0x1c] sm:$0xf] %v6517
        %s6534 = sand.u32 %s205, 1
        %s6535 = sand.u32 %s205, 1
        %s6536 = smul.addr %s6535, 32
        %s6537 = scalar_lea.vmem [#allocation4], %s6536
        // Predicated region
        $region135: #{multi_head_attention_forward.1} parent=125 // pred_check
          %p6538 = pneg %p215
        $region136: #{multi_head_attention_forward.1} parent=125 // pred_check_branch
          %6540 = sbr.rel (%p6538) target = $region138
        $region137: #{multi_head_attention_forward.1} parent=125 // pred_region
          %s6541 = smul.addr %s19, 4
          %s6542 = scalar_lea.vmem %s8, %s6541
          // Predicated region
          $region139: #{multi_head_attention_forward.1} parent=137 // pred_check
            _
          $region140: #{multi_head_attention_forward.1} parent=137 // pred_check_branch
            %6544 = sbr.rel (0) target = $region142
          $region141: #{multi_head_attention_forward.1} parent=137 // pred_region
            // Predicated region
            $region143: #{multi_head_attention_forward.1} parent=141 // pred_check
              _
            $region144: #{multi_head_attention_forward.1} parent=141 // pred_check_branch
              %6546 = sbr.rel target = $region146
            $region145: #{multi_head_attention_forward.1} parent=141 // pred_region
              // Predicated region
              $region158: #{multi_head_attention_forward.1} parent=145 // pred_check
                _
              $region159: #{multi_head_attention_forward.1} parent=145 // pred_check_branch
                %6575 = sbr.rel (0) target = $region161
              $region160: #{multi_head_attention_forward.1} parent=145 // pred_region
                loop: start=0, step=1, limit=1
                $region162: #{multi_head_attention_forward.1} parent=160 // loop_pre_header
                  _
                $region163: #{multi_head_attention_forward.1} parent=160 // loop_header
                  %s6577 = sphi 0, %s6581
                  %p6578 = scmp.ge.s32.totalorder %s6577, 1
                  %s6582 = sphi %s6537, %s6537
                  %s6583 = sphi %s6542, %s6542
                $region164: #{multi_head_attention_forward.1} parent=160 // loop_header_branch
                  %6580 = sbr.rel (%p6578) target = $region168
                $region165: #{multi_head_attention_forward.1} parent=160 // loop_body
                  _
                $region166: #{multi_head_attention_forward.1} parent=160 // loop_footer
                  %s6581 = sadd.s32 1, %s6577
                $region167: #{multi_head_attention_forward.1} parent=160 // loop_footer_branch
                  %6576 = sbr.rel target = $region163
                $region168: #{multi_head_attention_forward.1} parent=160 // loop_exit
                  _
                loop: start=0, step=1, limit=1
                $region169: #{multi_head_attention_forward.1} parent=160 // loop_pre_header
                  _
                $region170: #{multi_head_attention_forward.1} parent=160 // loop_header
                  %s6586 = sphi 0, %s6590
                  %p6587 = scmp.ge.s32.totalorder %s6586, 1
                  %s6591 = sphi %s6537, %s6537
                  %s6592 = sphi %s6542, %s6542
                $region171: #{multi_head_attention_forward.1} parent=160 // loop_header_branch
                  %6589 = sbr.rel (%p6587) target = $region175
                $region172: #{multi_head_attention_forward.1} parent=160 // loop_body
                  %v6593 = vld [vmem:[%s6591] sm:$0xf]
                  %6594 = vst [vmem:[%s6592] sm:$0xf] %v6593
                  %v6595 = vld [vmem:[%s6591 + $0x4] sm:$0xf]
                  %6596 = vst [vmem:[%s6592 + $0x8] sm:$0xf] %v6595
                  %v6597 = vld [vmem:[%s6591 + $0x8] sm:$0xf]
                  %6598 = vst [vmem:[%s6592 + $0x10] sm:$0xf] %v6597
                  %v6599 = vld [vmem:[%s6591 + $0xc] sm:$0xf]
                  %6600 = vst [vmem:[%s6592 + $0x18] sm:$0xf] %v6599
                  %v6601 = vld [vmem:[%s6591 + $0x10] sm:$0xf]
                  %6602 = vst [vmem:[%s6592 + $0x20] sm:$0xf] %v6601
                  %v6603 = vld [vmem:[%s6591 + $0x14] sm:$0xf]
                  %6604 = vst [vmem:[%s6592 + $0x28] sm:$0xf] %v6603
                  %v6605 = vld [vmem:[%s6591 + $0x18] sm:$0xf]
                  %6606 = vst [vmem:[%s6592 + $0x30] sm:$0xf] %v6605
                  %v6607 = vld [vmem:[%s6591 + $0x1c] sm:$0xf]
                  %6608 = vst [vmem:[%s6592 + $0x38] sm:$0xf] %v6607
                $region173: #{multi_head_attention_forward.1} parent=160 // loop_footer
                  %s6590 = sadd.s32 1, %s6586
                $region174: #{multi_head_attention_forward.1} parent=160 // loop_footer_branch
                  %6585 = sbr.rel target = $region170
                $region175: #{multi_head_attention_forward.1} parent=160 // loop_exit
                  _
              $region161: #{multi_head_attention_forward.1} parent=145 // pred_fallthru
                _
            $region146: #{multi_head_attention_forward.1} parent=141 // pred_fallthru
              _
            // Predicated region
            $region147: #{multi_head_attention_forward.1} parent=141 // pred_check
              _
            $region148: #{multi_head_attention_forward.1} parent=141 // pred_check_branch
              %6548 = sbr.rel (0) target = $region150
            $region149: #{multi_head_attention_forward.1} parent=141 // pred_region
              loop: start=0, step=1, limit=1
              $region151: #{multi_head_attention_forward.1} parent=149 // loop_pre_header
                _
              $region152: #{multi_head_attention_forward.1} parent=149 // loop_header
                %s6551 = sphi 0, %s6555
                %p6552 = scmp.ge.s32.totalorder %s6551, 1
                %s6556 = sphi %s6537, %s6537
                %s6557 = sphi %s6542, %s6542
              $region153: #{multi_head_attention_forward.1} parent=149 // loop_header_branch
                %6554 = sbr.rel (%p6552) target = $region157
              $region154: #{multi_head_attention_forward.1} parent=149 // loop_body
                %v6558 = vld [vmem:[%s6556] sm:$0xf]
                %6559 = vst [vmem:[%s6557] sm:$0xf] %v6558
                %v6560 = vld [vmem:[%s6556 + $0x4] sm:$0xf]
                %6561 = vst [vmem:[%s6557 + $0x8] sm:$0xf] %v6560
                %v6562 = vld [vmem:[%s6556 + $0x8] sm:$0xf]
                %6563 = vst [vmem:[%s6557 + $0x10] sm:$0xf] %v6562
                %v6564 = vld [vmem:[%s6556 + $0xc] sm:$0xf]
                %6565 = vst [vmem:[%s6557 + $0x18] sm:$0xf] %v6564
                %v6566 = vld [vmem:[%s6556 + $0x10] sm:$0xf]
                %6567 = vst [vmem:[%s6557 + $0x20] sm:$0xf] %v6566
                %v6568 = vld [vmem:[%s6556 + $0x14] sm:$0xf]
                %6569 = vst [vmem:[%s6557 + $0x28] sm:$0xf] %v6568
                %v6570 = vld [vmem:[%s6556 + $0x18] sm:$0xf]
                %6571 = vst [vmem:[%s6557 + $0x30] sm:$0xf] %v6570
                %v6572 = vld [vmem:[%s6556 + $0x1c] sm:$0xf]
                %6573 = vst [vmem:[%s6557 + $0x38] sm:$0xf] %v6572
              $region155: #{multi_head_attention_forward.1} parent=149 // loop_footer
                %s6555 = sadd.s32 1, %s6551
              $region156: #{multi_head_attention_forward.1} parent=149 // loop_footer_branch
                %6550 = sbr.rel target = $region152
              $region157: #{multi_head_attention_forward.1} parent=149 // loop_exit
                _
            $region150: #{multi_head_attention_forward.1} parent=141 // pred_fallthru
              _
          $region142: #{multi_head_attention_forward.1} parent=137 // pred_fallthru
            _
          %6609 = vnop
        $region138: #{multi_head_attention_forward.1} parent=125 // pred_fallthru
          _
      $region126: #{multi_head_attention_forward.1} parent=5 // pred_fallthru
        _
      %p6610 = scmp.le.s32.totalorder 2, %s14
      // Predicated region
      $region176: #{multi_head_attention_forward.1} parent=5 // pred_check
        %p6611 = pneg %p6610
      $region177: #{multi_head_attention_forward.1} parent=5 // pred_check_branch
        %6613 = sbr.rel (%p6611) target = $region179
      $region178: #{multi_head_attention_forward.1} parent=5 // pred_region
        %s6614 = ssub.s32 %s14, 2
        // Predicated region
        $region180: #{multi_head_attention_forward.1} parent=178 // pred_check
          %p6615 = pneg %p221
        $region181: #{multi_head_attention_forward.1} parent=178 // pred_check_branch
          %6617 = sbr.rel (%p6615) target = $region183
        $region182: #{multi_head_attention_forward.1} parent=178 // pred_region
          %s6618 = sand.u32 %s206, 1
          %s6619 = sand.u32 %s206, 1
          %s6620 = smul.addr %s6619, 32
          %s6621 = scalar_lea.vmem [#allocation4], %s6620
        $region183: #{multi_head_attention_forward.1} parent=178 // pred_fallthru
          _
      $region179: #{multi_head_attention_forward.1} parent=5 // pred_fallthru
        _
    $region6: #{multi_head_attention_forward.1} parent=1 // loop_footer
      %s18 = sadd.s32 1, %s14
    $region7: #{multi_head_attention_forward.1} parent=1 // loop_footer_branch
      %13 = sbr.rel target = $region3
    $region8: #{multi_head_attention_forward.1} parent=1 // loop_exit
      _

</llo_original>
